<compile_context>
chip_gen: v7x
topology: tpu7x:2x2x1
jax: 0.10.0
libtpu: 0.0.40
codegen_flags: <defaults>
</compile_context>

<pallas_src>
import functools
import math

import jax
import jax.numpy as jnp
from jax.experimental import pallas as pl
from jax.experimental.pallas import tpu as pltpu

# ----------------------- model hyper-parameters (small, synthetic) -----------------------
BATCH = 2
SEQ = 8
HIDDEN = 32
HEADS = 4
DHEAD = HIDDEN // HEADS
INTER = 64
LAYERS = 2
VOCAB = 128
TYPE_VOCAB = 2
MAX_POS = 16
NUM_CLASSES = (3, 7, 15)  # OCNLI, OCEMOTION, TNEWS
C_PAD = 16                # all task heads padded to a common lane width
LN_EPS = 1e-12
NEG_INF = -1e9


def _full_spec(shape):
    nd = len(shape)
    return pl.BlockSpec(shape, lambda *_: (0,) * nd)


def _smem_spec():
    return pl.BlockSpec(memory_space=pltpu.MemorySpace.SMEM)


# --------------------------------- in-kernel helpers --------------------------------------
def _ln(x, g, b, eps):
    mu = jnp.mean(x, axis=-1, keepdims=True)
    xc = x - mu
    var = jnp.mean(xc * xc, axis=-1, keepdims=True)
    return xc * jax.lax.rsqrt(var + eps) * g + b


def _gelu(y):
    # TODO(synk): HF BERT uses the erf-based GELU; tanh approximation used here.
    c = 0.7978845608028654  # sqrt(2/pi)
    return 0.5 * y * (1.0 + jnp.tanh(c * (y + 0.044715 * y * y * y)))


# ------------------------- fused encoder stack (one pallas_call) --------------------------
def _encoder_stack_kernel(emb_ref, amask_ref, eg_ref, eb_ref,
                          qkv_w_ref, qkv_b_ref,
                          ao_w_ref, ao_b_ref,
                          ln1_g_ref, ln1_b_ref,
                          ff1_w_ref, ff1_b_ref,
                          ff2_w_ref, ff2_b_ref,
                          ln2_g_ref, ln2_b_ref,
                          o_ref, h_scr,
                          *, batch, seq, heads, dhead, eps):
    l = pl.program_id(0)
    hidden = heads * dhead

    # ---- grid step 0: embedding LayerNorm directly into the resident VMEM carry ---------
    @pl.when(l == 0)
    def _():
        h_scr[...] = _ln(emb_ref[...], eg_ref[...], eb_ref[...], eps)

    x = h_scr[...]                                   # (B*S, H) f32, VMEM-resident carry
    x_bf = x.astype(jnp.bfloat16)

    # ---- fused QKV projection: one MXU pass, lane-dense N=3H output ---------------------
    qkv = jnp.dot(x_bf, qkv_w_ref[...], preferred_element_type=jnp.float32)
    qkv = qkv + qkv_b_ref[...]                       # (B*S, 3H) f32
    qkv3 = qkv.reshape(batch, seq, 3 * hidden)       # single row-split reshape

    amask = amask_ref[...]                           # (B, 1, S) f32 additive mask (hoisted)
    scale = 1.0 / math.sqrt(dhead)

    # ---- per-head scaled-dot-product attention: lane slices only, no per-head reshapes --
    ctx_heads = []
    for hd in range(heads):
        q = qkv3[:, :, hd * dhead:(hd + 1) * dhead].astype(jnp.bfloat16)
        k = qkv3[:, :, hidden + hd * dhead:hidden + (hd + 1) * dhead].astype(jnp.bfloat16)
        v = qkv3[:, :, 2 * hidden + hd * dhead:2 * hidden + (hd + 1) * dhead].astype(
            jnp.bfloat16)
        s = jnp.einsum("bqd,bkd->bqk", q, k,
                       preferred_element_type=jnp.float32) * scale
        s = s + amask                                 # broadcast over query dim
        s = s - jnp.max(s, axis=-1, keepdims=True)
        p = jnp.exp(s)
        p = p * pl.reciprocal(jnp.sum(p, axis=-1, keepdims=True), approx=True)
        ctx_heads.append(jnp.einsum("bqk,bkd->bqd", p.astype(jnp.bfloat16), v,
                                    preferred_element_type=jnp.float32))
    ctx = jnp.concatenate(ctx_heads, axis=-1).reshape(batch * seq, hidden)   # (B*S, H)

    # ---- attention output projection + residual + LN1 -----------------------------------
    attn_out = jnp.dot(ctx.astype(jnp.bfloat16), ao_w_ref[...],
                       preferred_element_type=jnp.float32) + ao_b_ref[...]
    h1 = _ln(attn_out + x, ln1_g_ref[...], ln1_b_ref[...], eps)

    # ---- FFN: dense + GELU, dense, residual + LN2 ----------------------------------------
    ff = jnp.dot(h1.astype(jnp.bfloat16), ff1_w_ref[...],
                 preferred_element_type=jnp.float32) + ff1_b_ref[...]
    ff = _gelu(ff)
    ff2 = jnp.dot(ff.astype(jnp.bfloat16), ff2_w_ref[...],
                  preferred_element_type=jnp.float32) + ff2_b_ref[...]
    h_new = _ln(ff2 + h1, ln2_g_ref[...], ln2_b_ref[...], eps)

    h_scr[...] = h_new                                # carry to next layer (stays in VMEM)

    # ---- only the final layer pays any HBM store cost ------------------------------------
    @pl.when(l == pl.num_programs(0) - 1)
    def _():
        o_ref[...] = h_new


def encoder_stack(p, emb, amask):
    M, H = emb.shape
    c2 = lambda l: (0, 0)
    c3 = lambda l: (0, 0, 0)
    per_layer = lambda l: (l, 0, 0)
    return pl.pallas_call(
        functools.partial(_encoder_stack_kernel, batch=BATCH, seq=SEQ,
                          heads=HEADS, dhead=DHEAD, eps=LN_EPS),
        out_shape=jax.ShapeDtypeStruct((M, H), jnp.float32),
        grid_spec=pltpu.PrefetchScalarGridSpec(
            num_scalar_prefetch=0,
            grid=(LAYERS,),
            in_specs=[
                pl.BlockSpec((M, H), c2),                     # embeddings (used at l==0)
                pl.BlockSpec((BATCH, 1, SEQ), c3),            # additive mask (resident)
                pl.BlockSpec((1, H), c2),                     # emb LN gamma
                pl.BlockSpec((1, H), c2),                     # emb LN beta
                pl.BlockSpec((None, H, 3 * H), per_layer),    # qkv_w  (stacked over layers)
                pl.BlockSpec((None, 1, 3 * H), per_layer),    # qkv_b
                pl.BlockSpec((None, H, H), per_layer),        # ao_w
                pl.BlockSpec((None, 1, H), per_layer),        # ao_b
                pl.BlockSpec((None, 1, H), per_layer),        # ln1_g
                pl.BlockSpec((None, 1, H), per_layer),        # ln1_b
                pl.BlockSpec((None, H, INTER), per_layer),    # ff1_w
                pl.BlockSpec((None, 1, INTER), per_layer),    # ff1_b
                pl.BlockSpec((None, INTER, H), per_layer),    # ff2_w
                pl.BlockSpec((None, 1, H), per_layer),        # ff2_b
                pl.BlockSpec((None, 1, H), per_layer),        # ln2_g
                pl.BlockSpec((None, 1, H), per_layer),        # ln2_b
            ],
            out_specs=pl.BlockSpec((M, H), c2),               # constant block -> resident
            scratch_shapes=[pltpu.VMEM((M, H), jnp.float32)], # activation carry
        ),
        compiler_params=pltpu.CompilerParams(dimension_semantics=("arbitrary",)),
    )(emb, amask, p["emb_ln_g"], p["emb_ln_b"],
      p["qkv_w"], p["qkv_b"], p["ao_w"], p["ao_b"],
      p["ln1_g"], p["ln1_b"], p["ff1_w"], p["ff1_b"],
      p["ff2_w"], p["ff2_b"], p["ln2_g"], p["ln2_b"])


# ----------------------- pooler + task head + uncertainty-weighted CE ---------------------
def _head_loss_kernel(cls_ref, pool_w_ref, pool_b_ref, head_w_ref, head_b_ref,
                      labels_ref, logvar_ref, logits_ref, loss_ref, *, num_classes):
    # BERT pooler: dense + tanh on the [CLS] rows (already sliced wrapper-side).
    pooled = jnp.tanh(jnp.dot(cls_ref[...].astype(jnp.bfloat16), pool_w_ref[...],
                              preferred_element_type=jnp.float32) + pool_b_ref[...])

    # Task head (padded to C_PAD lanes; padded weights/bias are zero).
    logits = jnp.dot(pooled.astype(jnp.bfloat16), head_w_ref[...],
                     preferred_element_type=jnp.float32) + head_b_ref[...]   # (B, C_PAD)
    logits_ref[...] = logits

    # Cross-entropy over the real classes only (padded columns masked out).
    batch = logits.shape[0]
    col = jax.lax.broadcasted_iota(jnp.int32, logits.shape, 1)               # (B, C_PAD)
    valid = col < num_classes
    lm = jnp.where(valid, logits, NEG_INF)
    m = jnp.max(lm, axis=-1, keepdims=True)
    z = lm - m
    ez = jnp.where(valid, jnp.exp(z), 0.0)
    lse = jnp.log(jnp.sum(ez, axis=-1, keepdims=True))                       # (B, 1)

    col_row = jax.lax.broadcasted_iota(jnp.int32, (1, logits.shape[1]), 1)   # (1, C_PAD)
    ce_acc = jnp.zeros((1, 1), jnp.float32)
    for i in range(batch):
        # labels live in SMEM; scalar read per row.
        onehot = (col_row == labels_ref[i]).astype(jnp.float32)              # (1, C_PAD)
        z_lab = jnp.sum(onehot * z[i:i + 1, :], axis=-1, keepdims=True)      # (1, 1)
        ce_acc = ce_acc + (lse[i:i + 1, :] - z_lab)
    ce = ce_acc * (1.0 / batch)                                              # mean CE

    lv = jnp.full((1, 1), logvar_ref[0], dtype=jnp.float32)                  # SMEM scalar
    loss_ref[...] = jnp.exp(-lv) * ce + lv


def pooled_head_loss(cls, pool_w, pool_b, head_w_pad, head_b_pad, labels, log_var,
                     num_classes):
    B, H = cls.shape
    logits_pad, loss = pl.pallas_call(
        functools.partial(_head_loss_kernel, num_classes=num_classes),
        out_shape=(jax.ShapeDtypeStruct((B, C_PAD), jnp.float32),
                   jax.ShapeDtypeStruct((1, 1), jnp.float32)),
        in_specs=[
            _full_spec((B, H)),
            _full_spec((H, H)), _full_spec((1, H)),
            _full_spec((H, C_PAD)), _full_spec((1, C_PAD)),
            _smem_spec(),   # labels   (B,)  int32
            _smem_spec(),   # log_var  (1,)  f32
        ],
        out_specs=(_full_spec((B, C_PAD)), _full_spec((1, 1))),
    )(cls, pool_w, pool_b, head_w_pad, head_b_pad,
      labels.astype(jnp.int32), log_var.astype(jnp.float32))
    return logits_pad[:, :num_classes], loss[0, 0]


# -------------------------------- parameter initialization -------------------------------
def init_params(key):
    def nrm(k, shape, scale=0.02):
        return scale * jax.random.normal(k, shape, dtype=jnp.float32)

    keys = iter(jax.random.split(key, 32))
    p = {
        "word_emb": nrm(next(keys), (VOCAB, HIDDEN)),
        "pos_emb": nrm(next(keys), (MAX_POS, HIDDEN)),
        "type_emb": nrm(next(keys), (TYPE_VOCAB, HIDDEN)),
        "emb_ln_g": jnp.ones((1, HIDDEN), jnp.float32),
        "emb_ln_b": jnp.zeros((1, HIDDEN), jnp.float32),
    }
    # Per-layer weights stacked along a leading layer axis (streamed by BlockSpec).
    qw = nrm(next(keys), (LAYERS, HIDDEN, HIDDEN))
    kw = nrm(next(keys), (LAYERS, HIDDEN, HIDDEN))
    vw = nrm(next(keys), (LAYERS, HIDDEN, HIDDEN))
    p["qkv_w"] = jnp.concatenate([qw, kw, vw], axis=2).astype(jnp.bfloat16)  # (L, H, 3H)
    p["qkv_b"] = jnp.zeros((LAYERS, 1, 3 * HIDDEN), jnp.float32)
    p["ao_w"] = nrm(next(keys), (LAYERS, HIDDEN, HIDDEN)).astype(jnp.bfloat16)
    p["ao_b"] = jnp.zeros((LAYERS, 1, HIDDEN), jnp.float32)
    p["ln1_g"] = jnp.ones((LAYERS, 1, HIDDEN), jnp.float32)
    p["ln1_b"] = jnp.zeros((LAYERS, 1, HIDDEN), jnp.float32)
    p["ff1_w"] = nrm(next(keys), (LAYERS, HIDDEN, INTER)).astype(jnp.bfloat16)
    p["ff1_b"] = jnp.zeros((LAYERS, 1, INTER), jnp.float32)
    p["ff2_w"] = nrm(next(keys), (LAYERS, INTER, HIDDEN)).astype(jnp.bfloat16)
    p["ff2_b"] = jnp.zeros((LAYERS, 1, HIDDEN), jnp.float32)
    p["ln2_g"] = jnp.ones((LAYERS, 1, HIDDEN), jnp.float32)
    p["ln2_b"] = jnp.zeros((LAYERS, 1, HIDDEN), jnp.float32)

    p["pool_w"] = nrm(next(keys), (HIDDEN, HIDDEN)).astype(jnp.bfloat16)
    p["pool_b"] = jnp.zeros((1, HIDDEN), jnp.float32)
    head_w, head_b = [], []
    for c in NUM_CLASSES:
        w = nrm(next(keys), (HIDDEN, c))
        w_pad = jnp.zeros((HIDDEN, C_PAD), jnp.float32).at[:, :c].set(w)
        head_w.append(w_pad.astype(jnp.bfloat16))
        head_b.append(jnp.zeros((1, C_PAD), jnp.float32))
    p["head_w"] = head_w
    p["head_b"] = head_b
    # log_var_1/2/3 initialized to zeros, like nn.Parameter(torch.zeros((1,)))
    p["log_var"] = [jnp.zeros((1,), jnp.float32) for _ in range(3)]
    return p


# ------------------------------------- forward pass --------------------------------------
def bert_encode(p, input_ids, token_type_ids, attention_mask):
    B, S = input_ids.shape
    # embedding gathers: plain-JAX glue
    we = jnp.take(p["word_emb"], input_ids, axis=0)                 # (B, S, H)
    pe = p["pos_emb"][:S][None, :, :]                               # (1, S, H)
    te = jnp.take(p["type_emb"], token_type_ids, axis=0)            # (B, S, H)
    emb = (we + pe + te).reshape(B * S, HIDDEN)
    # additive attention mask hoisted out of the kernel (computed once, f32)
    amask = (1.0 - attention_mask.astype(jnp.float32))[:, None, :] * NEG_INF  # (B, 1, S)
    return encoder_stack(p, emb, amask)                             # ONE fused kernel


def model_forward(p, x, labels, total_batch):
    context, mask, token_type_ids = x[0], x[2], x[3]
    h = bert_encode(p, context, token_type_ids, mask)               # (B*S, H)
    cls = h[0::SEQ, :]                                              # (B, H) [CLS] rows
    task = total_batch % 3  # static Python branch, matching the PyTorch if/elif/else
    out, loss = pooled_head_loss(cls, p["pool_w"], p["pool_b"],
                                 p["head_w"][task], p["head_b"][task],
                                 labels, p["log_var"][task], NUM_CLASSES[task])
    return out, loss


# ----------------------------------------- main -------------------------------------------
if __name__ == "__main__":
    key = jax.random.PRNGKey(0)
    kp, kids, ktype, klab = jax.random.split(key, 4)
    params = init_params(kp)

    input_ids = jax.random.randint(kids, (BATCH, SEQ), 0, VOCAB, dtype=jnp.int32)
    token_type_ids = jax.random.randint(ktype, (BATCH, SEQ), 0, TYPE_VOCAB, dtype=jnp.int32)
    attn_mask = jnp.ones((BATCH, SEQ), jnp.int32)

    total_batch = 4  # 4 % 3 == 1 -> OCEMOTION head (7 classes)
    labels = jax.random.randint(klab, (BATCH,), 0, NUM_CLASSES[total_batch % 3],
                                dtype=jnp.int32)

    x = (input_ids, None, attn_mask, token_type_ids)  # mirrors x[0], x[2], x[3] usage
    fwd = jax.jit(model_forward, static_argnums=(3,))
    out, loss = fwd(params, x, labels, total_batch)
    jax.block_until_ready((out, loss))
    print("KERNEL_OK")
</pallas_src>

<mosaic_0001>
module attributes {stable_mosaic.version = 11 : i64} {
  func.func @_head_loss_kernel(%arg0: memref<2x32xf32, #tpu.memory_space<vmem>>, %arg1: memref<32x32xbf16, #tpu.memory_space<vmem>>, %arg2: memref<1x32xf32, #tpu.memory_space<vmem>>, %arg3: memref<32x16xbf16, #tpu.memory_space<vmem>>, %arg4: memref<1x16xf32, #tpu.memory_space<vmem>>, %arg5: memref<2xi32, #tpu.memory_space<smem>>, %arg6: memref<1xf32, #tpu.memory_space<smem>>, %arg7: memref<2x16xf32, #tpu.memory_space<vmem>>, %arg8: memref<1x1xf32, #tpu.memory_space<vmem>>) attributes {dimension_semantics = [], scalar_prefetch = 0 : i64, scratch_operands = 0 : i64, tpu.core_type = #tpu.core_type<tc>} {
    %c0 = arith.constant 0 : index
    %c0_0 = arith.constant 0 : index
    %0 = vector.load %arg0[%c0, %c0_0] : memref<2x32xf32, #tpu.memory_space<vmem>>, vector<2x32xf32>
    %1 = arith.truncf %0 : vector<2x32xf32> to vector<2x32xbf16>
    %c0_1 = arith.constant 0 : index
    %c0_2 = arith.constant 0 : index
    %2 = vector.load %arg1[%c0_1, %c0_2] : memref<32x32xbf16, #tpu.memory_space<vmem>>, vector<32x32xbf16>
    %cst = arith.constant dense<0.000000e+00> : vector<2x32xf32>
    %3 = tpu.matmul %1, %2, %cst {dimension_numbers = #tpu.dot_dimension_numbers<[1], [0], [0], [1], [0, 0, 1, 1], [], []>} : vector<2x32xbf16>, vector<32x32xbf16>, vector<2x32xf32> -> vector<2x32xf32>
    %c0_3 = arith.constant 0 : index
    %c0_4 = arith.constant 0 : index
    %4 = vector.load %arg2[%c0_3, %c0_4] : memref<1x32xf32, #tpu.memory_space<vmem>>, vector<1x32xf32>
    %5 = vector.broadcast %4 : vector<1x32xf32> to vector<2x32xf32>
    %6 = arith.addf %3, %5 : vector<2x32xf32>
    %7 = math.tanh %6 : vector<2x32xf32>
    %8 = arith.truncf %7 : vector<2x32xf32> to vector<2x32xbf16>
    %c0_5 = arith.constant 0 : index
    %c0_6 = arith.constant 0 : index
    %9 = vector.load %arg3[%c0_5, %c0_6] : memref<32x16xbf16, #tpu.memory_space<vmem>>, vector<32x16xbf16>
    %cst_7 = arith.constant dense<0.000000e+00> : vector<2x16xf32>
    %10 = tpu.matmul %8, %9, %cst_7 {dimension_numbers = #tpu.dot_dimension_numbers<[1], [0], [0], [1], [0, 0, 1, 1], [], []>} : vector<2x32xbf16>, vector<32x16xbf16>, vector<2x16xf32> -> vector<2x16xf32>
    %c0_8 = arith.constant 0 : index
    %c0_9 = arith.constant 0 : index
    %11 = vector.load %arg4[%c0_8, %c0_9] : memref<1x16xf32, #tpu.memory_space<vmem>>, vector<1x16xf32>
    %12 = vector.broadcast %11 : vector<1x16xf32> to vector<2x16xf32>
    %13 = arith.addf %10, %12 : vector<2x16xf32>
    %c0_10 = arith.constant 0 : index
    %c0_11 = arith.constant 0 : index
    %14 = vector.load %arg7[%c0_10, %c0_11] : memref<2x16xf32, #tpu.memory_space<vmem>>, vector<2x16xf32>
    tpu.vector_store %arg7[%c0_10, %c0_11], %13 {strides = array<i32>} : memref<2x16xf32, #tpu.memory_space<vmem>>, vector<2x16xf32>,
    %15 = tpu.iota {dimensions = array<i32: 1>} : vector<2x16xi32>
    %c7_i32 = arith.constant 7 : i32
    %16 = vector.broadcast %c7_i32 : i32 to vector<2x16xi32>
    %17 = arith.cmpi slt, %15, %16 : vector<2x16xi32>
    %cst_12 = arith.constant -1.000000e+09 : f32
    %18 = vector.broadcast %cst_12 : f32 to vector<2x16xf32>
    %19 = arith.select %17, %13, %18 : vector<2x16xi1>, vector<2x16xf32>
    %cst_13 = arith.constant dense<0xFF800000> : vector<2xf32>
    %20 = vector.multi_reduction <maximumf>, %19, %cst_13 [1] : vector<2x16xf32> to vector<2xf32>
    %21 = vector.shape_cast %20 : vector<2xf32> to vector<2x1xf32>
    %22 = vector.broadcast %21 : vector<2x1xf32> to vector<2x16xf32>
    %23 = arith.subf %19, %22 : vector<2x16xf32>
    %24 = math.exp %23 : vector<2x16xf32>
    %cst_14 = arith.constant 0.000000e+00 : f32
    %25 = vector.broadcast %cst_14 : f32 to vector<2x16xf32>
    %26 = arith.select %17, %24, %25 : vector<2x16xi1>, vector<2x16xf32>
    %cst_15 = arith.constant dense<0.000000e+00> : vector<2xf32>
    %27 = vector.multi_reduction <add>, %26, %cst_15 [1] : vector<2x16xf32> to vector<2xf32>
    %28 = vector.shape_cast %27 : vector<2xf32> to vector<2x1xf32>
    %29 = math.log %28 : vector<2x1xf32>
    %30 = tpu.iota {dimensions = array<i32: 1>} : vector<1x16xi32>
    %cst_16 = arith.constant 0.000000e+00 : f32
    %31 = vector.broadcast %cst_16 : f32 to vector<1x1xf32>
    %c0_17 = arith.constant 0 : index
    %32 = memref.load %arg5[%c0_17] : memref<2xi32, #tpu.memory_space<smem>>
    %33 = vector.broadcast %32 : i32 to vector<1x16xi32>
    %34 = arith.cmpi eq, %30, %33 : vector<1x16xi32>
    %35 = arith.extui %34 : vector<1x16xi1> to vector<1x16xi32>
    %36 = arith.sitofp %35 : vector<1x16xi32> to vector<1x16xf32>
    %37 = vector.extract_strided_slice %23 {offsets = [0, 0], sizes = [1, 16], strides = [1, 1]} : vector<2x16xf32> to vector<1x16xf32>
    %38 = arith.mulf %36, %37 : vector<1x16xf32>
    %cst_18 = arith.constant dense<0.000000e+00> : vector<1xf32>
    %39 = vector.multi_reduction <add>, %38, %cst_18 [1] : vector<1x16xf32> to vector<1xf32>
    %40 = vector.shape_cast %39 : vector<1xf32> to vector<1x1xf32>
    %41 = vector.extract_strided_slice %29 {offsets = [0, 0], sizes = [1, 1], strides = [1, 1]} : vector<2x1xf32> to vector<1x1xf32>
    %42 = arith.subf %41, %40 : vector<1x1xf32>
    %43 = arith.addf %31, %42 : vector<1x1xf32>
    %c1 = arith.constant 1 : index
    %44 = memref.load %arg5[%c1] : memref<2xi32, #tpu.memory_space<smem>>
    %45 = vector.broadcast %44 : i32 to vector<1x16xi32>
    %46 = arith.cmpi eq, %30, %45 : vector<1x16xi32>
    %47 = arith.extui %46 : vector<1x16xi1> to vector<1x16xi32>
    %48 = arith.sitofp %47 : vector<1x16xi32> to vector<1x16xf32>
    %49 = vector.extract_strided_slice %23 {offsets = [1, 0], sizes = [1, 16], strides = [1, 1]} : vector<2x16xf32> to vector<1x16xf32>
    %50 = arith.mulf %48, %49 : vector<1x16xf32>
    %cst_19 = arith.constant dense<0.000000e+00> : vector<1xf32>
    %51 = vector.multi_reduction <add>, %50, %cst_19 [1] : vector<1x16xf32> to vector<1xf32>
    %52 = vector.shape_cast %51 : vector<1xf32> to vector<1x1xf32>
    %53 = vector.extract_strided_slice %29 {offsets = [1, 0], sizes = [1, 1], strides = [1, 1]} : vector<2x1xf32> to vector<1x1xf32>
    %54 = arith.subf %53, %52 : vector<1x1xf32>
    %55 = arith.addf %43, %54 : vector<1x1xf32>
    %cst_20 = arith.constant 5.000000e-01 : f32
    %56 = vector.broadcast %cst_20 : f32 to vector<1x1xf32>
    %57 = arith.mulf %55, %56 : vector<1x1xf32>
    %c0_21 = arith.constant 0 : index
    %58 = memref.load %arg6[%c0_21] : memref<1xf32, #tpu.memory_space<smem>>
    %59 = vector.broadcast %58 : f32 to vector<1x1xf32>
    %cst_22 = arith.constant 0.000000e+00 : f32
    %60 = vector.broadcast %cst_22 : f32 to vector<1x1xf32>
    %61 = arith.subf %60, %59 : vector<1x1xf32>
    %62 = math.exp %61 : vector<1x1xf32>
    %63 = arith.mulf %62, %57 : vector<1x1xf32>
    %64 = arith.addf %63, %59 : vector<1x1xf32>
    %c0_23 = arith.constant 0 : index
    %c0_24 = arith.constant 0 : index
    %65 = vector.load %arg8[%c0_23, %c0_24] : memref<1x1xf32, #tpu.memory_space<vmem>>, vector<1x1xf32>
    tpu.vector_store %arg8[%c0_23, %c0_24], %64 {strides = array<i32>} : memref<1x1xf32, #tpu.memory_space<vmem>>, vector<1x1xf32>,
    return
  }
}

module attributes {stable_mosaic.version = 11 : i64} {
  func.func @_encoder_stack_kernel(%arg0: i32, %arg1: memref<16x32xf32, #tpu.memory_space<vmem>>, %arg2: memref<2x1x8xf32, #tpu.memory_space<vmem>>, %arg3: memref<1x32xf32, #tpu.memory_space<vmem>>, %arg4: memref<1x32xf32, #tpu.memory_space<vmem>>, %arg5: memref<1x32x96xbf16, #tpu.memory_space<vmem>>, %arg6: memref<1x1x96xf32, #tpu.memory_space<vmem>>, %arg7: memref<1x32x32xbf16, #tpu.memory_space<vmem>>, %arg8: memref<1x1x32xf32, #tpu.memory_space<vmem>>, %arg9: memref<1x1x32xf32, #tpu.memory_space<vmem>>, %arg10: memref<1x1x32xf32, #tpu.memory_space<vmem>>, %arg11: memref<1x32x64xbf16, #tpu.memory_space<vmem>>, %arg12: memref<1x1x64xf32, #tpu.memory_space<vmem>>, %arg13: memref<1x64x32xbf16, #tpu.memory_space<vmem>>, %arg14: memref<1x1x32xf32, #tpu.memory_space<vmem>>, %arg15: memref<1x1x32xf32, #tpu.memory_space<vmem>>, %arg16: memref<1x1x32xf32, #tpu.memory_space<vmem>>, %arg17: memref<16x32xf32, #tpu.memory_space<vmem>>, %arg18: memref<16x32xf32, #tpu.memory_space<vmem>>) attributes {dimension_semantics = [#tpu.dimension_semantics<arbitrary>], iteration_bounds = array<i64: 2>, scalar_prefetch = 0 : i64, scratch_operands = 1 : i64, tpu.core_type = #tpu.core_type<tc>, window_params = [{pipeline_mode = #tpu.pipeline_mode<synchronous>, transform_indices = @transform_0, window_bounds = array<i64: 16, 32>}, {pipeline_mode = #tpu.pipeline_mode<synchronous>, transform_indices = @transform_1, window_bounds = array<i64: 2, 1, 8>}, {pipeline_mode = #tpu.pipeline_mode<synchronous>, transform_indices = @transform_2, window_bounds = array<i64: 1, 32>}, {pipeline_mode = #tpu.pipeline_mode<synchronous>, transform_indices = @transform_3, window_bounds = array<i64: 1, 32>}, {transform_indices = @transform_4, window_bounds = array<i64: 1, 32, 96>}, {transform_indices = @transform_5, window_bounds = array<i64: 1, 1, 96>}, {transform_indices = @transform_6, window_bounds = array<i64: 1, 32, 32>}, {transform_indices = @transform_7, window_bounds = array<i64: 1, 1, 32>}, {transform_indices = @transform_8, window_bounds = array<i64: 1, 1, 32>}, {transform_indices = @transform_9, window_bounds = array<i64: 1, 1, 32>}, {transform_indices = @transform_10, window_bounds = array<i64: 1, 32, 64>}, {transform_indices = @transform_11, window_bounds = array<i64: 1, 1, 64>}, {transform_indices = @transform_12, window_bounds = array<i64: 1, 64, 32>}, {transform_indices = @transform_13, window_bounds = array<i64: 1, 1, 32>}, {transform_indices = @transform_14, window_bounds = array<i64: 1, 1, 32>}, {transform_indices = @transform_15, window_bounds = array<i64: 1, 1, 32>}, {pipeline_mode = #tpu.pipeline_mode<synchronous>, transform_indices = @transform_16, window_bounds = array<i64: 16, 32>}]} {
    %c0_i32 = arith.constant 0 : i32
    %0 = arith.cmpi eq, %arg0, %c0_i32 : i32
    %1 = arith.extui %0 : i1 to i32
    %c0_i32_0 = arith.constant 0 : i32
    %2 = arith.cmpi ne, %1, %c0_i32_0 : i32
    scf.if %2 {
      %c0_81 = arith.constant 0 : index
      %c0_82 = arith.constant 0 : index
      %199 = vector.load %arg1[%c0_81, %c0_82] : memref<16x32xf32, #tpu.memory_space<vmem>>, vector<16x32xf32>
      %c0_83 = arith.constant 0 : index
      %c0_84 = arith.constant 0 : index
      %200 = vector.load %arg3[%c0_83, %c0_84] : memref<1x32xf32, #tpu.memory_space<vmem>>, vector<1x32xf32>
      %c0_85 = arith.constant 0 : index
      %c0_86 = arith.constant 0 : index
      %201 = vector.load %arg4[%c0_85, %c0_86] : memref<1x32xf32, #tpu.memory_space<vmem>>, vector<1x32xf32>
      %cst_87 = arith.constant dense<0.000000e+00> : vector<16xf32>
      %202 = vector.multi_reduction <add>, %199, %cst_87 [1] : vector<16x32xf32> to vector<16xf32>
      %203 = vector.shape_cast %202 : vector<16xf32> to vector<16x1xf32>
      %cst_88 = arith.constant 3.200000e+01 : f32
      %204 = vector.broadcast %cst_88 : f32 to vector<16x1xf32>
      %205 = arith.divf %203, %204 : vector<16x1xf32>
      %206 = vector.broadcast %205 : vector<16x1xf32> to vector<16x32xf32>
      %207 = arith.subf %199, %206 : vector<16x32xf32>
      %208 = arith.mulf %207, %207 : vector<16x32xf32>
      %cst_89 = arith.constant dense<0.000000e+00> : vector<16xf32>
      %209 = vector.multi_reduction <add>, %208, %cst_89 [1] : vector<16x32xf32> to vector<16xf32>
      %210 = vector.shape_cast %209 : vector<16xf32> to vector<16x1xf32>
      %cst_90 = arith.constant 3.200000e+01 : f32
      %211 = vector.broadcast %cst_90 : f32 to vector<16x1xf32>
      %212 = arith.divf %210, %211 : vector<16x1xf32>
      %cst_91 = arith.constant 9.99999996E-13 : f32
      %213 = vector.broadcast %cst_91 : f32 to vector<16x1xf32>
      %214 = arith.addf %212, %213 : vector<16x1xf32>
      %215 = math.rsqrt %214 : vector<16x1xf32>
      %216 = vector.broadcast %215 : vector<16x1xf32> to vector<16x32xf32>
      %217 = arith.mulf %207, %216 : vector<16x32xf32>
      %218 = vector.broadcast %200 : vector<1x32xf32> to vector<16x32xf32>
      %219 = arith.mulf %217, %218 : vector<16x32xf32>
      %220 = vector.broadcast %201 : vector<1x32xf32> to vector<16x32xf32>
      %221 = arith.addf %219, %220 : vector<16x32xf32>
      %c0_92 = arith.constant 0 : index
      %c0_93 = arith.constant 0 : index
      %222 = vector.load %arg18[%c0_92, %c0_93] : memref<16x32xf32, #tpu.memory_space<vmem>>, vector<16x32xf32>
      tpu.vector_store %arg18[%c0_92, %c0_93], %221 {strides = array<i32>} : memref<16x32xf32, #tpu.memory_space<vmem>>, vector<16x32xf32>,
    } else {
    }
    %c0 = arith.constant 0 : index
    %c0_1 = arith.constant 0 : index
    %3 = vector.load %arg18[%c0, %c0_1] : memref<16x32xf32, #tpu.memory_space<vmem>>, vector<16x32xf32>
    %4 = arith.truncf %3 : vector<16x32xf32> to vector<16x32xbf16>
    %c0_2 = arith.constant 0 : index
    %c0_3 = arith.constant 0 : index
    %c0_4 = arith.constant 0 : index
    %5 = vector.load %arg5[%c0_2, %c0_3, %c0_4] : memref<1x32x96xbf16, #tpu.memory_space<vmem>>, vector<1x32x96xbf16>
    %6 = vector.shape_cast %5 : vector<1x32x96xbf16> to vector<32x96xbf16>
    %cst = arith.constant dense<0.000000e+00> : vector<16x96xf32>
    %7 = tpu.matmul %4, %6, %cst {dimension_numbers = #tpu.dot_dimension_numbers<[1], [0], [0], [1], [0, 0, 1, 1], [], []>} : vector<16x32xbf16>, vector<32x96xbf16>, vector<16x96xf32> -> vector<16x96xf32>
    %c0_5 = arith.constant 0 : index
    %c0_6 = arith.constant 0 : index
    %c0_7 = arith.constant 0 : index
    %8 = vector.load %arg6[%c0_5, %c0_6, %c0_7] : memref<1x1x96xf32, #tpu.memory_space<vmem>>, vector<1x1x96xf32>
    %9 = vector.shape_cast %8 : vector<1x1x96xf32> to vector<1x96xf32>
    %10 = vector.broadcast %9 : vector<1x96xf32> to vector<16x96xf32>
    %11 = arith.addf %7, %10 : vector<16x96xf32>
    %12 = vector.shape_cast %11 : vector<16x96xf32> to vector<2x8x96xf32>
    %c0_8 = arith.constant 0 : index
    %c0_9 = arith.constant 0 : index
    %c0_10 = arith.constant 0 : index
    %13 = vector.load %arg2[%c0_8, %c0_9, %c0_10] : memref<2x1x8xf32, #tpu.memory_space<vmem>>, vector<2x1x8xf32>
    %14 = vector.extract_strided_slice %12 {offsets = [0, 0, 0], sizes = [2, 8, 8], strides = [1, 1, 1]} : vector<2x8x96xf32> to vector<2x8x8xf32>
    %15 = arith.truncf %14 : vector<2x8x8xf32> to vector<2x8x8xbf16>
    %16 = vector.extract_strided_slice %12 {offsets = [0, 0, 32], sizes = [2, 8, 8], strides = [1, 1, 1]} : vector<2x8x96xf32> to vector<2x8x8xf32>
    %17 = arith.truncf %16 : vector<2x8x8xf32> to vector<2x8x8xbf16>
    %18 = vector.extract_strided_slice %12 {offsets = [0, 0, 64], sizes = [2, 8, 8], strides = [1, 1, 1]} : vector<2x8x96xf32> to vector<2x8x8xf32>
    %19 = arith.truncf %18 : vector<2x8x8xf32> to vector<2x8x8xbf16>
    "tpu.trace_start"() <{level = 10 : i32, message = "bqd,bkd->bqk"}> : () -> ()
    %cst_11 = arith.constant dense<0.000000e+00> : vector<2x8x8xf32>
    %20 = tpu.matmul %15, %17, %cst_11 {dimension_numbers = #tpu.dot_dimension_numbers<[2], [2], [1], [1], [0, 0, 0, 1, 1, 1], [0], [0]>} : vector<2x8x8xbf16>, vector<2x8x8xbf16>, vector<2x8x8xf32> -> vector<2x8x8xf32>
    "tpu.trace_stop"() : () -> ()
    %cst_12 = arith.constant 0.353553385 : f32
    %21 = vector.broadcast %cst_12 : f32 to vector<2x8x8xf32>
    %22 = arith.mulf %20, %21 : vector<2x8x8xf32>
    %23 = vector.broadcast %13 : vector<2x1x8xf32> to vector<2x8x8xf32>
    %24 = arith.addf %22, %23 : vector<2x8x8xf32>
    %cst_13 = arith.constant dense<0xFF800000> : vector<2x8xf32>
    %25 = vector.multi_reduction <maximumf>, %24, %cst_13 [2] : vector<2x8x8xf32> to vector<2x8xf32>
    %26 = vector.shape_cast %25 : vector<2x8xf32> to vector<2x8x1xf32>
    %27 = vector.broadcast %26 : vector<2x8x1xf32> to vector<2x8x8xf32>
    %28 = arith.subf %24, %27 : vector<2x8x8xf32>
    %29 = math.exp %28 : vector<2x8x8xf32>
    %cst_14 = arith.constant dense<0.000000e+00> : vector<2x8xf32>
    %30 = vector.multi_reduction <add>, %29, %cst_14 [2] : vector<2x8x8xf32> to vector<2x8xf32>
    %31 = vector.shape_cast %30 : vector<2x8xf32> to vector<2x8x1xf32>
    %32 = tpu.reciprocal %31 {approx = true} : vector<2x8x1xf32> -> vector<2x8x1xf32>
    %33 = vector.broadcast %32 : vector<2x8x1xf32> to vector<2x8x8xf32>
    %34 = arith.mulf %29, %33 : vector<2x8x8xf32>
    %35 = arith.truncf %34 : vector<2x8x8xf32> to vector<2x8x8xbf16>
    "tpu.trace_start"() <{level = 10 : i32, message = "bqk,bkd->bqd"}> : () -> ()
    %cst_15 = arith.constant dense<0.000000e+00> : vector<2x8x8xf32>
    %36 = tpu.matmul %35, %19, %cst_15 {dimension_numbers = #tpu.dot_dimension_numbers<[2], [1], [1], [2], [0, 0, 0, 1, 1, 2], [0], [0]>} : vector<2x8x8xbf16>, vector<2x8x8xbf16>, vector<2x8x8xf32> -> vector<2x8x8xf32>
    "tpu.trace_stop"() : () -> ()
    %37 = vector.extract_strided_slice %12 {offsets = [0, 0, 8], sizes = [2, 8, 8], strides = [1, 1, 1]} : vector<2x8x96xf32> to vector<2x8x8xf32>
    %38 = arith.truncf %37 : vector<2x8x8xf32> to vector<2x8x8xbf16>
    %39 = vector.extract_strided_slice %12 {offsets = [0, 0, 40], sizes = [2, 8, 8], strides = [1, 1, 1]} : vector<2x8x96xf32> to vector<2x8x8xf32>
    %40 = arith.truncf %39 : vector<2x8x8xf32> to vector<2x8x8xbf16>
    %41 = vector.extract_strided_slice %12 {offsets = [0, 0, 72], sizes = [2, 8, 8], strides = [1, 1, 1]} : vector<2x8x96xf32> to vector<2x8x8xf32>
    %42 = arith.truncf %41 : vector<2x8x8xf32> to vector<2x8x8xbf16>
    "tpu.trace_start"() <{level = 10 : i32, message = "bqd,bkd->bqk"}> : () -> ()
    %cst_16 = arith.constant dense<0.000000e+00> : vector<2x8x8xf32>
    %43 = tpu.matmul %38, %40, %cst_16 {dimension_numbers = #tpu.dot_dimension_numbers<[2], [2], [1], [1], [0, 0, 0, 1, 1, 1], [0], [0]>} : vector<2x8x8xbf16>, vector<2x8x8xbf16>, vector<2x8x8xf32> -> vector<2x8x8xf32>
    "tpu.trace_stop"() : () -> ()
    %cst_17 = arith.constant 0.353553385 : f32
    %44 = vector.broadcast %cst_17 : f32 to vector<2x8x8xf32>
    %45 = arith.mulf %43, %44 : vector<2x8x8xf32>
    %46 = vector.broadcast %13 : vector<2x1x8xf32> to vector<2x8x8xf32>
    %47 = arith.addf %45, %46 : vector<2x8x8xf32>
    %cst_18 = arith.constant dense<0xFF800000> : vector<2x8xf32>
    %48 = vector.multi_reduction <maximumf>, %47, %cst_18 [2] : vector<2x8x8xf32> to vector<2x8xf32>
    %49 = vector.shape_cast %48 : vector<2x8xf32> to vector<2x8x1xf32>
    %50 = vector.broadcast %49 : vector<2x8x1xf32> to vector<2x8x8xf32>
    %51 = arith.subf %47, %50 : vector<2x8x8xf32>
    %52 = math.exp %51 : vector<2x8x8xf32>
    %cst_19 = arith.constant dense<0.000000e+00> : vector<2x8xf32>
    %53 = vector.multi_reduction <add>, %52, %cst_19 [2] : vector<2x8x8xf32> to vector<2x8xf32>
    %54 = vector.shape_cast %53 : vector<2x8xf32> to vector<2x8x1xf32>
    %55 = tpu.reciprocal %54 {approx = true} : vector<2x8x1xf32> -> vector<2x8x1xf32>
    %56 = vector.broadcast %55 : vector<2x8x1xf32> to vector<2x8x8xf32>
    %57 = arith.mulf %52, %56 : vector<2x8x8xf32>
    %58 = arith.truncf %57 : vector<2x8x8xf32> to vector<2x8x8xbf16>
    "tpu.trace_start"() <{level = 10 : i32, message = "bqk,bkd->bqd"}> : () -> ()
    %cst_20 = arith.constant dense<0.000000e+00> : vector<2x8x8xf32>
    %59 = tpu.matmul %58, %42, %cst_20 {dimension_numbers = #tpu.dot_dimension_numbers<[2], [1], [1], [2], [0, 0, 0, 1, 1, 2], [0], [0]>} : vector<2x8x8xbf16>, vector<2x8x8xbf16>, vector<2x8x8xf32> -> vector<2x8x8xf32>
    "tpu.trace_stop"() : () -> ()
    %60 = vector.extract_strided_slice %12 {offsets = [0, 0, 16], sizes = [2, 8, 8], strides = [1, 1, 1]} : vector<2x8x96xf32> to vector<2x8x8xf32>
    %61 = arith.truncf %60 : vector<2x8x8xf32> to vector<2x8x8xbf16>
    %62 = vector.extract_strided_slice %12 {offsets = [0, 0, 48], sizes = [2, 8, 8], strides = [1, 1, 1]} : vector<2x8x96xf32> to vector<2x8x8xf32>
    %63 = arith.truncf %62 : vector<2x8x8xf32> to vector<2x8x8xbf16>
    %64 = vector.extract_strided_slice %12 {offsets = [0, 0, 80], sizes = [2, 8, 8], strides = [1, 1, 1]} : vector<2x8x96xf32> to vector<2x8x8xf32>
    %65 = arith.truncf %64 : vector<2x8x8xf32> to vector<2x8x8xbf16>
    "tpu.trace_start"() <{level = 10 : i32, message = "bqd,bkd->bqk"}> : () -> ()
    %cst_21 = arith.constant dense<0.000000e+00> : vector<2x8x8xf32>
    %66 = tpu.matmul %61, %63, %cst_21 {dimension_numbers = #tpu.dot_dimension_numbers<[2], [2], [1], [1], [0, 0, 0, 1, 1, 1], [0], [0]>} : vector<2x8x8xbf16>, vector<2x8x8xbf16>, vector<2x8x8xf32> -> vector<2x8x8xf32>
    "tpu.trace_stop"() : () -> ()
    %cst_22 = arith.constant 0.353553385 : f32
    %67 = vector.broadcast %cst_22 : f32 to vector<2x8x8xf32>
    %68 = arith.mulf %66, %67 : vector<2x8x8xf32>
    %69 = vector.broadcast %13 : vector<2x1x8xf32> to vector<2x8x8xf32>
    %70 = arith.addf %68, %69 : vector<2x8x8xf32>
    %cst_23 = arith.constant dense<0xFF800000> : vector<2x8xf32>
    %71 = vector.multi_reduction <maximumf>, %70, %cst_23 [2] : vector<2x8x8xf32> to vector<2x8xf32>
    %72 = vector.shape_cast %71 : vector<2x8xf32> to vector<2x8x1xf32>
    %73 = vector.broadcast %72 : vector<2x8x1xf32> to vector<2x8x8xf32>
    %74 = arith.subf %70, %73 : vector<2x8x8xf32>
    %75 = math.exp %74 : vector<2x8x8xf32>
    %cst_24 = arith.constant dense<0.000000e+00> : vector<2x8xf32>
    %76 = vector.multi_reduction <add>, %75, %cst_24 [2] : vector<2x8x8xf32> to vector<2x8xf32>
    %77 = vector.shape_cast %76 : vector<2x8xf32> to vector<2x8x1xf32>
    %78 = tpu.reciprocal %77 {approx = true} : vector<2x8x1xf32> -> vector<2x8x1xf32>
    %79 = vector.broadcast %78 : vector<2x8x1xf32> to vector<2x8x8xf32>
    %80 = arith.mulf %75, %79 : vector<2x8x8xf32>
    %81 = arith.truncf %80 : vector<2x8x8xf32> to vector<2x8x8xbf16>
    "tpu.trace_start"() <{level = 10 : i32, message = "bqk,bkd->bqd"}> : () -> ()
    %cst_25 = arith.constant dense<0.000000e+00> : vector<2x8x8xf32>
    %82 = tpu.matmul %81, %65, %cst_25 {dimension_numbers = #tpu.dot_dimension_numbers<[2], [1], [1], [2], [0, 0, 0, 1, 1, 2], [0], [0]>} : vector<2x8x8xbf16>, vector<2x8x8xbf16>, vector<2x8x8xf32> -> vector<2x8x8xf32>
    "tpu.trace_stop"() : () -> ()
    %83 = vector.extract_strided_slice %12 {offsets = [0, 0, 24], sizes = [2, 8, 8], strides = [1, 1, 1]} : vector<2x8x96xf32> to vector<2x8x8xf32>
    %84 = arith.truncf %83 : vector<2x8x8xf32> to vector<2x8x8xbf16>
    %85 = vector.extract_strided_slice %12 {offsets = [0, 0, 56], sizes = [2, 8, 8], strides = [1, 1, 1]} : vector<2x8x96xf32> to vector<2x8x8xf32>
    %86 = arith.truncf %85 : vector<2x8x8xf32> to vector<2x8x8xbf16>
    %87 = vector.extract_strided_slice %12 {offsets = [0, 0, 88], sizes = [2, 8, 8], strides = [1, 1, 1]} : vector<2x8x96xf32> to vector<2x8x8xf32>
    %88 = arith.truncf %87 : vector<2x8x8xf32> to vector<2x8x8xbf16>
    "tpu.trace_start"() <{level = 10 : i32, message = "bqd,bkd->bqk"}> : () -> ()
    %cst_26 = arith.constant dense<0.000000e+00> : vector<2x8x8xf32>
    %89 = tpu.matmul %84, %86, %cst_26 {dimension_numbers = #tpu.dot_dimension_numbers<[2], [2], [1], [1], [0, 0, 0, 1, 1, 1], [0], [0]>} : vector<2x8x8xbf16>, vector<2x8x8xbf16>, vector<2x8x8xf32> -> vector<2x8x8xf32>
    "tpu.trace_stop"() : () -> ()
    %cst_27 = arith.constant 0.353553385 : f32
    %90 = vector.broadcast %cst_27 : f32 to vector<2x8x8xf32>
    %91 = arith.mulf %89, %90 : vector<2x8x8xf32>
    %92 = vector.broadcast %13 : vector<2x1x8xf32> to vector<2x8x8xf32>
    %93 = arith.addf %91, %92 : vector<2x8x8xf32>
    %cst_28 = arith.constant dense<0xFF800000> : vector<2x8xf32>
    %94 = vector.multi_reduction <maximumf>, %93, %cst_28 [2] : vector<2x8x8xf32> to vector<2x8xf32>
    %95 = vector.shape_cast %94 : vector<2x8xf32> to vector<2x8x1xf32>
    %96 = vector.broadcast %95 : vector<2x8x1xf32> to vector<2x8x8xf32>
    %97 = arith.subf %93, %96 : vector<2x8x8xf32>
    %98 = math.exp %97 : vector<2x8x8xf32>
    %cst_29 = arith.constant dense<0.000000e+00> : vector<2x8xf32>
    %99 = vector.multi_reduction <add>, %98, %cst_29 [2] : vector<2x8x8xf32> to vector<2x8xf32>
    %100 = vector.shape_cast %99 : vector<2x8xf32> to vector<2x8x1xf32>
    %101 = tpu.reciprocal %100 {approx = true} : vector<2x8x1xf32> -> vector<2x8x1xf32>
    %102 = vector.broadcast %101 : vector<2x8x1xf32> to vector<2x8x8xf32>
    %103 = arith.mulf %98, %102 : vector<2x8x8xf32>
    %104 = arith.truncf %103 : vector<2x8x8xf32> to vector<2x8x8xbf16>
    "tpu.trace_start"() <{level = 10 : i32, message = "bqk,bkd->bqd"}> : () -> ()
    %cst_30 = arith.constant dense<0.000000e+00> : vector<2x8x8xf32>
    %105 = tpu.matmul %104, %88, %cst_30 {dimension_numbers = #tpu.dot_dimension_numbers<[2], [1], [1], [2], [0, 0, 0, 1, 1, 2], [0], [0]>} : vector<2x8x8xbf16>, vector<2x8x8xbf16>, vector<2x8x8xf32> -> vector<2x8x8xf32>
    "tpu.trace_stop"() : () -> ()
    %106 = tpu.concatenate %36, %59, %82, %105 in 2 : vector<2x8x8xf32>, vector<2x8x8xf32>, vector<2x8x8xf32>, vector<2x8x8xf32> -> vector<2x8x32xf32>
    %107 = vector.shape_cast %106 : vector<2x8x32xf32> to vector<16x32xf32>
    %108 = arith.truncf %107 : vector<16x32xf32> to vector<16x32xbf16>
    %c0_31 = arith.constant 0 : index
    %c0_32 = arith.constant 0 : index
    %c0_33 = arith.constant 0 : index
    %109 = vector.load %arg7[%c0_31, %c0_32, %c0_33] : memref<1x32x32xbf16, #tpu.memory_space<vmem>>, vector<1x32x32xbf16>
    %110 = vector.shape_cast %109 : vector<1x32x32xbf16> to vector<32x32xbf16>
    %cst_34 = arith.constant dense<0.000000e+00> : vector<16x32xf32>
    %111 = tpu.matmul %108, %110, %cst_34 {dimension_numbers = #tpu.dot_dimension_numbers<[1], [0], [0], [1], [0, 0, 1, 1], [], []>} : vector<16x32xbf16>, vector<32x32xbf16>, vector<16x32xf32> -> vector<16x32xf32>
    %c0_35 = arith.constant 0 : index
    %c0_36 = arith.constant 0 : index
    %c0_37 = arith.constant 0 : index
    %112 = vector.load %arg8[%c0_35, %c0_36, %c0_37] : memref<1x1x32xf32, #tpu.memory_space<vmem>>, vector<1x1x32xf32>
    %113 = vector.shape_cast %112 : vector<1x1x32xf32> to vector<1x32xf32>
    %114 = vector.broadcast %113 : vector<1x32xf32> to vector<16x32xf32>
    %115 = arith.addf %111, %114 : vector<16x32xf32>
    %116 = arith.addf %115, %3 : vector<16x32xf32>
    %c0_38 = arith.constant 0 : index
    %c0_39 = arith.constant 0 : index
    %c0_40 = arith.constant 0 : index
    %117 = vector.load %arg9[%c0_38, %c0_39, %c0_40] : memref<1x1x32xf32, #tpu.memory_space<vmem>>, vector<1x1x32xf32>
    %118 = vector.shape_cast %117 : vector<1x1x32xf32> to vector<1x32xf32>
    %c0_41 = arith.constant 0 : index
    %c0_42 = arith.constant 0 : index
    %c0_43 = arith.constant 0 : index
    %119 = vector.load %arg10[%c0_41, %c0_42, %c0_43] : memref<1x1x32xf32, #tpu.memory_space<vmem>>, vector<1x1x32xf32>
    %120 = vector.shape_cast %119 : vector<1x1x32xf32> to vector<1x32xf32>
    %cst_44 = arith.constant dense<0.000000e+00> : vector<16xf32>
    %121 = vector.multi_reduction <add>, %116, %cst_44 [1] : vector<16x32xf32> to vector<16xf32>
    %122 = vector.shape_cast %121 : vector<16xf32> to vector<16x1xf32>
    %cst_45 = arith.constant 3.200000e+01 : f32
    %123 = vector.broadcast %cst_45 : f32 to vector<16x1xf32>
    %124 = arith.divf %122, %123 : vector<16x1xf32>
    %125 = vector.broadcast %124 : vector<16x1xf32> to vector<16x32xf32>
    %126 = arith.subf %116, %125 : vector<16x32xf32>
    %127 = arith.mulf %126, %126 : vector<16x32xf32>
    %cst_46 = arith.constant dense<0.000000e+00> : vector<16xf32>
    %128 = vector.multi_reduction <add>, %127, %cst_46 [1] : vector<16x32xf32> to vector<16xf32>
    %129 = vector.shape_cast %128 : vector<16xf32> to vector<16x1xf32>
    %cst_47 = arith.constant 3.200000e+01 : f32
    %130 = vector.broadcast %cst_47 : f32 to vector<16x1xf32>
    %131 = arith.divf %129, %130 : vector<16x1xf32>
    %cst_48 = arith.constant 9.99999996E-13 : f32
    %132 = vector.broadcast %cst_48 : f32 to vector<16x1xf32>
    %133 = arith.addf %131, %132 : vector<16x1xf32>
    %134 = math.rsqrt %133 : vector<16x1xf32>
    %135 = vector.broadcast %134 : vector<16x1xf32> to vector<16x32xf32>
    %136 = arith.mulf %126, %135 : vector<16x32xf32>
    %137 = vector.broadcast %118 : vector<1x32xf32> to vector<16x32xf32>
    %138 = arith.mulf %136, %137 : vector<16x32xf32>
    %139 = vector.broadcast %120 : vector<1x32xf32> to vector<16x32xf32>
    %140 = arith.addf %138, %139 : vector<16x32xf32>
    %141 = arith.truncf %140 : vector<16x32xf32> to vector<16x32xbf16>
    %c0_49 = arith.constant 0 : index
    %c0_50 = arith.constant 0 : index
    %c0_51 = arith.constant 0 : index
    %142 = vector.load %arg11[%c0_49, %c0_50, %c0_51] : memref<1x32x64xbf16, #tpu.memory_space<vmem>>, vector<1x32x64xbf16>
    %143 = vector.shape_cast %142 : vector<1x32x64xbf16> to vector<32x64xbf16>
    %cst_52 = arith.constant dense<0.000000e+00> : vector<16x64xf32>
    %144 = tpu.matmul %141, %143, %cst_52 {dimension_numbers = #tpu.dot_dimension_numbers<[1], [0], [0], [1], [0, 0, 1, 1], [], []>} : vector<16x32xbf16>, vector<32x64xbf16>, vector<16x64xf32> -> vector<16x64xf32>
    %c0_53 = arith.constant 0 : index
    %c0_54 = arith.constant 0 : index
    %c0_55 = arith.constant 0 : index
    %145 = vector.load %arg12[%c0_53, %c0_54, %c0_55] : memref<1x1x64xf32, #tpu.memory_space<vmem>>, vector<1x1x64xf32>
    %146 = vector.shape_cast %145 : vector<1x1x64xf32> to vector<1x64xf32>
    %147 = vector.broadcast %146 : vector<1x64xf32> to vector<16x64xf32>
    %148 = arith.addf %144, %147 : vector<16x64xf32>
    %cst_56 = arith.constant 5.000000e-01 : f32
    %149 = vector.broadcast %cst_56 : f32 to vector<16x64xf32>
    %150 = arith.mulf %149, %148 : vector<16x64xf32>
    %cst_57 = arith.constant 4.471500e-02 : f32
    %151 = vector.broadcast %cst_57 : f32 to vector<16x64xf32>
    %152 = arith.mulf %151, %148 : vector<16x64xf32>
    %153 = arith.mulf %152, %148 : vector<16x64xf32>
    %154 = arith.mulf %153, %148 : vector<16x64xf32>
    %155 = arith.addf %148, %154 : vector<16x64xf32>
    %cst_58 = arith.constant 0.797884583 : f32
    %156 = vector.broadcast %cst_58 : f32 to vector<16x64xf32>
    %157 = arith.mulf %156, %155 : vector<16x64xf32>
    %158 = math.tanh %157 : vector<16x64xf32>
    %cst_59 = arith.constant 1.000000e+00 : f32
    %159 = vector.broadcast %cst_59 : f32 to vector<16x64xf32>
    %160 = arith.addf %159, %158 : vector<16x64xf32>
    %161 = arith.mulf %150, %160 : vector<16x64xf32>
    %162 = arith.truncf %161 : vector<16x64xf32> to vector<16x64xbf16>
    %c0_60 = arith.constant 0 : index
    %c0_61 = arith.constant 0 : index
    %c0_62 = arith.constant 0 : index
    %163 = vector.load %arg13[%c0_60, %c0_61, %c0_62] : memref<1x64x32xbf16, #tpu.memory_space<vmem>>, vector<1x64x32xbf16>
    %164 = vector.shape_cast %163 : vector<1x64x32xbf16> to vector<64x32xbf16>
    %cst_63 = arith.constant dense<0.000000e+00> : vector<16x32xf32>
    %165 = tpu.matmul %162, %164, %cst_63 {dimension_numbers = #tpu.dot_dimension_numbers<[1], [0], [0], [1], [0, 0, 1, 1], [], []>} : vector<16x64xbf16>, vector<64x32xbf16>, vector<16x32xf32> -> vector<16x32xf32>
    %c0_64 = arith.constant 0 : index
    %c0_65 = arith.constant 0 : index
    %c0_66 = arith.constant 0 : index
    %166 = vector.load %arg14[%c0_64, %c0_65, %c0_66] : memref<1x1x32xf32, #tpu.memory_space<vmem>>, vector<1x1x32xf32>
    %167 = vector.shape_cast %166 : vector<1x1x32xf32> to vector<1x32xf32>
    %168 = vector.broadcast %167 : vector<1x32xf32> to vector<16x32xf32>
    %169 = arith.addf %165, %168 : vector<16x32xf32>
    %170 = arith.addf %169, %140 : vector<16x32xf32>
    %c0_67 = arith.constant 0 : index
    %c0_68 = arith.constant 0 : index
    %c0_69 = arith.constant 0 : index
    %171 = vector.load %arg15[%c0_67, %c0_68, %c0_69] : memref<1x1x32xf32, #tpu.memory_space<vmem>>, vector<1x1x32xf32>
    %172 = vector.shape_cast %171 : vector<1x1x32xf32> to vector<1x32xf32>
    %c0_70 = arith.constant 0 : index
    %c0_71 = arith.constant 0 : index
    %c0_72 = arith.constant 0 : index
    %173 = vector.load %arg16[%c0_70, %c0_71, %c0_72] : memref<1x1x32xf32, #tpu.memory_space<vmem>>, vector<1x1x32xf32>
    %174 = vector.shape_cast %173 : vector<1x1x32xf32> to vector<1x32xf32>
    %cst_73 = arith.constant dense<0.000000e+00> : vector<16xf32>
    %175 = vector.multi_reduction <add>, %170, %cst_73 [1] : vector<16x32xf32> to vector<16xf32>
    %176 = vector.shape_cast %175 : vector<16xf32> to vector<16x1xf32>
    %cst_74 = arith.constant 3.200000e+01 : f32
    %177 = vector.broadcast %cst_74 : f32 to vector<16x1xf32>
    %178 = arith.divf %176, %177 : vector<16x1xf32>
    %179 = vector.broadcast %178 : vector<16x1xf32> to vector<16x32xf32>
    %180 = arith.subf %170, %179 : vector<16x32xf32>
    %181 = arith.mulf %180, %180 : vector<16x32xf32>
    %cst_75 = arith.constant dense<0.000000e+00> : vector<16xf32>
    %182 = vector.multi_reduction <add>, %181, %cst_75 [1] : vector<16x32xf32> to vector<16xf32>
    %183 = vector.shape_cast %182 : vector<16xf32> to vector<16x1xf32>
    %cst_76 = arith.constant 3.200000e+01 : f32
    %184 = vector.broadcast %cst_76 : f32 to vector<16x1xf32>
    %185 = arith.divf %183, %184 : vector<16x1xf32>
    %cst_77 = arith.constant 9.99999996E-13 : f32
    %186 = vector.broadcast %cst_77 : f32 to vector<16x1xf32>
    %187 = arith.addf %185, %186 : vector<16x1xf32>
    %188 = math.rsqrt %187 : vector<16x1xf32>
    %189 = vector.broadcast %188 : vector<16x1xf32> to vector<16x32xf32>
    %190 = arith.mulf %180, %189 : vector<16x32xf32>
    %191 = vector.broadcast %172 : vector<1x32xf32> to vector<16x32xf32>
    %192 = arith.mulf %190, %191 : vector<16x32xf32>
    %193 = vector.broadcast %174 : vector<1x32xf32> to vector<16x32xf32>
    %194 = arith.addf %192, %193 : vector<16x32xf32>
    %c0_78 = arith.constant 0 : index
    %c0_79 = arith.constant 0 : index
    %195 = vector.load %arg18[%c0_78, %c0_79] : memref<16x32xf32, #tpu.memory_space<vmem>>, vector<16x32xf32>
    tpu.vector_store %arg18[%c0_78, %c0_79], %194 {strides = array<i32>} : memref<16x32xf32, #tpu.memory_space<vmem>>, vector<16x32xf32>,
    %c1_i32 = arith.constant 1 : i32
    %196 = arith.cmpi eq, %arg0, %c1_i32 : i32
    %197 = arith.extui %196 : i1 to i32
    %c0_i32_80 = arith.constant 0 : i32
    %198 = arith.cmpi ne, %197, %c0_i32_80 : i32
    scf.if %198 {
      %c0_81 = arith.constant 0 : index
      %c0_82 = arith.constant 0 : index
      %199 = vector.load %arg17[%c0_81, %c0_82] : memref<16x32xf32, #tpu.memory_space<vmem>>, vector<16x32xf32>
      tpu.vector_store %arg17[%c0_81, %c0_82], %194 {strides = array<i32>} : memref<16x32xf32, #tpu.memory_space<vmem>>, vector<16x32xf32>,
    } else {
    }
    return
  }
  func.func @transform_0(%arg0: i32) -> (i32, i32) {
    %c0_i32 = arith.constant 0 : i32
    %c0_i32_0 = arith.constant 0 : i32
    %c0_i32_1 = arith.constant 0 : i32
    return %c0_i32, %c0_i32_0 : i32, i32
  }
  func.func @transform_1(%arg0: i32) -> (i32, i32, i32) {
    %c0_i32 = arith.constant 0 : i32
    %c0_i32_0 = arith.constant 0 : i32
    %c0_i32_1 = arith.constant 0 : i32
    %c0_i32_2 = arith.constant 0 : i32
    return %c0_i32, %c0_i32_0, %c0_i32_1 : i32, i32, i32
  }
  func.func @transform_2(%arg0: i32) -> (i32, i32) {
    %c0_i32 = arith.constant 0 : i32
    %c0_i32_0 = arith.constant 0 : i32
    %c0_i32_1 = arith.constant 0 : i32
    return %c0_i32, %c0_i32_0 : i32, i32
  }
  func.func @transform_3(%arg0: i32) -> (i32, i32) {
    %c0_i32 = arith.constant 0 : i32
    %c0_i32_0 = arith.constant 0 : i32
    %c0_i32_1 = arith.constant 0 : i32
    return %c0_i32, %c0_i32_0 : i32, i32
  }
  func.func @transform_4(%arg0: i32) -> (i32, i32, i32) {
    %c0_i32 = arith.constant 0 : i32
    %c0_i32_0 = arith.constant 0 : i32
    %c0_i32_1 = arith.constant 0 : i32
    return %arg0, %c0_i32, %c0_i32_0 : i32, i32, i32
  }
  func.func @transform_5(%arg0: i32) -> (i32, i32, i32) {
    %c0_i32 = arith.constant 0 : i32
    %c0_i32_0 = arith.constant 0 : i32
    %c0_i32_1 = arith.constant 0 : i32
    return %arg0, %c0_i32, %c0_i32_0 : i32, i32, i32
  }
  func.func @transform_6(%arg0: i32) -> (i32, i32, i32) {
    %c0_i32 = arith.constant 0 : i32
    %c0_i32_0 = arith.constant 0 : i32
    %c0_i32_1 = arith.constant 0 : i32
    return %arg0, %c0_i32, %c0_i32_0 : i32, i32, i32
  }
  func.func @transform_7(%arg0: i32) -> (i32, i32, i32) {
    %c0_i32 = arith.constant 0 : i32
    %c0_i32_0 = arith.constant 0 : i32
    %c0_i32_1 = arith.constant 0 : i32
    return %arg0, %c0_i32, %c0_i32_0 : i32, i32, i32
  }
  func.func @transform_8(%arg0: i32) -> (i32, i32, i32) {
    %c0_i32 = arith.constant 0 : i32
    %c0_i32_0 = arith.constant 0 : i32
    %c0_i32_1 = arith.constant 0 : i32
    return %arg0, %c0_i32, %c0_i32_0 : i32, i32, i32
  }
  func.func @transform_9(%arg0: i32) -> (i32, i32, i32) {
    %c0_i32 = arith.constant 0 : i32
    %c0_i32_0 = arith.constant 0 : i32
    %c0_i32_1 = arith.constant 0 : i32
    return %arg0, %c0_i32, %c0_i32_0 : i32, i32, i32
  }
  func.func @transform_10(%arg0: i32) -> (i32, i32, i32) {
    %c0_i32 = arith.constant 0 : i32
    %c0_i32_0 = arith.constant 0 : i32
    %c0_i32_1 = arith.constant 0 : i32
    return %arg0, %c0_i32, %c0_i32_0 : i32, i32, i32
  }
  func.func @transform_11(%arg0: i32) -> (i32, i32, i32) {
    %c0_i32 = arith.constant 0 : i32
    %c0_i32_0 = arith.constant 0 : i32
    %c0_i32_1 = arith.constant 0 : i32
    return %arg0, %c0_i32, %c0_i32_0 : i32, i32, i32
  }
  func.func @transform_12(%arg0: i32) -> (i32, i32, i32) {
    %c0_i32 = arith.constant 0 : i32
    %c0_i32_0 = arith.constant 0 : i32
    %c0_i32_1 = arith.constant 0 : i32
    return %arg0, %c0_i32, %c0_i32_0 : i32, i32, i32
  }
  func.func @transform_13(%arg0: i32) -> (i32, i32, i32) {
    %c0_i32 = arith.constant 0 : i32
    %c0_i32_0 = arith.constant 0 : i32
    %c0_i32_1 = arith.constant 0 : i32
    return %arg0, %c0_i32, %c0_i32_0 : i32, i32, i32
  }
  func.func @transform_14(%arg0: i32) -> (i32, i32, i32) {
    %c0_i32 = arith.constant 0 : i32
    %c0_i32_0 = arith.constant 0 : i32
    %c0_i32_1 = arith.constant 0 : i32
    return %arg0, %c0_i32, %c0_i32_0 : i32, i32, i32
  }
  func.func @transform_15(%arg0: i32) -> (i32, i32, i32) {
    %c0_i32 = arith.constant 0 : i32
    %c0_i32_0 = arith.constant 0 : i32
    %c0_i32_1 = arith.constant 0 : i32
    return %arg0, %c0_i32, %c0_i32_0 : i32, i32, i32
  }
  func.func @transform_16(%arg0: i32) -> (i32, i32) {
    %c0_i32 = arith.constant 0 : i32
    %c0_i32_0 = arith.constant 0 : i32
    %c0_i32_1 = arith.constant 0 : i32
    return %c0_i32, %c0_i32_0 : i32, i32
  }
}

</mosaic_0001>

<llo_original>
// kernel: model_forward.3
$region0: #{model_forward.3}
  #allocation0 [shape = 'u32[]', space=smem, size = 0x4, offset = 0x4, fixed_abs, tag = 'smem constant byte address 0x4 - core index']
  #allocation1 [shape = 'u32[144,128]{1,0:T(1,128)}', space=vmem, size = 0x12000, scoped, tag = 'internal scratch']
  #allocation2 [shape = 'f32[1]{0:T(128)S(6)}', space=smem, size = 0x200, scoped, tag = 'scoped memory for model_forward.3']
  %s0 = inlined_call_operand.vmem [shape: f32[2,32], index: 0, kind: input, shape index: {}]
  %s1 = inlined_call_operand.vmem [shape: bf16[32,32], index: 1, kind: input, shape index: {}]
  %s2 = inlined_call_operand.vmem [shape: f32[1,32], index: 2, kind: input, shape index: {}]
  %s3 = inlined_call_operand.vmem [shape: bf16[32,16], index: 3, kind: input, shape index: {}]
  %s4 = inlined_call_operand.vmem [shape: f32[1,16], index: 4, kind: input, shape index: {}]
  %s5 = inlined_call_operand.vmem [shape: s32[2], index: 5, kind: input, shape index: {}]
  %s6 = inlined_call_operand.<no memory space> [shape: f32[1], index: 6, kind: input, shape index: {}]
  %s7 = inlined_call_operand.hbm [shape: f32[2,16], index: 7, kind: output, shape index: {0}]
  %s8 = inlined_call_operand.hbm [shape: f32[1,1], index: 8, kind: output, shape index: {1}]
  %9 = xla_tuple %s7, %s8
  %s10 = sld [smem:[#allocation0]]
  $region50: #{model_forward.3} parent=0
    _
  %s12 = ssub.s32 1, %s10
  %s13 = scalar_select 0, %s12, %s10
  %14 = sst [smem:[#allocation2]] %s6
  $region1: #{model_forward.3} parent=0
    #allocation3 [shape = 'u8[512]{0}', space=smem, size = 0x200, scoped, tag = 'input window, operand 5, single buffered']
    #allocation4 [shape = 's32[1]{0}', space=sflag, size = 0x4, scoped, tag = 'scoped memory for model_forward.3']
    #allocation5 [shape = 's32[1]{0}', space=sflag, size = 0x4, scoped, tag = 'scoped memory for model_forward.3']
    #allocation6 [shape = 'u8[1024]{0}', space=vmem, size = 0x400, scoped, tag = 'output window, operand 0, single buffered']
    #allocation7 [shape = 'u8[512]{0}', space=vmem, size = 0x400, scoped, tag = 'output window, operand 1, single buffered']
    #allocation8 [shape = 's32[1]{0}', space=sflag, size = 0x4, scoped, tag = 'scoped memory for model_forward.3']
    %15 = vsyncpa [#allocation5], 0
    %16 = vsyncpa [#allocation4], 0
    %17 = vsyncpa [#allocation8], 0
    // Predicated region
    $region2: #{model_forward.3} parent=1 // pred_check
      _
    $region3: #{model_forward.3} parent=1 // pred_check_branch
      %19 = sbr.rel (0) target = $region5
    $region4: #{model_forward.3} parent=1 // pred_region
      _
    $region5: #{model_forward.3} parent=1 // pred_fallthru
      _
    // Predicated region
    $region6: #{model_forward.3} parent=1 // pred_check
      _
    $region7: #{model_forward.3} parent=1 // pred_check_branch
      %21 = sbr.rel (0) target = $region9
    $region8: #{model_forward.3} parent=1 // pred_region
      _
    $region9: #{model_forward.3} parent=1 // pred_fallthru
      _
    // Predicated region
    $region10: #{model_forward.3} parent=1 // pred_check
      _
    $region11: #{model_forward.3} parent=1 // pred_check_branch
      %23 = sbr.rel (0) target = $region13
    $region12: #{model_forward.3} parent=1 // pred_region
      _
    $region13: #{model_forward.3} parent=1 // pred_fallthru
      _
    // Predicated region
    $region14: #{model_forward.3} parent=1 // pred_check
      _
    $region15: #{model_forward.3} parent=1 // pred_check_branch
      %25 = sbr.rel (0) target = $region17
    $region16: #{model_forward.3} parent=1 // pred_region
      _
    $region17: #{model_forward.3} parent=1 // pred_fallthru
      _
    // Predicated region
    $region18: #{model_forward.3} parent=1 // pred_check
      _
    $region19: #{model_forward.3} parent=1 // pred_check_branch
      %27 = sbr.rel (0) target = $region21
    $region20: #{model_forward.3} parent=1 // pred_region
      _
    $region21: #{model_forward.3} parent=1 // pred_fallthru
      _
    // Predicated region
    $region22: #{model_forward.3} parent=1 // pred_check
      _
    $region23: #{model_forward.3} parent=1 // pred_check_branch
      %29 = sbr.rel (0) target = $region25
    $region24: #{model_forward.3} parent=1 // pred_region
      %s31 = ssub.s32 16, 16
      %32 = vsyncadd [#allocation5], %s31
      %s34 = sshll.u32 %s5, 4
      %s35 = int_to_ptr.vmem [resolvable:$true] %s34
      %37 = dma.vmem_to_smem %s35, 16, [#allocation3], [#allocation5]
    $region25: #{model_forward.3} parent=1 // pred_fallthru
      _
    // Predicated region
    $region26: #{model_forward.3} parent=1 // pred_check
      _
    $region27: #{model_forward.3} parent=1 // pred_check_branch
      %39 = sbr.rel (0) target = $region29
    $region28: #{model_forward.3} parent=1 // pred_region
      _
    $region29: #{model_forward.3} parent=1 // pred_fallthru
      _
    // Predicated region
    $region30: #{model_forward.3} parent=1 // pred_check
      _
    $region31: #{model_forward.3} parent=1 // pred_check_branch
      %41 = sbr.rel (0) target = $region33
    $region32: #{model_forward.3} parent=1 // pred_region
      %42 = dma.done [#allocation5], 16
    $region33: #{model_forward.3} parent=1 // pred_fallthru
      _
    %43 = sfence
    %v45 = vld [vmem:[%s0] sm:$0x3]
    %v46 = vpack.c.bf16 %v45, %v45
    %v47 = vld [vmem:[%s1] sm:$0xf]
    %v48 = vld [vmem:[%s1 + $0x4] sm:$0xf]
    %v49 = vld [vmem:[%s1 + $0x8] sm:$0xf]
    %v50 = vld [vmem:[%s1 + $0xc] sm:$0xf]
    %v51 = vld [vmem:[%s2] sm:$0x1]
    %v53 = vlaneseq
    %v54 = vshrl.u32 %v53, 7
    %v55 = vsub.s32 0, %v54
    %v56 = vrot.slane %v51, %v55
    %v62 = vunpack.c.l.b16 %v47
    %v63 = vunpack.c.l.b16 %v48
    %v64 = vunpack.c.l.b16 %v49
    %v65 = vunpack.c.l.b16 %v50
    %v66 = vpack.c.b16 %v63, %v62
    %v67 = vpack.c.b16 %v65, %v64
    %vm70 = vcmask 261120
    %v72 = vsel %vm70, %v46, 0
    %74 = vmatprep.subr.bf16.mxu0 0
    %75 = vmatpush1.bf16.msra.mxu0 %v66
    %76 = vmatprep.subr.bf16.mxu0 0
    %77 = vmatpush1.bf16.msra.mxu0 %v67
    %78 = vmatprep.subr.bf16.mxu0 0
    %79 = vmatpush1.bf16.msra.mxu0 0
    %80 = vmatprep.subr.bf16.mxu0 0
    %81 = vmatpush1.bf16.msra.mxu0 0
    %82 = vmatprep.subr.bf16.mxu0 0
    %83 = vmatpush1.bf16.msra.mxu0 0
    %84 = vmatprep.subr.bf16.mxu0 0
    %85 = vmatpush1.bf16.msra.mxu0 0
    %86 = vmatprep.subr.bf16.mxu0 0
    %87 = vmatpush1.bf16.msra.mxu0 0
    %88 = vmatprep.subr.bf16.mxu0 0
    %89 = vmatpush1.bf16.msra.mxu0 0
    %90 = vmatprep.subr.bf16.mxu0 0
    %91 = vmatpush1.bf16.msra.mxu0 0
    %92 = vmatprep.subr.bf16.mxu0 0
    %93 = vmatpush1.bf16.msra.mxu0 0
    %94 = vmatprep.subr.bf16.mxu0 0
    %95 = vmatpush1.bf16.msra.mxu0 0
    %96 = vmatprep.subr.bf16.mxu0 0
    %97 = vmatpush1.bf16.msra.mxu0 0
    %98 = vmatprep.subr.bf16.mxu0 0
    %99 = vmatpush1.bf16.msra.mxu0 0
    %100 = vmatprep.subr.bf16.mxu0 0
    %101 = vmatpush1.bf16.msra.mxu0 0
    %102 = vmatprep.subr.bf16.mxu0 0
    %103 = vmatpush1.bf16.msra.mxu0 0
    %104 = vmatprep.subr.bf16.mxu0 0
    %105 = vmatpush1.bf16.msra.mxu0 0
    %106 = vmatprep.mubr.bf16.mxu0 0
    %107 = vmatmul.mubr.bf16.gmra.mrb[0].mxu0 %v72
    %v108 = vpop.f32.mrb[0].mxu0
    %v109 = vadd.f32 %v56, %v108
    %v110 = vpop.f32.mrb[0].mxu0
    %v111 = vpop.f32.mrb[0].mxu0
    %v112 = vpop.f32.mrb[0].mxu0
    %113 = vdwg.mxu0
    %v114 = vtanh.pop %v109
    %v115 = vpack.c.bf16 %v114, %v114
    %v116 = vld [vmem:[%s3] sm:$0xf]
    %v117 = vld [vmem:[%s3 + $0x4] sm:$0xf]
    %v118 = vld [vmem:[%s3 + $0x8] sm:$0xf]
    %v119 = vld [vmem:[%s3 + $0xc] sm:$0xf]
    %v120 = vld [vmem:[%s4] sm:$0x1]
    %v122 = vlaneseq
    %v123 = vshrl.u32 %v122, 7
    %v124 = vsub.s32 0, %v123
    %v125 = vrot.slane %v120, %v124
    %v131 = vunpack.c.l.b16 %v116
    %v132 = vunpack.c.l.b16 %v117
    %v133 = vunpack.c.l.b16 %v118
    %v134 = vunpack.c.l.b16 %v119
    %v135 = vpack.c.b16 %v132, %v131
    %v136 = vpack.c.b16 %v134, %v133
    %v140 = vsel %vm70, %v115, 0
    %142 = vmatprep.subr.bf16.mxu0 0
    %143 = vmatpush1.bf16.msra.mxu0 %v135
    %144 = vmatprep.subr.bf16.mxu0 0
    %145 = vmatpush1.bf16.msra.mxu0 %v136
    %146 = vmatprep.subr.bf16.mxu0 0
    %147 = vmatpush1.bf16.msra.mxu0 0
    %148 = vmatprep.subr.bf16.mxu0 0
    %149 = vmatpush1.bf16.msra.mxu0 0
    %150 = vmatprep.subr.bf16.mxu0 0
    %151 = vmatpush1.bf16.msra.mxu0 0
    %152 = vmatprep.subr.bf16.mxu0 0
    %153 = vmatpush1.bf16.msra.mxu0 0
    %154 = vmatprep.subr.bf16.mxu0 0
    %155 = vmatpush1.bf16.msra.mxu0 0
    %156 = vmatprep.subr.bf16.mxu0 0
    %157 = vmatpush1.bf16.msra.mxu0 0
    %158 = vmatprep.subr.bf16.mxu0 0
    %159 = vmatpush1.bf16.msra.mxu0 0
    %160 = vmatprep.subr.bf16.mxu0 0
    %161 = vmatpush1.bf16.msra.mxu0 0
    %162 = vmatprep.subr.bf16.mxu0 0
    %163 = vmatpush1.bf16.msra.mxu0 0
    %164 = vmatprep.subr.bf16.mxu0 0
    %165 = vmatpush1.bf16.msra.mxu0 0
    %166 = vmatprep.subr.bf16.mxu0 0
    %167 = vmatpush1.bf16.msra.mxu0 0
    %168 = vmatprep.subr.bf16.mxu0 0
    %169 = vmatpush1.bf16.msra.mxu0 0
    %170 = vmatprep.subr.bf16.mxu0 0
    %171 = vmatpush1.bf16.msra.mxu0 0
    %172 = vmatprep.subr.bf16.mxu0 0
    %173 = vmatpush1.bf16.msra.mxu0 0
    %174 = vmatprep.mubr.bf16.mxu0 0
    %175 = vmatmul.mubr.bf16.gmra.mrb[0].mxu0 %v140
    %v176 = vpop.f32.mrb[0].mxu0
    %v177 = vadd.f32 %v125, %v176
    %v178 = vpop.f32.mrb[0].mxu0
    %v179 = vpop.f32.mrb[0].mxu0
    %v180 = vpop.f32.mrb[0].mxu0
    %181 = vdwg.mxu0
    %vm182 = vcmask 123904
    %183 = vst.msk [vmem:[#allocation6] sm:$0x3] %vm182, %v177
    %v184 = vlaneseq
    %v185 = vand.u32 %v184, 127
    %vm186 = vcmp.lt.s32.totalorder %v185, 7
    %v187 = vsel %vm186, %v177, -1e+09
    %v188 = vsel %vm182, %v187, -inf
    %189 = vmax.xlane.f32.xlu0 %v188
    %v190 = vpop.xlane.xlu0 %189
    %v191 = vsub.f32 %v187, %v190
    %v192 = vmul.f32 %v191, 1.442695
    %v193 = vpow.pop %v192
    %v194 = vsel %vm186, %v193, 0.0
    %v195 = vsel %vm182, %v194, 0.0
    %196 = vadd.xlane.f32.xlu0 %v195
    %v197 = vpop.xlane.xlu0 %196
    %v198 = vlog2.pop %v197
    %v199 = vmul.f32 %v198, 0.6931472
    %s200 = sld [smem:[#allocation3]]
    %v201 = vstv %s200
    %vm202 = vcmp.eq.s32.totalorder %v185, %v201
    %v203 = vsel %vm202, 1, 0
    %v204 = vcvt.s32.f32 %v203
    %v205 = vmul.f32 %v204, %v191
    %vm206 = vcmask 122880
    %v207 = vsel %vm206, %v205, 0.0
    %208 = vadd.xlane.f32.xlu0 %v207
    %v209 = vpop.xlane.xlu0 %208
    %v210 = vsub.f32 %v199, %v209
    %v211 = vadd.f32 %v210, 0.0
    %s212 = sld [smem:[#allocation3 + $0x1]]
    %v213 = vstv %s212
    %vm214 = vcmp.eq.s32.totalorder %v185, %v213
    %v215 = vsel %vm214, 1, 0
    %v216 = vcvt.s32.f32 %v215
    %v217 = vmul.f32 %v216, %v191
    %vm218 = vcmask 123905
    %v219 = vsel %vm218, %v217, 0.0
    %220 = vadd.xlane.f32.xlu0 %v219
    %v221 = vpop.xlane.xlu0 %220
    %v222 = vsub.f32 %v199, %v221
    %v224 = vrot.slane %v222, 1
    %v226 = vadd.f32 %v211, %v224
    %v227 = vmul.f32 %v226, 0.5
    %s228 = sld [smem:[#allocation2]]
    %v229 = vstv %s228
    %v230 = vsub.f32 0.0, %v229
    %v231 = vmul.f32 %v230, 1.442695
    %v232 = vpow.pop %v231
    %v233 = vmul.f32 %v232, %v227
    %v234 = vadd.f32 %v233, %v229
    %vm235 = vcmask 0
    %236 = vst.msk [vmem:[#allocation7] sm:$0x1] %vm235, %v234
    // Predicated region
    $region34: #{model_forward.3} parent=1 // pred_check
      _
    $region35: #{model_forward.3} parent=1 // pred_check_branch
      %238 = sbr.rel (0) target = $region37
    $region36: #{model_forward.3} parent=1 // pred_region
      %s240 = ssub.s32 32, 32
      %241 = vsyncadd [#allocation4], %s240
      %s243 = sshll.u32 [#allocation6], 4
      %s244 = int_to_ptr.vmem [resolvable:$true] %s243
      %246 = dma.vmem_to_hbm [thread:$0]  %s244, 32, %s7, [#allocation4]
    $region37: #{model_forward.3} parent=1 // pred_fallthru
      _
    // Predicated region
    $region38: #{model_forward.3} parent=1 // pred_check
      _
    $region39: #{model_forward.3} parent=1 // pred_check_branch
      %248 = sbr.rel (0) target = $region41
    $region40: #{model_forward.3} parent=1 // pred_region
      %s250 = ssub.s32 16, 16
      %251 = vsyncadd [#allocation8], %s250
      %s253 = sshll.u32 [#allocation7], 4
      %s254 = int_to_ptr.vmem [resolvable:$true] %s253
      %256 = dma.vmem_to_hbm [thread:$0]  %s254, 16, %s8, [#allocation8]
    $region41: #{model_forward.3} parent=1 // pred_fallthru
      _
    // Predicated region
    $region42: #{model_forward.3} parent=1 // pred_check
      _
    $region43: #{model_forward.3} parent=1 // pred_check_branch
      %258 = sbr.rel (0) target = $region45
    $region44: #{model_forward.3} parent=1 // pred_region
      %259 = dma.done [#allocation4], 32
    $region45: #{model_forward.3} parent=1 // pred_fallthru
      _
    // Predicated region
    $region46: #{model_forward.3} parent=1 // pred_check
      _
    $region47: #{model_forward.3} parent=1 // pred_check_branch
      %261 = sbr.rel (0) target = $region49
    $region48: #{model_forward.3} parent=1 // pred_region
      %262 = dma.done [#allocation8], 16
    $region49: #{model_forward.3} parent=1 // pred_fallthru
      _
    %263 = vsyncpa [#allocation4], 1
    %264 = vsyncpa [#allocation8], 1
    %265 = vsyncpa [#allocation5], 1

// kernel: model_forward.2
$region0: #{model_forward.2}
  #allocation0 [shape = 'u32[]', space=smem, size = 0x4, offset = 0x4, fixed_abs, tag = 'smem constant byte address 0x4 - core index']
  #allocation1 [shape = 'u32[144,128]{1,0:T(1,128)}', space=vmem, size = 0x12000, scoped, tag = 'internal scratch']
  #allocation2 [shape = 'f32[16,32]{1,0:T(8,128)}', space=vmem, size = 0x2000, scoped, tag = 'scratch operand']
  %s0 = inlined_call_operand.vmem [shape: f32[16,32], index: 0, kind: input, shape index: {}]
  %s1 = inlined_call_operand.vmem [shape: f32[2,1,8], index: 1, kind: input, shape index: {}]
  %s2 = inlined_call_operand.vmem [shape: f32[1,32], index: 2, kind: input, shape index: {}]
  %s3 = inlined_call_operand.vmem [shape: f32[1,32], index: 3, kind: input, shape index: {}]
  %s4 = inlined_call_operand.vmem [shape: bf16[2,32,96], index: 4, kind: input, shape index: {}]
  %s5 = inlined_call_operand.vmem [shape: f32[2,1,96], index: 5, kind: input, shape index: {}]
  %s6 = inlined_call_operand.vmem [shape: bf16[2,32,32], index: 6, kind: input, shape index: {}]
  %s7 = inlined_call_operand.vmem [shape: f32[2,1,32], index: 7, kind: input, shape index: {}]
  %s8 = inlined_call_operand.vmem [shape: f32[2,1,32], index: 8, kind: input, shape index: {}]
  %s9 = inlined_call_operand.vmem [shape: f32[2,1,32], index: 9, kind: input, shape index: {}]
  %s10 = inlined_call_operand.vmem [shape: bf16[2,32,64], index: 10, kind: input, shape index: {}]
  %s11 = inlined_call_operand.vmem [shape: f32[2,1,64], index: 11, kind: input, shape index: {}]
  %s12 = inlined_call_operand.vmem [shape: bf16[2,64,32], index: 12, kind: input, shape index: {}]
  %s13 = inlined_call_operand.vmem [shape: f32[2,1,32], index: 13, kind: input, shape index: {}]
  %s14 = inlined_call_operand.vmem [shape: f32[2,1,32], index: 14, kind: input, shape index: {}]
  %s15 = inlined_call_operand.vmem [shape: f32[2,1,32], index: 15, kind: input, shape index: {}]
  %s16 = inlined_call_operand.vmem [shape: f32[16,32], index: 16, kind: output, shape index: {}]
  %s17 = sld [smem:[#allocation0]]
  $region105: #{model_forward.2} parent=0
    _
  %s19 = ssub.s32 1, %s17
  %s20 = scalar_select 0, %s19, %s17
  loop: start=0, step=1, limit=4
  $region2: #{model_forward.2} parent=0 // loop_pre_header
    _
  $region3: #{model_forward.2} parent=0 // loop_header
    %s22 = sphi 0, %s26
    %p23 = scmp.ge.s32.totalorder %s22, 4
    %s30 = sphi 0, %s30
    %s32 = sphi 0, %s30
    %s33 = sphi 0, %s32
    %s47 = sphi 0, %s33
    %s51 = sphi 0, %s51
    %s53 = sphi 0, %s51
    %s54 = sphi 0, %s53
    %s68 = sphi 0, %s54
    %s72 = sphi 0, %s72
    %s74 = sphi 0, %s72
    %s75 = sphi 0, %s74
    %s89 = sphi 0, %s75
    %s93 = sphi 0, %s93
    %s95 = sphi 0, %s93
    %s96 = sphi 0, %s95
    %s110 = sphi 0, %s96
    %s116 = sphi 0, %s118
    %s119 = sphi 0, %s116
    %s120 = sphi 0, %s119
    %s136 = sphi 0, %s120
    %s142 = sphi 0, %s144
    %s145 = sphi 0, %s142
    %s146 = sphi 0, %s145
    %s162 = sphi 0, %s146
    %s168 = sphi 0, %s170
    %s171 = sphi 0, %s168
    %s172 = sphi 0, %s171
    %s188 = sphi 0, %s172
    %s194 = sphi 0, %s196
    %s197 = sphi 0, %s194
    %s198 = sphi 0, %s197
    %s214 = sphi 0, %s198
    %s220 = sphi 0, %s222
    %s223 = sphi 0, %s220
    %s224 = sphi 0, %s223
    %s240 = sphi 0, %s224
    %s246 = sphi 0, %s248
    %s249 = sphi 0, %s246
    %s250 = sphi 0, %s249
    %s266 = sphi 0, %s250
    %s272 = sphi 0, %s274
    %s275 = sphi 0, %s272
    %s276 = sphi 0, %s275
    %s292 = sphi 0, %s276
    %s298 = sphi 0, %s300
    %s301 = sphi 0, %s298
    %s302 = sphi 0, %s301
    %s318 = sphi 0, %s302
    %s324 = sphi 0, %s326
    %s327 = sphi 0, %s324
    %s328 = sphi 0, %s327
    %s344 = sphi 0, %s328
    %s350 = sphi 0, %s352
    %s353 = sphi 0, %s350
    %s354 = sphi 0, %s353
    %s370 = sphi 0, %s354
    %s376 = sphi 0, %s378
    %s379 = sphi 0, %s376
    %s380 = sphi 0, %s379
    %s396 = sphi 0, %s380
    %s402 = sphi 0, %s404
    %s405 = sphi 0, %s402
    %s406 = sphi 0, %s405
    %s422 = sphi 0, %s406
    %s426 = sphi 0, %s426
    %s428 = sphi 0, %s426
    %s429 = sphi 0, %s428
    %s443 = sphi 0, %s429
  $region4: #{model_forward.2} parent=0 // loop_header_branch
    %25 = sbr.rel (%p23) target = $region8
  $region5: #{model_forward.2} parent=0 // loop_body
    %s27 = ssub.s32 %s22, 1
    %s28 = ssub.s32 %s22, 2
    %s29 = sadd.s32 %s22, 1
    %s31 = sadd.s32 %s30, 1
    %p34 = scmp.eq.s32.totalorder %s22, 1
    %p35 = scmp.ne.s32.totalorder %s30, %s32
    %p36 = scmp.eq.s32.totalorder %s22, 0
    %p37 = por %p35, %p36
    %p38 = scmp.ne.s32.totalorder %s30, %s32
    %p39 = scmp.eq.s32.totalorder %s27, 1
    %p40 = por %p38, %p39
    %p41 = scmp.ne.s32.totalorder %s32, %s33
    %p42 = scmp.eq.s32.totalorder %s27, 0
    %p43 = por %p41, %p42
    %p44 = scmp.ne.s32.totalorder %s32, %s33
    %p45 = scmp.eq.s32.totalorder %s28, 1
    %p46 = por %p44, %p45
    %p48 = scmp.ne.s32.totalorder %s33, %s47
    %p49 = scmp.eq.s32.totalorder %s28, 0
    %p50 = por %p48, %p49
    %s52 = sadd.s32 %s51, 1
    %p55 = scmp.eq.s32.totalorder %s22, 1
    %p56 = scmp.ne.s32.totalorder %s51, %s53
    %p57 = scmp.eq.s32.totalorder %s22, 0
    %p58 = por %p56, %p57
    %p59 = scmp.ne.s32.totalorder %s51, %s53
    %p60 = scmp.eq.s32.totalorder %s27, 1
    %p61 = por %p59, %p60
    %p62 = scmp.ne.s32.totalorder %s53, %s54
    %p63 = scmp.eq.s32.totalorder %s27, 0
    %p64 = por %p62, %p63
    %p65 = scmp.ne.s32.totalorder %s53, %s54
    %p66 = scmp.eq.s32.totalorder %s28, 1
    %p67 = por %p65, %p66
    %p69 = scmp.ne.s32.totalorder %s54, %s68
    %p70 = scmp.eq.s32.totalorder %s28, 0
    %p71 = por %p69, %p70
    %s73 = sadd.s32 %s72, 1
    %p76 = scmp.eq.s32.totalorder %s22, 1
    %p77 = scmp.ne.s32.totalorder %s72, %s74
    %p78 = scmp.eq.s32.totalorder %s22, 0
    %p79 = por %p77, %p78
    %p80 = scmp.ne.s32.totalorder %s72, %s74
    %p81 = scmp.eq.s32.totalorder %s27, 1
    %p82 = por %p80, %p81
    %p83 = scmp.ne.s32.totalorder %s74, %s75
    %p84 = scmp.eq.s32.totalorder %s27, 0
    %p85 = por %p83, %p84
    %p86 = scmp.ne.s32.totalorder %s74, %s75
    %p87 = scmp.eq.s32.totalorder %s28, 1
    %p88 = por %p86, %p87
    %p90 = scmp.ne.s32.totalorder %s75, %s89
    %p91 = scmp.eq.s32.totalorder %s28, 0
    %p92 = por %p90, %p91
    %s94 = sadd.s32 %s93, 1
    %p97 = scmp.eq.s32.totalorder %s22, 1
    %p98 = scmp.ne.s32.totalorder %s93, %s95
    %p99 = scmp.eq.s32.totalorder %s22, 0
    %p100 = por %p98, %p99
    %p101 = scmp.ne.s32.totalorder %s93, %s95
    %p102 = scmp.eq.s32.totalorder %s27, 1
    %p103 = por %p101, %p102
    %p104 = scmp.ne.s32.totalorder %s95, %s96
    %p105 = scmp.eq.s32.totalorder %s27, 0
    %p106 = por %p104, %p105
    %p107 = scmp.ne.s32.totalorder %s95, %s96
    %p108 = scmp.eq.s32.totalorder %s28, 1
    %p109 = por %p107, %p108
    %p111 = scmp.ne.s32.totalorder %s96, %s110
    %p112 = scmp.eq.s32.totalorder %s28, 0
    %p113 = por %p111, %p112
    %s114 = ssub.s32 %s22, %s29
    %p115 = scmp.eq.s32.totalorder %s114, 0
    %s117 = sadd.s32 %s116, 1
    %s118 = scalar_select %p115, %s116, %s117
    %p121 = pneg %p115
    %p122 = scmp.eq.s32.totalorder %s22, 1
    %p123 = por %p121, %p122
    %p124 = scmp.ne.s32.totalorder %s116, %s119
    %p125 = scmp.eq.s32.totalorder %s22, 0
    %p126 = por %p124, %p125
    %p127 = scmp.ne.s32.totalorder %s116, %s119
    %p128 = scmp.eq.s32.totalorder %s27, 1
    %p129 = por %p127, %p128
    %p130 = scmp.ne.s32.totalorder %s119, %s120
    %p131 = scmp.eq.s32.totalorder %s27, 0
    %p132 = por %p130, %p131
    %p133 = scmp.ne.s32.totalorder %s119, %s120
    %p134 = scmp.eq.s32.totalorder %s28, 1
    %p135 = por %p133, %p134
    %p137 = scmp.ne.s32.totalorder %s120, %s136
    %p138 = scmp.eq.s32.totalorder %s28, 0
    %p139 = por %p137, %p138
    %s140 = ssub.s32 %s22, %s29
    %p141 = scmp.eq.s32.totalorder %s140, 0
    %s143 = sadd.s32 %s142, 1
    %s144 = scalar_select %p141, %s142, %s143
    %p147 = pneg %p141
    %p148 = scmp.eq.s32.totalorder %s22, 1
    %p149 = por %p147, %p148
    %p150 = scmp.ne.s32.totalorder %s142, %s145
    %p151 = scmp.eq.s32.totalorder %s22, 0
    %p152 = por %p150, %p151
    %p153 = scmp.ne.s32.totalorder %s142, %s145
    %p154 = scmp.eq.s32.totalorder %s27, 1
    %p155 = por %p153, %p154
    %p156 = scmp.ne.s32.totalorder %s145, %s146
    %p157 = scmp.eq.s32.totalorder %s27, 0
    %p158 = por %p156, %p157
    %p159 = scmp.ne.s32.totalorder %s145, %s146
    %p160 = scmp.eq.s32.totalorder %s28, 1
    %p161 = por %p159, %p160
    %p163 = scmp.ne.s32.totalorder %s146, %s162
    %p164 = scmp.eq.s32.totalorder %s28, 0
    %p165 = por %p163, %p164
    %s166 = ssub.s32 %s22, %s29
    %p167 = scmp.eq.s32.totalorder %s166, 0
    %s169 = sadd.s32 %s168, 1
    %s170 = scalar_select %p167, %s168, %s169
    %p173 = pneg %p167
    %p174 = scmp.eq.s32.totalorder %s22, 1
    %p175 = por %p173, %p174
    %p176 = scmp.ne.s32.totalorder %s168, %s171
    %p177 = scmp.eq.s32.totalorder %s22, 0
    %p178 = por %p176, %p177
    %p179 = scmp.ne.s32.totalorder %s168, %s171
    %p180 = scmp.eq.s32.totalorder %s27, 1
    %p181 = por %p179, %p180
    %p182 = scmp.ne.s32.totalorder %s171, %s172
    %p183 = scmp.eq.s32.totalorder %s27, 0
    %p184 = por %p182, %p183
    %p185 = scmp.ne.s32.totalorder %s171, %s172
    %p186 = scmp.eq.s32.totalorder %s28, 1
    %p187 = por %p185, %p186
    %p189 = scmp.ne.s32.totalorder %s172, %s188
    %p190 = scmp.eq.s32.totalorder %s28, 0
    %p191 = por %p189, %p190
    %s192 = ssub.s32 %s22, %s29
    %p193 = scmp.eq.s32.totalorder %s192, 0
    %s195 = sadd.s32 %s194, 1
    %s196 = scalar_select %p193, %s194, %s195
    %p199 = pneg %p193
    %p200 = scmp.eq.s32.totalorder %s22, 1
    %p201 = por %p199, %p200
    %p202 = scmp.ne.s32.totalorder %s194, %s197
    %p203 = scmp.eq.s32.totalorder %s22, 0
    %p204 = por %p202, %p203
    %p205 = scmp.ne.s32.totalorder %s194, %s197
    %p206 = scmp.eq.s32.totalorder %s27, 1
    %p207 = por %p205, %p206
    %p208 = scmp.ne.s32.totalorder %s197, %s198
    %p209 = scmp.eq.s32.totalorder %s27, 0
    %p210 = por %p208, %p209
    %p211 = scmp.ne.s32.totalorder %s197, %s198
    %p212 = scmp.eq.s32.totalorder %s28, 1
    %p213 = por %p211, %p212
    %p215 = scmp.ne.s32.totalorder %s198, %s214
    %p216 = scmp.eq.s32.totalorder %s28, 0
    %p217 = por %p215, %p216
    %s218 = ssub.s32 %s22, %s29
    %p219 = scmp.eq.s32.totalorder %s218, 0
    %s221 = sadd.s32 %s220, 1
    %s222 = scalar_select %p219, %s220, %s221
    %p225 = pneg %p219
    %p226 = scmp.eq.s32.totalorder %s22, 1
    %p227 = por %p225, %p226
    %p228 = scmp.ne.s32.totalorder %s220, %s223
    %p229 = scmp.eq.s32.totalorder %s22, 0
    %p230 = por %p228, %p229
    %p231 = scmp.ne.s32.totalorder %s220, %s223
    %p232 = scmp.eq.s32.totalorder %s27, 1
    %p233 = por %p231, %p232
    %p234 = scmp.ne.s32.totalorder %s223, %s224
    %p235 = scmp.eq.s32.totalorder %s27, 0
    %p236 = por %p234, %p235
    %p237 = scmp.ne.s32.totalorder %s223, %s224
    %p238 = scmp.eq.s32.totalorder %s28, 1
    %p239 = por %p237, %p238
    %p241 = scmp.ne.s32.totalorder %s224, %s240
    %p242 = scmp.eq.s32.totalorder %s28, 0
    %p243 = por %p241, %p242
    %s244 = ssub.s32 %s22, %s29
    %p245 = scmp.eq.s32.totalorder %s244, 0
    %s247 = sadd.s32 %s246, 1
    %s248 = scalar_select %p245, %s246, %s247
    %p251 = pneg %p245
    %p252 = scmp.eq.s32.totalorder %s22, 1
    %p253 = por %p251, %p252
    %p254 = scmp.ne.s32.totalorder %s246, %s249
    %p255 = scmp.eq.s32.totalorder %s22, 0
    %p256 = por %p254, %p255
    %p257 = scmp.ne.s32.totalorder %s246, %s249
    %p258 = scmp.eq.s32.totalorder %s27, 1
    %p259 = por %p257, %p258
    %p260 = scmp.ne.s32.totalorder %s249, %s250
    %p261 = scmp.eq.s32.totalorder %s27, 0
    %p262 = por %p260, %p261
    %p263 = scmp.ne.s32.totalorder %s249, %s250
    %p264 = scmp.eq.s32.totalorder %s28, 1
    %p265 = por %p263, %p264
    %p267 = scmp.ne.s32.totalorder %s250, %s266
    %p268 = scmp.eq.s32.totalorder %s28, 0
    %p269 = por %p267, %p268
    %s270 = ssub.s32 %s22, %s29
    %p271 = scmp.eq.s32.totalorder %s270, 0
    %s273 = sadd.s32 %s272, 1
    %s274 = scalar_select %p271, %s272, %s273
    %p277 = pneg %p271
    %p278 = scmp.eq.s32.totalorder %s22, 1
    %p279 = por %p277, %p278
    %p280 = scmp.ne.s32.totalorder %s272, %s275
    %p281 = scmp.eq.s32.totalorder %s22, 0
    %p282 = por %p280, %p281
    %p283 = scmp.ne.s32.totalorder %s272, %s275
    %p284 = scmp.eq.s32.totalorder %s27, 1
    %p285 = por %p283, %p284
    %p286 = scmp.ne.s32.totalorder %s275, %s276
    %p287 = scmp.eq.s32.totalorder %s27, 0
    %p288 = por %p286, %p287
    %p289 = scmp.ne.s32.totalorder %s275, %s276
    %p290 = scmp.eq.s32.totalorder %s28, 1
    %p291 = por %p289, %p290
    %p293 = scmp.ne.s32.totalorder %s276, %s292
    %p294 = scmp.eq.s32.totalorder %s28, 0
    %p295 = por %p293, %p294
    %s296 = ssub.s32 %s22, %s29
    %p297 = scmp.eq.s32.totalorder %s296, 0
    %s299 = sadd.s32 %s298, 1
    %s300 = scalar_select %p297, %s298, %s299
    %p303 = pneg %p297
    %p304 = scmp.eq.s32.totalorder %s22, 1
    %p305 = por %p303, %p304
    %p306 = scmp.ne.s32.totalorder %s298, %s301
    %p307 = scmp.eq.s32.totalorder %s22, 0
    %p308 = por %p306, %p307
    %p309 = scmp.ne.s32.totalorder %s298, %s301
    %p310 = scmp.eq.s32.totalorder %s27, 1
    %p311 = por %p309, %p310
    %p312 = scmp.ne.s32.totalorder %s301, %s302
    %p313 = scmp.eq.s32.totalorder %s27, 0
    %p314 = por %p312, %p313
    %p315 = scmp.ne.s32.totalorder %s301, %s302
    %p316 = scmp.eq.s32.totalorder %s28, 1
    %p317 = por %p315, %p316
    %p319 = scmp.ne.s32.totalorder %s302, %s318
    %p320 = scmp.eq.s32.totalorder %s28, 0
    %p321 = por %p319, %p320
    %s322 = ssub.s32 %s22, %s29
    %p323 = scmp.eq.s32.totalorder %s322, 0
    %s325 = sadd.s32 %s324, 1
    %s326 = scalar_select %p323, %s324, %s325
    %p329 = pneg %p323
    %p330 = scmp.eq.s32.totalorder %s22, 1
    %p331 = por %p329, %p330
    %p332 = scmp.ne.s32.totalorder %s324, %s327
    %p333 = scmp.eq.s32.totalorder %s22, 0
    %p334 = por %p332, %p333
    %p335 = scmp.ne.s32.totalorder %s324, %s327
    %p336 = scmp.eq.s32.totalorder %s27, 1
    %p337 = por %p335, %p336
    %p338 = scmp.ne.s32.totalorder %s327, %s328
    %p339 = scmp.eq.s32.totalorder %s27, 0
    %p340 = por %p338, %p339
    %p341 = scmp.ne.s32.totalorder %s327, %s328
    %p342 = scmp.eq.s32.totalorder %s28, 1
    %p343 = por %p341, %p342
    %p345 = scmp.ne.s32.totalorder %s328, %s344
    %p346 = scmp.eq.s32.totalorder %s28, 0
    %p347 = por %p345, %p346
    %s348 = ssub.s32 %s22, %s29
    %p349 = scmp.eq.s32.totalorder %s348, 0
    %s351 = sadd.s32 %s350, 1
    %s352 = scalar_select %p349, %s350, %s351
    %p355 = pneg %p349
    %p356 = scmp.eq.s32.totalorder %s22, 1
    %p357 = por %p355, %p356
    %p358 = scmp.ne.s32.totalorder %s350, %s353
    %p359 = scmp.eq.s32.totalorder %s22, 0
    %p360 = por %p358, %p359
    %p361 = scmp.ne.s32.totalorder %s350, %s353
    %p362 = scmp.eq.s32.totalorder %s27, 1
    %p363 = por %p361, %p362
    %p364 = scmp.ne.s32.totalorder %s353, %s354
    %p365 = scmp.eq.s32.totalorder %s27, 0
    %p366 = por %p364, %p365
    %p367 = scmp.ne.s32.totalorder %s353, %s354
    %p368 = scmp.eq.s32.totalorder %s28, 1
    %p369 = por %p367, %p368
    %p371 = scmp.ne.s32.totalorder %s354, %s370
    %p372 = scmp.eq.s32.totalorder %s28, 0
    %p373 = por %p371, %p372
    %s374 = ssub.s32 %s22, %s29
    %p375 = scmp.eq.s32.totalorder %s374, 0
    %s377 = sadd.s32 %s376, 1
    %s378 = scalar_select %p375, %s376, %s377
    %p381 = pneg %p375
    %p382 = scmp.eq.s32.totalorder %s22, 1
    %p383 = por %p381, %p382
    %p384 = scmp.ne.s32.totalorder %s376, %s379
    %p385 = scmp.eq.s32.totalorder %s22, 0
    %p386 = por %p384, %p385
    %p387 = scmp.ne.s32.totalorder %s376, %s379
    %p388 = scmp.eq.s32.totalorder %s27, 1
    %p389 = por %p387, %p388
    %p390 = scmp.ne.s32.totalorder %s379, %s380
    %p391 = scmp.eq.s32.totalorder %s27, 0
    %p392 = por %p390, %p391
    %p393 = scmp.ne.s32.totalorder %s379, %s380
    %p394 = scmp.eq.s32.totalorder %s28, 1
    %p395 = por %p393, %p394
    %p397 = scmp.ne.s32.totalorder %s380, %s396
    %p398 = scmp.eq.s32.totalorder %s28, 0
    %p399 = por %p397, %p398
    %s400 = ssub.s32 %s22, %s29
    %p401 = scmp.eq.s32.totalorder %s400, 0
    %s403 = sadd.s32 %s402, 1
    %s404 = scalar_select %p401, %s402, %s403
    %p407 = pneg %p401
    %p408 = scmp.eq.s32.totalorder %s22, 1
    %p409 = por %p407, %p408
    %p410 = scmp.ne.s32.totalorder %s402, %s405
    %p411 = scmp.eq.s32.totalorder %s22, 0
    %p412 = por %p410, %p411
    %p413 = scmp.ne.s32.totalorder %s402, %s405
    %p414 = scmp.eq.s32.totalorder %s27, 1
    %p415 = por %p413, %p414
    %p416 = scmp.ne.s32.totalorder %s405, %s406
    %p417 = scmp.eq.s32.totalorder %s27, 0
    %p418 = por %p416, %p417
    %p419 = scmp.ne.s32.totalorder %s405, %s406
    %p420 = scmp.eq.s32.totalorder %s28, 1
    %p421 = por %p419, %p420
    %p423 = scmp.ne.s32.totalorder %s406, %s422
    %p424 = scmp.eq.s32.totalorder %s28, 0
    %p425 = por %p423, %p424
    %s427 = sadd.s32 %s426, 1
    %p430 = scmp.eq.s32.totalorder %s22, 1
    %p431 = scmp.ne.s32.totalorder %s426, %s428
    %p432 = scmp.eq.s32.totalorder %s22, 0
    %p433 = por %p431, %p432
    %p434 = scmp.ne.s32.totalorder %s426, %s428
    %p435 = scmp.eq.s32.totalorder %s27, 1
    %p436 = por %p434, %p435
    %p437 = scmp.ne.s32.totalorder %s428, %s429
    %p438 = scmp.eq.s32.totalorder %s27, 0
    %p439 = por %p437, %p438
    %p440 = scmp.ne.s32.totalorder %s428, %s429
    %p441 = scmp.eq.s32.totalorder %s28, 1
    %p442 = por %p440, %p441
    %p444 = scmp.ne.s32.totalorder %s429, %s443
    %p445 = scmp.eq.s32.totalorder %s28, 0
    %p446 = por %p444, %p445
    %p447 = scmp.le.s32.totalorder 1, %s22
    %p448 = scmp.lt.s32.totalorder %s22, 3
    %p449 = pnand %p447, %p448
    %p450 = pneg %p449
    // Predicated region
    $region9: #{model_forward.2} parent=5 // pred_check
      _
    $region10: #{model_forward.2} parent=5 // pred_check_branch
      %452 = sbr.rel (%p449) target = $region12
    $region11: #{model_forward.2} parent=5 // pred_region
      %s453 = ssub.s32 %s22, 1
      // Predicated region
      $region13: #{model_forward.2} parent=11 // pred_check
        %p454 = pneg %p43
      $region14: #{model_forward.2} parent=11 // pred_check_branch
        %456 = sbr.rel (%p454) target = $region16
      $region15: #{model_forward.2} parent=11 // pred_region
        _
      $region16: #{model_forward.2} parent=11 // pred_fallthru
        _
      // Predicated region
      $region17: #{model_forward.2} parent=11 // pred_check
        %p457 = pneg %p64
      $region18: #{model_forward.2} parent=11 // pred_check_branch
        %459 = sbr.rel (%p457) target = $region20
      $region19: #{model_forward.2} parent=11 // pred_region
        _
      $region20: #{model_forward.2} parent=11 // pred_fallthru
        _
      // Predicated region
      $region21: #{model_forward.2} parent=11 // pred_check
        %p460 = pneg %p85
      $region22: #{model_forward.2} parent=11 // pred_check_branch
        %462 = sbr.rel (%p460) target = $region24
      $region23: #{model_forward.2} parent=11 // pred_region
        _
      $region24: #{model_forward.2} parent=11 // pred_fallthru
        _
      // Predicated region
      $region25: #{model_forward.2} parent=11 // pred_check
        %p463 = pneg %p106
      $region26: #{model_forward.2} parent=11 // pred_check_branch
        %465 = sbr.rel (%p463) target = $region28
      $region27: #{model_forward.2} parent=11 // pred_region
        _
      $region28: #{model_forward.2} parent=11 // pred_fallthru
        _
    $region12: #{model_forward.2} parent=5 // pred_fallthru
      _
    %p466 = scmp.lt.s32.totalorder %s22, 2
    // Predicated region
    $region29: #{model_forward.2} parent=5 // pred_check
      %p467 = pneg %p466
    $region30: #{model_forward.2} parent=5 // pred_check_branch
      %469 = sbr.rel (%p467) target = $region32
    $region31: #{model_forward.2} parent=5 // pred_region
      // Predicated region
      $region33: #{model_forward.2} parent=31 // pred_check
        %p470 = pneg %p126
      $region34: #{model_forward.2} parent=31 // pred_check_branch
        %472 = sbr.rel (%p470) target = $region36
      $region35: #{model_forward.2} parent=31 // pred_region
        %p473 = scmp.lt.s32.totalorder %s22, 1
        %s474 = scalar_select %p473, %s22, 1
        %s475 = smul.addr %s474, 4
        %s476 = smul.addr %s475, 4
        %s477 = scalar_lea.vmem %s4, %s476
      $region36: #{model_forward.2} parent=31 // pred_fallthru
        _
      // Predicated region
      $region37: #{model_forward.2} parent=31 // pred_check
        %p478 = pneg %p152
      $region38: #{model_forward.2} parent=31 // pred_check_branch
        %480 = sbr.rel (%p478) target = $region40
      $region39: #{model_forward.2} parent=31 // pred_region
        %p481 = scmp.lt.s32.totalorder %s22, 1
        %s482 = scalar_select %p481, %s22, 1
        %s483 = scalar_lea.vmem %s5, %s482
      $region40: #{model_forward.2} parent=31 // pred_fallthru
        _
      // Predicated region
      $region41: #{model_forward.2} parent=31 // pred_check
        %p484 = pneg %p178
      $region42: #{model_forward.2} parent=31 // pred_check_branch
        %486 = sbr.rel (%p484) target = $region44
      $region43: #{model_forward.2} parent=31 // pred_region
        %p487 = scmp.lt.s32.totalorder %s22, 1
        %s488 = scalar_select %p487, %s22, 1
        %s489 = smul.addr %s488, 4
        %s490 = smul.addr %s489, 4
        %s491 = scalar_lea.vmem %s6, %s490
      $region44: #{model_forward.2} parent=31 // pred_fallthru
        _
      // Predicated region
      $region45: #{model_forward.2} parent=31 // pred_check
        %p492 = pneg %p204
      $region46: #{model_forward.2} parent=31 // pred_check_branch
        %494 = sbr.rel (%p492) target = $region48
      $region47: #{model_forward.2} parent=31 // pred_region
        %p495 = scmp.lt.s32.totalorder %s22, 1
        %s496 = scalar_select %p495, %s22, 1
        %s497 = scalar_lea.vmem %s7, %s496
      $region48: #{model_forward.2} parent=31 // pred_fallthru
        _
      // Predicated region
      $region49: #{model_forward.2} parent=31 // pred_check
        %p498 = pneg %p230
      $region50: #{model_forward.2} parent=31 // pred_check_branch
        %500 = sbr.rel (%p498) target = $region52
      $region51: #{model_forward.2} parent=31 // pred_region
        %p501 = scmp.lt.s32.totalorder %s22, 1
        %s502 = scalar_select %p501, %s22, 1
        %s503 = scalar_lea.vmem %s8, %s502
      $region52: #{model_forward.2} parent=31 // pred_fallthru
        _
      // Predicated region
      $region53: #{model_forward.2} parent=31 // pred_check
        %p504 = pneg %p256
      $region54: #{model_forward.2} parent=31 // pred_check_branch
        %506 = sbr.rel (%p504) target = $region56
      $region55: #{model_forward.2} parent=31 // pred_region
        %p507 = scmp.lt.s32.totalorder %s22, 1
        %s508 = scalar_select %p507, %s22, 1
        %s509 = scalar_lea.vmem %s9, %s508
      $region56: #{model_forward.2} parent=31 // pred_fallthru
        _
      // Predicated region
      $region57: #{model_forward.2} parent=31 // pred_check
        %p510 = pneg %p282
      $region58: #{model_forward.2} parent=31 // pred_check_branch
        %512 = sbr.rel (%p510) target = $region60
      $region59: #{model_forward.2} parent=31 // pred_region
        %p513 = scmp.lt.s32.totalorder %s22, 1
        %s514 = scalar_select %p513, %s22, 1
        %s515 = smul.addr %s514, 4
        %s516 = smul.addr %s515, 4
        %s517 = scalar_lea.vmem %s10, %s516
      $region60: #{model_forward.2} parent=31 // pred_fallthru
        _
      // Predicated region
      $region61: #{model_forward.2} parent=31 // pred_check
        %p518 = pneg %p308
      $region62: #{model_forward.2} parent=31 // pred_check_branch
        %520 = sbr.rel (%p518) target = $region64
      $region63: #{model_forward.2} parent=31 // pred_region
        %p521 = scmp.lt.s32.totalorder %s22, 1
        %s522 = scalar_select %p521, %s22, 1
        %s523 = scalar_lea.vmem %s11, %s522
      $region64: #{model_forward.2} parent=31 // pred_fallthru
        _
      // Predicated region
      $region65: #{model_forward.2} parent=31 // pred_check
        %p524 = pneg %p334
      $region66: #{model_forward.2} parent=31 // pred_check_branch
        %526 = sbr.rel (%p524) target = $region68
      $region67: #{model_forward.2} parent=31 // pred_region
        %p527 = scmp.lt.s32.totalorder %s22, 1
        %s528 = scalar_select %p527, %s22, 1
        %s529 = smul.addr %s528, 8
        %s530 = smul.addr %s529, 4
        %s531 = scalar_lea.vmem %s12, %s530
      $region68: #{model_forward.2} parent=31 // pred_fallthru
        _
      // Predicated region
      $region69: #{model_forward.2} parent=31 // pred_check
        %p532 = pneg %p360
      $region70: #{model_forward.2} parent=31 // pred_check_branch
        %534 = sbr.rel (%p532) target = $region72
      $region71: #{model_forward.2} parent=31 // pred_region
        %p535 = scmp.lt.s32.totalorder %s22, 1
        %s536 = scalar_select %p535, %s22, 1
        %s537 = scalar_lea.vmem %s13, %s536
      $region72: #{model_forward.2} parent=31 // pred_fallthru
        _
      // Predicated region
      $region73: #{model_forward.2} parent=31 // pred_check
        %p538 = pneg %p386
      $region74: #{model_forward.2} parent=31 // pred_check_branch
        %540 = sbr.rel (%p538) target = $region76
      $region75: #{model_forward.2} parent=31 // pred_region
        %p541 = scmp.lt.s32.totalorder %s22, 1
        %s542 = scalar_select %p541, %s22, 1
        %s543 = scalar_lea.vmem %s14, %s542
      $region76: #{model_forward.2} parent=31 // pred_fallthru
        _
      // Predicated region
      $region77: #{model_forward.2} parent=31 // pred_check
        %p544 = pneg %p412
      $region78: #{model_forward.2} parent=31 // pred_check_branch
        %546 = sbr.rel (%p544) target = $region80
      $region79: #{model_forward.2} parent=31 // pred_region
        %p547 = scmp.lt.s32.totalorder %s22, 1
        %s548 = scalar_select %p547, %s22, 1
        %s549 = scalar_lea.vmem %s15, %s548
      $region80: #{model_forward.2} parent=31 // pred_fallthru
        _
    $region32: #{model_forward.2} parent=5 // pred_fallthru
      _
    %p550 = scmp.le.s32.totalorder 1, %s22
    %p551 = scmp.lt.s32.totalorder %s22, 3
    %p552 = pnand %p550, %p551
    %p553 = pneg %p552
    // Predicated region
    $region81: #{model_forward.2} parent=5 // pred_check
      _
    $region82: #{model_forward.2} parent=5 // pred_check_branch
      %555 = sbr.rel (%p552) target = $region84
    $region83: #{model_forward.2} parent=5 // pred_region
      %s556 = ssub.s32 %s22, 1
      %p557 = pneg %p43
      %p558 = pneg %p40
      %p559 = pneg %p64
      %p560 = pneg %p61
      %p561 = pneg %p85
      %p562 = pneg %p82
      %p563 = pneg %p106
      %p564 = pneg %p103
      %p565 = scmp.lt.s32.totalorder %s27, 1
      %s566 = scalar_select %p565, %s27, 1
      %s567 = smul.addr %s566, 4
      %s568 = smul.addr %s567, 4
      %s569 = scalar_lea.vmem %s4, %s568
      %p570 = pneg %p132
      %p571 = pneg %p129
      %p572 = scmp.lt.s32.totalorder %s27, 1
      %s573 = scalar_select %p572, %s27, 1
      %s574 = scalar_lea.vmem %s5, %s573
      %p575 = pneg %p158
      %p576 = pneg %p155
      %p577 = scmp.lt.s32.totalorder %s27, 1
      %s578 = scalar_select %p577, %s27, 1
      %s579 = smul.addr %s578, 4
      %s580 = smul.addr %s579, 4
      %s581 = scalar_lea.vmem %s6, %s580
      %p582 = pneg %p184
      %p583 = pneg %p181
      %p584 = scmp.lt.s32.totalorder %s27, 1
      %s585 = scalar_select %p584, %s27, 1
      %s586 = scalar_lea.vmem %s7, %s585
      %p587 = pneg %p210
      %p588 = pneg %p207
      %p589 = scmp.lt.s32.totalorder %s27, 1
      %s590 = scalar_select %p589, %s27, 1
      %s591 = scalar_lea.vmem %s8, %s590
      %p592 = pneg %p236
      %p593 = pneg %p233
      %p594 = scmp.lt.s32.totalorder %s27, 1
      %s595 = scalar_select %p594, %s27, 1
      %s596 = scalar_lea.vmem %s9, %s595
      %p597 = pneg %p262
      %p598 = pneg %p259
      %p599 = scmp.lt.s32.totalorder %s27, 1
      %s600 = scalar_select %p599, %s27, 1
      %s601 = smul.addr %s600, 4
      %s602 = smul.addr %s601, 4
      %s603 = scalar_lea.vmem %s10, %s602
      %p604 = pneg %p288
      %p605 = pneg %p285
      %p606 = scmp.lt.s32.totalorder %s27, 1
      %s607 = scalar_select %p606, %s27, 1
      %s608 = scalar_lea.vmem %s11, %s607
      %p609 = pneg %p314
      %p610 = pneg %p311
      %p611 = scmp.lt.s32.totalorder %s27, 1
      %s612 = scalar_select %p611, %s27, 1
      %s613 = smul.addr %s612, 8
      %s614 = smul.addr %s613, 4
      %s615 = scalar_lea.vmem %s12, %s614
      %p616 = pneg %p340
      %p617 = pneg %p337
      %p618 = scmp.lt.s32.totalorder %s27, 1
      %s619 = scalar_select %p618, %s27, 1
      %s620 = scalar_lea.vmem %s13, %s619
      %p621 = pneg %p366
      %p622 = pneg %p363
      %p623 = scmp.lt.s32.totalorder %s27, 1
      %s624 = scalar_select %p623, %s27, 1
      %s625 = scalar_lea.vmem %s14, %s624
      %p626 = pneg %p392
      %p627 = pneg %p389
      %p628 = scmp.lt.s32.totalorder %s27, 1
      %s629 = scalar_select %p628, %s27, 1
      %s630 = scalar_lea.vmem %s15, %s629
      %p631 = pneg %p418
      %p632 = pneg %p415
      %p633 = pneg %p439
      %p634 = pneg %p436
      %p635 = scmp.lt.s32.totalorder %s27, 1
      %s636 = scalar_select %p635, %s27, 1
      %s637 = smul.addr %s636, 4
      %s638 = smul.addr %s637, 4
      %s639 = scalar_lea.vmem %s4, %s638
      %p640 = scmp.lt.s32.totalorder %s27, 1
      %s641 = scalar_select %p640, %s27, 1
      %s642 = scalar_lea.vmem %s5, %s641
      %p643 = scmp.lt.s32.totalorder %s27, 1
      %s644 = scalar_select %p643, %s27, 1
      %s645 = smul.addr %s644, 4
      %s646 = smul.addr %s645, 4
      %s647 = scalar_lea.vmem %s6, %s646
      %p648 = scmp.lt.s32.totalorder %s27, 1
      %s649 = scalar_select %p648, %s27, 1
      %s650 = scalar_lea.vmem %s7, %s649
      %p651 = scmp.lt.s32.totalorder %s27, 1
      %s652 = scalar_select %p651, %s27, 1
      %s653 = scalar_lea.vmem %s8, %s652
      %p654 = scmp.lt.s32.totalorder %s27, 1
      %s655 = scalar_select %p654, %s27, 1
      %s656 = scalar_lea.vmem %s9, %s655
      %p657 = scmp.lt.s32.totalorder %s27, 1
      %s658 = scalar_select %p657, %s27, 1
      %s659 = smul.addr %s658, 4
      %s660 = smul.addr %s659, 4
      %s661 = scalar_lea.vmem %s10, %s660
      %p662 = scmp.lt.s32.totalorder %s27, 1
      %s663 = scalar_select %p662, %s27, 1
      %s664 = scalar_lea.vmem %s11, %s663
      %p665 = scmp.lt.s32.totalorder %s27, 1
      %s666 = scalar_select %p665, %s27, 1
      %s667 = smul.addr %s666, 8
      %s668 = smul.addr %s667, 4
      %s669 = scalar_lea.vmem %s12, %s668
      %p670 = scmp.lt.s32.totalorder %s27, 1
      %s671 = scalar_select %p670, %s27, 1
      %s672 = scalar_lea.vmem %s13, %s671
      %p673 = scmp.lt.s32.totalorder %s27, 1
      %s674 = scalar_select %p673, %s27, 1
      %s675 = scalar_lea.vmem %s14, %s674
      %p676 = scmp.lt.s32.totalorder %s27, 1
      %s677 = scalar_select %p676, %s27, 1
      %s678 = scalar_lea.vmem %s15, %s677
      %p680 = scmp.eq.s32.totalorder %s27, 0
      // Predicated region
      $region85: #{model_forward.2} parent=83 // pred_check
        %p681 = pneg %p680
      $region86: #{model_forward.2} parent=83 // pred_check_branch
        %683 = sbr.rel (%p681) target = $region88
      $region87: #{model_forward.2} parent=83 // pred_region
        %v684 = vld [vmem:[%s0] sm:$0xff]
        %v685 = vld [vmem:[%s0 + $0x8] sm:$0xff]
        %v686 = vld [vmem:[%s2] sm:$0x1]
        %v687 = vld [vmem:[%s3] sm:$0x1]
        %vm688 = vcmask 261120
        %v689 = vsel %vm688, %v684, 0.0
        %690 = vadd.xlane.f32.xlu0 %v689
        %v691 = vpop.xlane.xlu0 %690
        %v692 = vsel %vm688, %v685, 0.0
        %693 = vadd.xlane.f32.xlu0 %v692
        %v694 = vpop.xlane.xlu0 %693
        %v695 = vrcp.pop 32.0
        %v696 = vmul.f32 %v691, %v695
        %v697 = vmul.f32 %v694, %v695
        %v698 = vsub.f32 %v684, %v696
        %v699 = vsub.f32 %v685, %v697
        %v700 = vmul.f32 %v698, %v698
        %v701 = vmul.f32 %v699, %v699
        %v702 = vsel %vm688, %v700, 0.0
        %703 = vadd.xlane.f32.xlu0 %v702
        %v704 = vpop.xlane.xlu0 %703
        %v705 = vsel %vm688, %v701, 0.0
        %706 = vadd.xlane.f32.xlu0 %v705
        %v707 = vpop.xlane.xlu0 %706
        %v708 = vmul.f32 %v704, %v695
        %v709 = vmul.f32 %v707, %v695
        %v710 = vadd.f32 %v708, 1e-12
        %v711 = vadd.f32 %v709, 1e-12
        %v712 = vrsqrt.pop %v710
        %v713 = vrsqrt.pop %v711
        %v714 = vmul.f32 %v698, %v712
        %v715 = vmul.f32 %v699, %v713
        %v717 = vlaneseq
        %v718 = vshrl.u32 %v717, 7
        %v719 = vsub.s32 0, %v718
        %v720 = vrot.slane %v686, %v719
        %v722 = vmul.f32 %v714, %v720
        %v723 = vmul.f32 %v715, %v720
        %v725 = vlaneseq
        %v726 = vshrl.u32 %v725, 7
        %v727 = vsub.s32 0, %v726
        %v728 = vrot.slane %v687, %v727
        %v730 = vadd.f32 %v722, %v728
        %v731 = vadd.f32 %v723, %v728
        %732 = vst.msk [vmem:[#allocation2] sm:$0xff] %vm688, %v730
        %733 = vst.msk [vmem:[#allocation2 + $0x8] sm:$0xff] %vm688, %v731
      $region88: #{model_forward.2} parent=83 // pred_fallthru
        _
      %v734 = vld [vmem:[#allocation2] sm:$0xff]
      %v735 = vld [vmem:[#allocation2 + $0x8] sm:$0xff]
      %v736 = vpack.c.bf16 %v735, %v734
      %v737 = vld [vmem:[%s639] sm:$0xf]
      %v738 = vld [vmem:[%s639 + $0x4] sm:$0xf]
      %v739 = vld [vmem:[%s639 + $0x8] sm:$0xf]
      %v740 = vld [vmem:[%s639 + $0xc] sm:$0xf]
      %v741 = vld [vmem:[%s642] sm:$0x1]
      %v743 = vlaneseq
      %v744 = vshrl.u32 %v743, 7
      %v745 = vsub.s32 0, %v744
      %v746 = vrot.slane %v741, %v745
      %v752 = vunpack.c.l.b16 %v737
      %v753 = vunpack.c.l.b16 %v738
      %v754 = vunpack.c.l.b16 %v739
      %v755 = vunpack.c.l.b16 %v740
      %v756 = vpack.c.b16 %v753, %v752
      %v757 = vpack.c.b16 %v755, %v754
      %vm760 = vcmask 261120
      %v762 = vsel %vm760, %v736, 0
      %764 = vmatprep.subr.bf16.mxu0 0
      %765 = vmatpush1.bf16.msra.mxu0 %v756
      %766 = vmatprep.subr.bf16.mxu0 0
      %767 = vmatpush1.bf16.msra.mxu0 %v757
      %768 = vmatprep.subr.bf16.mxu0 0
      %769 = vmatpush1.bf16.msra.mxu0 0
      %770 = vmatprep.subr.bf16.mxu0 0
      %771 = vmatpush1.bf16.msra.mxu0 0
      %772 = vmatprep.subr.bf16.mxu0 0
      %773 = vmatpush1.bf16.msra.mxu0 0
      %774 = vmatprep.subr.bf16.mxu0 0
      %775 = vmatpush1.bf16.msra.mxu0 0
      %776 = vmatprep.subr.bf16.mxu0 0
      %777 = vmatpush1.bf16.msra.mxu0 0
      %778 = vmatprep.subr.bf16.mxu0 0
      %779 = vmatpush1.bf16.msra.mxu0 0
      %780 = vmatprep.subr.bf16.mxu0 0
      %781 = vmatpush1.bf16.msra.mxu0 0
      %782 = vmatprep.subr.bf16.mxu0 0
      %783 = vmatpush1.bf16.msra.mxu0 0
      %784 = vmatprep.subr.bf16.mxu0 0
      %785 = vmatpush1.bf16.msra.mxu0 0
      %786 = vmatprep.subr.bf16.mxu0 0
      %787 = vmatpush1.bf16.msra.mxu0 0
      %788 = vmatprep.subr.bf16.mxu0 0
      %789 = vmatpush1.bf16.msra.mxu0 0
      %790 = vmatprep.subr.bf16.mxu0 0
      %791 = vmatpush1.bf16.msra.mxu0 0
      %792 = vmatprep.subr.bf16.mxu0 0
      %793 = vmatpush1.bf16.msra.mxu0 0
      %794 = vmatprep.subr.bf16.mxu0 0
      %795 = vmatpush1.bf16.msra.mxu0 0
      %796 = vmatprep.mubr.bf16.mxu0 0
      %797 = vmatmul.mubr.bf16.gmra.mrb[0].mxu0 %v762
      %v798 = vpop.f32.mrb[0].mxu0
      %v799 = vadd.f32 %v746, %v798
      %v800 = vpop.f32.mrb[0].mxu0
      %v801 = vpop.f32.mrb[0].mxu0
      %v802 = vadd.f32 %v746, %v801
      %v803 = vpop.f32.mrb[0].mxu0
      %804 = vdwg.mxu0
      %v805 = vld [vmem:[%s1] sm:$0x1]
      %v806 = vld [vmem:[%s1 + $0x1] sm:$0x1]
      %v807 = vpack.c.bf16 %v799, %v799
      %v808 = vpack.c.bf16 %v802, %v802
      %810 = vrot.lane.b32.xlu0 %v807, 96
      %v811 = vpop.permute.xlu0 %810
      %vm812 = vcmask 64512
      %v814 = vsel %vm812, %v807, 0
      %v817 = vsel %vm812, %v811, 0
      %819 = vmatprep.subr.bf16.mxu0 0
      %820 = vmatpush1.bf16.xpose.msra.mxu0 %v817
      %821 = vmatprep.subr.bf16.mxu0 0
      %822 = vmatpush1.bf16.xpose.msra.mxu0 0
      %823 = vmatprep.subr.bf16.mxu0 0
      %824 = vmatpush1.bf16.xpose.msra.mxu0 0
      %825 = vmatprep.subr.bf16.mxu0 0
      %826 = vmatpush1.bf16.xpose.msra.mxu0 0
      %827 = vmatprep.subr.bf16.mxu0 0
      %828 = vmatpush1.bf16.xpose.msra.mxu0 0
      %829 = vmatprep.subr.bf16.mxu0 0
      %830 = vmatpush1.bf16.xpose.msra.mxu0 0
      %831 = vmatprep.subr.bf16.mxu0 0
      %832 = vmatpush1.bf16.xpose.msra.mxu0 0
      %833 = vmatprep.subr.bf16.mxu0 0
      %834 = vmatpush1.bf16.xpose.msra.mxu0 0
      %835 = vmatprep.subr.bf16.mxu0 0
      %836 = vmatpush1.bf16.xpose.msra.mxu0 0
      %837 = vmatprep.subr.bf16.mxu0 0
      %838 = vmatpush1.bf16.xpose.msra.mxu0 0
      %839 = vmatprep.subr.bf16.mxu0 0
      %840 = vmatpush1.bf16.xpose.msra.mxu0 0
      %841 = vmatprep.subr.bf16.mxu0 0
      %842 = vmatpush1.bf16.xpose.msra.mxu0 0
      %843 = vmatprep.subr.bf16.mxu0 0
      %844 = vmatpush1.bf16.xpose.msra.mxu0 0
      %845 = vmatprep.subr.bf16.mxu0 0
      %846 = vmatpush1.bf16.xpose.msra.mxu0 0
      %847 = vmatprep.subr.bf16.mxu0 0
      %848 = vmatpush1.bf16.xpose.msra.mxu0 0
      %849 = vmatprep.subr.bf16.mxu0 0
      %850 = vmatpush1.bf16.xpose.msra.mxu0 0
      %851 = vmatprep.mubr.bf16.mxu0 0
      %852 = vmatmul.mubr.bf16.gmra.mrb[0].mxu0 %v814
      %v853 = vpop.f32.mrb[0].mxu0
      %v854 = vadd.f32 0.0, %v853
      %v855 = vpop.f32.mrb[0].mxu0
      %v856 = vpop.f32.mrb[0].mxu0
      %v857 = vpop.f32.mrb[0].mxu0
      %858 = vdwg.mxu0
      %860 = vrot.lane.b32.xlu0 %v808, 96
      %v861 = vpop.permute.xlu0 %860
      %v863 = vsel %vm812, %v808, 0
      %v866 = vsel %vm812, %v861, 0
      %868 = vmatprep.subr.bf16.mxu0 0
      %869 = vmatpush1.bf16.xpose.msra.mxu0 %v866
      %870 = vmatprep.subr.bf16.mxu0 0
      %871 = vmatpush1.bf16.xpose.msra.mxu0 0
      %872 = vmatprep.subr.bf16.mxu0 0
      %873 = vmatpush1.bf16.xpose.msra.mxu0 0
      %874 = vmatprep.subr.bf16.mxu0 0
      %875 = vmatpush1.bf16.xpose.msra.mxu0 0
      %876 = vmatprep.subr.bf16.mxu0 0
      %877 = vmatpush1.bf16.xpose.msra.mxu0 0
      %878 = vmatprep.subr.bf16.mxu0 0
      %879 = vmatpush1.bf16.xpose.msra.mxu0 0
      %880 = vmatprep.subr.bf16.mxu0 0
      %881 = vmatpush1.bf16.xpose.msra.mxu0 0
      %882 = vmatprep.subr.bf16.mxu0 0
      %883 = vmatpush1.bf16.xpose.msra.mxu0 0
      %884 = vmatprep.subr.bf16.mxu0 0
      %885 = vmatpush1.bf16.xpose.msra.mxu0 0
      %886 = vmatprep.subr.bf16.mxu0 0
      %887 = vmatpush1.bf16.xpose.msra.mxu0 0
      %888 = vmatprep.subr.bf16.mxu0 0
      %889 = vmatpush1.bf16.xpose.msra.mxu0 0
      %890 = vmatprep.subr.bf16.mxu0 0
      %891 = vmatpush1.bf16.xpose.msra.mxu0 0
      %892 = vmatprep.subr.bf16.mxu0 0
      %893 = vmatpush1.bf16.xpose.msra.mxu0 0
      %894 = vmatprep.subr.bf16.mxu0 0
      %895 = vmatpush1.bf16.xpose.msra.mxu0 0
      %896 = vmatprep.subr.bf16.mxu0 0
      %897 = vmatpush1.bf16.xpose.msra.mxu0 0
      %898 = vmatprep.subr.bf16.mxu0 0
      %899 = vmatpush1.bf16.xpose.msra.mxu0 0
      %900 = vmatprep.mubr.bf16.mxu0 0
      %901 = vmatmul.mubr.bf16.gmra.mrb[0].mxu0 %v863
      %v902 = vpop.f32.mrb[0].mxu0
      %v903 = vadd.f32 0.0, %v902
      %v904 = vpop.f32.mrb[0].mxu0
      %v905 = vpop.f32.mrb[0].mxu0
      %v906 = vpop.f32.mrb[0].mxu0
      %907 = vdwg.mxu0
      %v908 = vmul.f32 %v854, 0.35355338
      %v909 = vmul.f32 %v903, 0.35355338
      %v912 = vlaneseq
      %v913 = vshrl.u32 %v912, 7
      %v914 = vsub.s32 0, %v913
      %v915 = vrot.slane %v805, %v914
      %v916 = vlaneseq
      %v917 = vshrl.u32 %v916, 7
      %v918 = vsub.s32 0, %v917
      %v919 = vrot.slane %v806, %v918
      %v922 = vadd.f32 %v908, %v915
      %v923 = vadd.f32 %v909, %v919
      %v924 = vsel %vm812, %v922, -inf
      %925 = vmax.xlane.f32.xlu0 %v924
      %v926 = vpop.xlane.xlu0 %925
      %v927 = vsel %vm812, %v923, -inf
      %928 = vmax.xlane.f32.xlu0 %v927
      %v929 = vpop.xlane.xlu0 %928
      %v930 = vsub.f32 %v922, %v926
      %v931 = vsub.f32 %v923, %v929
      %v932 = vmul.f32 %v930, 1.442695
      %v933 = vpow.pop %v932
      %v934 = vmul.f32 %v931, 1.442695
      %v935 = vpow.pop %v934
      %v936 = vsel %vm812, %v933, 0.0
      %937 = vadd.xlane.f32.xlu0 %v936
      %v938 = vpop.xlane.xlu0 %937
      %v939 = vsel %vm812, %v935, 0.0
      %940 = vadd.xlane.f32.xlu0 %v939
      %v941 = vpop.xlane.xlu0 %940
      %v942 = vrcp.pop %v938
      %v943 = vrcp.pop %v941
      %v944 = vmul.f32 %v933, %v942
      %v945 = vmul.f32 %v935, %v943
      %v946 = vpack.c.bf16 %v944, %v944
      %v947 = vpack.c.bf16 %v945, %v945
      %948 = vrot.lane.b32.xlu0 %v807, 64
      %v949 = vpop.permute.xlu0 %948
      %v951 = vsel %vm812, %v946, 0
      %vm953 = vcmask 1043456
      %v955 = vsel %vm953, %v949, 0
      %957 = vmatprep.subr.bf16.mxu0 0
      %958 = vmatpush1.bf16.msra.mxu0 %v955
      %959 = vmatprep.subr.bf16.mxu0 0
      %960 = vmatpush1.bf16.msra.mxu0 0
      %961 = vmatprep.subr.bf16.mxu0 0
      %962 = vmatpush1.bf16.msra.mxu0 0
      %963 = vmatprep.subr.bf16.mxu0 0
      %964 = vmatpush1.bf16.msra.mxu0 0
      %965 = vmatprep.subr.bf16.mxu0 0
      %966 = vmatpush1.bf16.msra.mxu0 0
      %967 = vmatprep.subr.bf16.mxu0 0
      %968 = vmatpush1.bf16.msra.mxu0 0
      %969 = vmatprep.subr.bf16.mxu0 0
      %970 = vmatpush1.bf16.msra.mxu0 0
      %971 = vmatprep.subr.bf16.mxu0 0
      %972 = vmatpush1.bf16.msra.mxu0 0
      %973 = vmatprep.subr.bf16.mxu0 0
      %974 = vmatpush1.bf16.msra.mxu0 0
      %975 = vmatprep.subr.bf16.mxu0 0
      %976 = vmatpush1.bf16.msra.mxu0 0
      %977 = vmatprep.subr.bf16.mxu0 0
      %978 = vmatpush1.bf16.msra.mxu0 0
      %979 = vmatprep.subr.bf16.mxu0 0
      %980 = vmatpush1.bf16.msra.mxu0 0
      %981 = vmatprep.subr.bf16.mxu0 0
      %982 = vmatpush1.bf16.msra.mxu0 0
      %983 = vmatprep.subr.bf16.mxu0 0
      %984 = vmatpush1.bf16.msra.mxu0 0
      %985 = vmatprep.subr.bf16.mxu0 0
      %986 = vmatpush1.bf16.msra.mxu0 0
      %987 = vmatprep.subr.bf16.mxu0 0
      %988 = vmatpush1.bf16.msra.mxu0 0
      %989 = vmatprep.mubr.bf16.mxu0 0
      %990 = vmatmul.mubr.bf16.gmra.mrb[0].mxu0 %v951
      %v991 = vpop.f32.mrb[0].mxu0
      %v992 = vadd.f32 0.0, %v991
      %v993 = vpop.f32.mrb[0].mxu0
      %v994 = vpop.f32.mrb[0].mxu0
      %v995 = vpop.f32.mrb[0].mxu0
      %996 = vdwg.mxu0
      %997 = vrot.lane.b32.xlu0 %v808, 64
      %v998 = vpop.permute.xlu0 %997
      %v1000 = vsel %vm812, %v947, 0
      %v1003 = vsel %vm953, %v998, 0
      %1005 = vmatprep.subr.bf16.mxu0 0
      %1006 = vmatpush1.bf16.msra.mxu0 %v1003
      %1007 = vmatprep.subr.bf16.mxu0 0
      %1008 = vmatpush1.bf16.msra.mxu0 0
      %1009 = vmatprep.subr.bf16.mxu0 0
      %1010 = vmatpush1.bf16.msra.mxu0 0
      %1011 = vmatprep.subr.bf16.mxu0 0
      %1012 = vmatpush1.bf16.msra.mxu0 0
      %1013 = vmatprep.subr.bf16.mxu0 0
      %1014 = vmatpush1.bf16.msra.mxu0 0
      %1015 = vmatprep.subr.bf16.mxu0 0
      %1016 = vmatpush1.bf16.msra.mxu0 0
      %1017 = vmatprep.subr.bf16.mxu0 0
      %1018 = vmatpush1.bf16.msra.mxu0 0
      %1019 = vmatprep.subr.bf16.mxu0 0
      %1020 = vmatpush1.bf16.msra.mxu0 0
      %1021 = vmatprep.subr.bf16.mxu0 0
      %1022 = vmatpush1.bf16.msra.mxu0 0
      %1023 = vmatprep.subr.bf16.mxu0 0
      %1024 = vmatpush1.bf16.msra.mxu0 0
      %1025 = vmatprep.subr.bf16.mxu0 0
      %1026 = vmatpush1.bf16.msra.mxu0 0
      %1027 = vmatprep.subr.bf16.mxu0 0
      %1028 = vmatpush1.bf16.msra.mxu0 0
      %1029 = vmatprep.subr.bf16.mxu0 0
      %1030 = vmatpush1.bf16.msra.mxu0 0
      %1031 = vmatprep.subr.bf16.mxu0 0
      %1032 = vmatpush1.bf16.msra.mxu0 0
      %1033 = vmatprep.subr.bf16.mxu0 0
      %1034 = vmatpush1.bf16.msra.mxu0 0
      %1035 = vmatprep.subr.bf16.mxu0 0
      %1036 = vmatpush1.bf16.msra.mxu0 0
      %1037 = vmatprep.mubr.bf16.mxu0 0
      %1038 = vmatmul.mubr.bf16.gmra.mrb[0].mxu0 %v1000
      %v1039 = vpop.f32.mrb[0].mxu0
      %v1040 = vadd.f32 0.0, %v1039
      %v1041 = vpop.f32.mrb[0].mxu0
      %v1042 = vpop.f32.mrb[0].mxu0
      %v1043 = vpop.f32.mrb[0].mxu0
      %1044 = vdwg.mxu0
      %1045 = vrot.lane.b32.xlu0 %v807, 120
      %v1046 = vpop.permute.xlu0 %1045
      %1047 = vrot.lane.b32.xlu0 %v807, 88
      %v1048 = vpop.permute.xlu0 %1047
      %v1050 = vsel %vm812, %v1046, 0
      %v1053 = vsel %vm812, %v1048, 0
      %1055 = vmatprep.subr.bf16.mxu0 0
      %1056 = vmatpush1.bf16.xpose.msra.mxu0 %v1053
      %1057 = vmatprep.subr.bf16.mxu0 0
      %1058 = vmatpush1.bf16.xpose.msra.mxu0 0
      %1059 = vmatprep.subr.bf16.mxu0 0
      %1060 = vmatpush1.bf16.xpose.msra.mxu0 0
      %1061 = vmatprep.subr.bf16.mxu0 0
      %1062 = vmatpush1.bf16.xpose.msra.mxu0 0
      %1063 = vmatprep.subr.bf16.mxu0 0
      %1064 = vmatpush1.bf16.xpose.msra.mxu0 0
      %1065 = vmatprep.subr.bf16.mxu0 0
      %1066 = vmatpush1.bf16.xpose.msra.mxu0 0
      %1067 = vmatprep.subr.bf16.mxu0 0
      %1068 = vmatpush1.bf16.xpose.msra.mxu0 0
      %1069 = vmatprep.subr.bf16.mxu0 0
      %1070 = vmatpush1.bf16.xpose.msra.mxu0 0
      %1071 = vmatprep.subr.bf16.mxu0 0
      %1072 = vmatpush1.bf16.xpose.msra.mxu0 0
      %1073 = vmatprep.subr.bf16.mxu0 0
      %1074 = vmatpush1.bf16.xpose.msra.mxu0 0
      %1075 = vmatprep.subr.bf16.mxu0 0
      %1076 = vmatpush1.bf16.xpose.msra.mxu0 0
      %1077 = vmatprep.subr.bf16.mxu0 0
      %1078 = vmatpush1.bf16.xpose.msra.mxu0 0
      %1079 = vmatprep.subr.bf16.mxu0 0
      %1080 = vmatpush1.bf16.xpose.msra.mxu0 0
      %1081 = vmatprep.subr.bf16.mxu0 0
      %1082 = vmatpush1.bf16.xpose.msra.mxu0 0
      %1083 = vmatprep.subr.bf16.mxu0 0
      %1084 = vmatpush1.bf16.xpose.msra.mxu0 0
      %1085 = vmatprep.subr.bf16.mxu0 0
      %1086 = vmatpush1.bf16.xpose.msra.mxu0 0
      %1087 = vmatprep.mubr.bf16.mxu0 0
      %1088 = vmatmul.mubr.bf16.gmra.mrb[0].mxu0 %v1050
      %v1089 = vpop.f32.mrb[0].mxu0
      %v1090 = vadd.f32 0.0, %v1089
      %v1091 = vpop.f32.mrb[0].mxu0
      %v1092 = vpop.f32.mrb[0].mxu0
      %v1093 = vpop.f32.mrb[0].mxu0
      %1094 = vdwg.mxu0
      %1095 = vrot.lane.b32.xlu0 %v808, 120
      %v1096 = vpop.permute.xlu0 %1095
      %1097 = vrot.lane.b32.xlu0 %v808, 88
      %v1098 = vpop.permute.xlu0 %1097
      %v1100 = vsel %vm812, %v1096, 0
      %v1103 = vsel %vm812, %v1098, 0
      %1105 = vmatprep.subr.bf16.mxu0 0
      %1106 = vmatpush1.bf16.xpose.msra.mxu0 %v1103
      %1107 = vmatprep.subr.bf16.mxu0 0
      %1108 = vmatpush1.bf16.xpose.msra.mxu0 0
      %1109 = vmatprep.subr.bf16.mxu0 0
      %1110 = vmatpush1.bf16.xpose.msra.mxu0 0
      %1111 = vmatprep.subr.bf16.mxu0 0
      %1112 = vmatpush1.bf16.xpose.msra.mxu0 0
      %1113 = vmatprep.subr.bf16.mxu0 0
      %1114 = vmatpush1.bf16.xpose.msra.mxu0 0
      %1115 = vmatprep.subr.bf16.mxu0 0
      %1116 = vmatpush1.bf16.xpose.msra.mxu0 0
      %1117 = vmatprep.subr.bf16.mxu0 0
      %1118 = vmatpush1.bf16.xpose.msra.mxu0 0
      %1119 = vmatprep.subr.bf16.mxu0 0
      %1120 = vmatpush1.bf16.xpose.msra.mxu0 0
      %1121 = vmatprep.subr.bf16.mxu0 0
      %1122 = vmatpush1.bf16.xpose.msra.mxu0 0
      %1123 = vmatprep.subr.bf16.mxu0 0
      %1124 = vmatpush1.bf16.xpose.msra.mxu0 0
      %1125 = vmatprep.subr.bf16.mxu0 0
      %1126 = vmatpush1.bf16.xpose.msra.mxu0 0
      %1127 = vmatprep.subr.bf16.mxu0 0
      %1128 = vmatpush1.bf16.xpose.msra.mxu0 0
      %1129 = vmatprep.subr.bf16.mxu0 0
      %1130 = vmatpush1.bf16.xpose.msra.mxu0 0
      %1131 = vmatprep.subr.bf16.mxu0 0
      %1132 = vmatpush1.bf16.xpose.msra.mxu0 0
      %1133 = vmatprep.subr.bf16.mxu0 0
      %1134 = vmatpush1.bf16.xpose.msra.mxu0 0
      %1135 = vmatprep.subr.bf16.mxu0 0
      %1136 = vmatpush1.bf16.xpose.msra.mxu0 0
      %1137 = vmatprep.mubr.bf16.mxu0 0
      %1138 = vmatmul.mubr.bf16.gmra.mrb[0].mxu0 %v1100
      %v1139 = vpop.f32.mrb[0].mxu0
      %v1140 = vadd.f32 0.0, %v1139
      %v1141 = vpop.f32.mrb[0].mxu0
      %v1142 = vpop.f32.mrb[0].mxu0
      %v1143 = vpop.f32.mrb[0].mxu0
      %1144 = vdwg.mxu0
      %v1145 = vmul.f32 %v1090, 0.35355338
      %v1146 = vmul.f32 %v1140, 0.35355338
      %v1147 = vadd.f32 %v1145, %v915
      %v1148 = vadd.f32 %v1146, %v919
      %v1149 = vsel %vm812, %v1147, -inf
      %1150 = vmax.xlane.f32.xlu0 %v1149
      %v1151 = vpop.xlane.xlu0 %1150
      %v1152 = vsel %vm812, %v1148, -inf
      %1153 = vmax.xlane.f32.xlu0 %v1152
      %v1154 = vpop.xlane.xlu0 %1153
      %v1155 = vsub.f32 %v1147, %v1151
      %v1156 = vsub.f32 %v1148, %v1154
      %v1157 = vmul.f32 %v1155, 1.442695
      %v1158 = vpow.pop %v1157
      %v1159 = vmul.f32 %v1156, 1.442695
      %v1160 = vpow.pop %v1159
      %v1161 = vsel %vm812, %v1158, 0.0
      %1162 = vadd.xlane.f32.xlu0 %v1161
      %v1163 = vpop.xlane.xlu0 %1162
      %v1164 = vsel %vm812, %v1160, 0.0
      %1165 = vadd.xlane.f32.xlu0 %v1164
      %v1166 = vpop.xlane.xlu0 %1165
      %v1167 = vrcp.pop %v1163
      %v1168 = vrcp.pop %v1166
      %v1169 = vmul.f32 %v1158, %v1167
      %v1170 = vmul.f32 %v1160, %v1168
      %v1171 = vpack.c.bf16 %v1169, %v1169
      %v1172 = vpack.c.bf16 %v1170, %v1170
      %1173 = vrot.lane.b32.xlu0 %v807, 56
      %v1174 = vpop.permute.xlu0 %1173
      %v1176 = vsel %vm812, %v1171, 0
      %v1179 = vsel %vm953, %v1174, 0
      %1181 = vmatprep.subr.bf16.mxu0 0
      %1182 = vmatpush1.bf16.msra.mxu0 %v1179
      %1183 = vmatprep.subr.bf16.mxu0 0
      %1184 = vmatpush1.bf16.msra.mxu0 0
      %1185 = vmatprep.subr.bf16.mxu0 0
      %1186 = vmatpush1.bf16.msra.mxu0 0
      %1187 = vmatprep.subr.bf16.mxu0 0
      %1188 = vmatpush1.bf16.msra.mxu0 0
      %1189 = vmatprep.subr.bf16.mxu0 0
      %1190 = vmatpush1.bf16.msra.mxu0 0
      %1191 = vmatprep.subr.bf16.mxu0 0
      %1192 = vmatpush1.bf16.msra.mxu0 0
      %1193 = vmatprep.subr.bf16.mxu0 0
      %1194 = vmatpush1.bf16.msra.mxu0 0
      %1195 = vmatprep.subr.bf16.mxu0 0
      %1196 = vmatpush1.bf16.msra.mxu0 0
      %1197 = vmatprep.subr.bf16.mxu0 0
      %1198 = vmatpush1.bf16.msra.mxu0 0
      %1199 = vmatprep.subr.bf16.mxu0 0
      %1200 = vmatpush1.bf16.msra.mxu0 0
      %1201 = vmatprep.subr.bf16.mxu0 0
      %1202 = vmatpush1.bf16.msra.mxu0 0
      %1203 = vmatprep.subr.bf16.mxu0 0
      %1204 = vmatpush1.bf16.msra.mxu0 0
      %1205 = vmatprep.subr.bf16.mxu0 0
      %1206 = vmatpush1.bf16.msra.mxu0 0
      %1207 = vmatprep.subr.bf16.mxu0 0
      %1208 = vmatpush1.bf16.msra.mxu0 0
      %1209 = vmatprep.subr.bf16.mxu0 0
      %1210 = vmatpush1.bf16.msra.mxu0 0
      %1211 = vmatprep.subr.bf16.mxu0 0
      %1212 = vmatpush1.bf16.msra.mxu0 0
      %1213 = vmatprep.mubr.bf16.mxu0 0
      %1214 = vmatmul.mubr.bf16.gmra.mrb[0].mxu0 %v1176
      %v1215 = vpop.f32.mrb[0].mxu0
      %v1216 = vadd.f32 0.0, %v1215
      %v1217 = vpop.f32.mrb[0].mxu0
      %v1218 = vpop.f32.mrb[0].mxu0
      %v1219 = vpop.f32.mrb[0].mxu0
      %1220 = vdwg.mxu0
      %1221 = vrot.lane.b32.xlu0 %v808, 56
      %v1222 = vpop.permute.xlu0 %1221
      %v1224 = vsel %vm812, %v1172, 0
      %v1227 = vsel %vm953, %v1222, 0
      %1229 = vmatprep.subr.bf16.mxu0 0
      %1230 = vmatpush1.bf16.msra.mxu0 %v1227
      %1231 = vmatprep.subr.bf16.mxu0 0
      %1232 = vmatpush1.bf16.msra.mxu0 0
      %1233 = vmatprep.subr.bf16.mxu0 0
      %1234 = vmatpush1.bf16.msra.mxu0 0
      %1235 = vmatprep.subr.bf16.mxu0 0
      %1236 = vmatpush1.bf16.msra.mxu0 0
      %1237 = vmatprep.subr.bf16.mxu0 0
      %1238 = vmatpush1.bf16.msra.mxu0 0
      %1239 = vmatprep.subr.bf16.mxu0 0
      %1240 = vmatpush1.bf16.msra.mxu0 0
      %1241 = vmatprep.subr.bf16.mxu0 0
      %1242 = vmatpush1.bf16.msra.mxu0 0
      %1243 = vmatprep.subr.bf16.mxu0 0
      %1244 = vmatpush1.bf16.msra.mxu0 0
      %1245 = vmatprep.subr.bf16.mxu0 0
      %1246 = vmatpush1.bf16.msra.mxu0 0
      %1247 = vmatprep.subr.bf16.mxu0 0
      %1248 = vmatpush1.bf16.msra.mxu0 0
      %1249 = vmatprep.subr.bf16.mxu0 0
      %1250 = vmatpush1.bf16.msra.mxu0 0
      %1251 = vmatprep.subr.bf16.mxu0 0
      %1252 = vmatpush1.bf16.msra.mxu0 0
      %1253 = vmatprep.subr.bf16.mxu0 0
      %1254 = vmatpush1.bf16.msra.mxu0 0
      %1255 = vmatprep.subr.bf16.mxu0 0
      %1256 = vmatpush1.bf16.msra.mxu0 0
      %1257 = vmatprep.subr.bf16.mxu0 0
      %1258 = vmatpush1.bf16.msra.mxu0 0
      %1259 = vmatprep.subr.bf16.mxu0 0
      %1260 = vmatpush1.bf16.msra.mxu0 0
      %1261 = vmatprep.mubr.bf16.mxu0 0
      %1262 = vmatmul.mubr.bf16.gmra.mrb[0].mxu0 %v1224
      %v1263 = vpop.f32.mrb[0].mxu0
      %v1264 = vadd.f32 0.0, %v1263
      %v1265 = vpop.f32.mrb[0].mxu0
      %v1266 = vpop.f32.mrb[0].mxu0
      %v1267 = vpop.f32.mrb[0].mxu0
      %1268 = vdwg.mxu0
      %1269 = vrot.lane.b32.xlu0 %v807, 112
      %v1270 = vpop.permute.xlu0 %1269
      %1271 = vrot.lane.b32.xlu0 %v807, 80
      %v1272 = vpop.permute.xlu0 %1271
      %v1274 = vsel %vm812, %v1270, 0
      %v1277 = vsel %vm812, %v1272, 0
      %1279 = vmatprep.subr.bf16.mxu0 0
      %1280 = vmatpush1.bf16.xpose.msra.mxu0 %v1277
      %1281 = vmatprep.subr.bf16.mxu0 0
      %1282 = vmatpush1.bf16.xpose.msra.mxu0 0
      %1283 = vmatprep.subr.bf16.mxu0 0
      %1284 = vmatpush1.bf16.xpose.msra.mxu0 0
      %1285 = vmatprep.subr.bf16.mxu0 0
      %1286 = vmatpush1.bf16.xpose.msra.mxu0 0
      %1287 = vmatprep.subr.bf16.mxu0 0
      %1288 = vmatpush1.bf16.xpose.msra.mxu0 0
      %1289 = vmatprep.subr.bf16.mxu0 0
      %1290 = vmatpush1.bf16.xpose.msra.mxu0 0
      %1291 = vmatprep.subr.bf16.mxu0 0
      %1292 = vmatpush1.bf16.xpose.msra.mxu0 0
      %1293 = vmatprep.subr.bf16.mxu0 0
      %1294 = vmatpush1.bf16.xpose.msra.mxu0 0
      %1295 = vmatprep.subr.bf16.mxu0 0
      %1296 = vmatpush1.bf16.xpose.msra.mxu0 0
      %1297 = vmatprep.subr.bf16.mxu0 0
      %1298 = vmatpush1.bf16.xpose.msra.mxu0 0
      %1299 = vmatprep.subr.bf16.mxu0 0
      %1300 = vmatpush1.bf16.xpose.msra.mxu0 0
      %1301 = vmatprep.subr.bf16.mxu0 0
      %1302 = vmatpush1.bf16.xpose.msra.mxu0 0
      %1303 = vmatprep.subr.bf16.mxu0 0
      %1304 = vmatpush1.bf16.xpose.msra.mxu0 0
      %1305 = vmatprep.subr.bf16.mxu0 0
      %1306 = vmatpush1.bf16.xpose.msra.mxu0 0
      %1307 = vmatprep.subr.bf16.mxu0 0
      %1308 = vmatpush1.bf16.xpose.msra.mxu0 0
      %1309 = vmatprep.subr.bf16.mxu0 0
      %1310 = vmatpush1.bf16.xpose.msra.mxu0 0
      %1311 = vmatprep.mubr.bf16.mxu0 0
      %1312 = vmatmul.mubr.bf16.gmra.mrb[0].mxu0 %v1274
      %v1313 = vpop.f32.mrb[0].mxu0
      %v1314 = vadd.f32 0.0, %v1313
      %v1315 = vpop.f32.mrb[0].mxu0
      %v1316 = vpop.f32.mrb[0].mxu0
      %v1317 = vpop.f32.mrb[0].mxu0
      %1318 = vdwg.mxu0
      %1319 = vrot.lane.b32.xlu0 %v808, 112
      %v1320 = vpop.permute.xlu0 %1319
      %1321 = vrot.lane.b32.xlu0 %v808, 80
      %v1322 = vpop.permute.xlu0 %1321
      %v1324 = vsel %vm812, %v1320, 0
      %v1327 = vsel %vm812, %v1322, 0
      %1329 = vmatprep.subr.bf16.mxu0 0
      %1330 = vmatpush1.bf16.xpose.msra.mxu0 %v1327
      %1331 = vmatprep.subr.bf16.mxu0 0
      %1332 = vmatpush1.bf16.xpose.msra.mxu0 0
      %1333 = vmatprep.subr.bf16.mxu0 0
      %1334 = vmatpush1.bf16.xpose.msra.mxu0 0
      %1335 = vmatprep.subr.bf16.mxu0 0
      %1336 = vmatpush1.bf16.xpose.msra.mxu0 0
      %1337 = vmatprep.subr.bf16.mxu0 0
      %1338 = vmatpush1.bf16.xpose.msra.mxu0 0
      %1339 = vmatprep.subr.bf16.mxu0 0
      %1340 = vmatpush1.bf16.xpose.msra.mxu0 0
      %1341 = vmatprep.subr.bf16.mxu0 0
      %1342 = vmatpush1.bf16.xpose.msra.mxu0 0
      %1343 = vmatprep.subr.bf16.mxu0 0
      %1344 = vmatpush1.bf16.xpose.msra.mxu0 0
      %1345 = vmatprep.subr.bf16.mxu0 0
      %1346 = vmatpush1.bf16.xpose.msra.mxu0 0
      %1347 = vmatprep.subr.bf16.mxu0 0
      %1348 = vmatpush1.bf16.xpose.msra.mxu0 0
      %1349 = vmatprep.subr.bf16.mxu0 0
      %1350 = vmatpush1.bf16.xpose.msra.mxu0 0
      %1351 = vmatprep.subr.bf16.mxu0 0
      %1352 = vmatpush1.bf16.xpose.msra.mxu0 0
      %1353 = vmatprep.subr.bf16.mxu0 0
      %1354 = vmatpush1.bf16.xpose.msra.mxu0 0
      %1355 = vmatprep.subr.bf16.mxu0 0
      %1356 = vmatpush1.bf16.xpose.msra.mxu0 0
      %1357 = vmatprep.subr.bf16.mxu0 0
      %1358 = vmatpush1.bf16.xpose.msra.mxu0 0
      %1359 = vmatprep.subr.bf16.mxu0 0
      %1360 = vmatpush1.bf16.xpose.msra.mxu0 0
      %1361 = vmatprep.mubr.bf16.mxu0 0
      %1362 = vmatmul.mubr.bf16.gmra.mrb[0].mxu0 %v1324
      %v1363 = vpop.f32.mrb[0].mxu0
      %v1364 = vadd.f32 0.0, %v1363
      %v1365 = vpop.f32.mrb[0].mxu0
      %v1366 = vpop.f32.mrb[0].mxu0
      %v1367 = vpop.f32.mrb[0].mxu0
      %1368 = vdwg.mxu0
      %v1369 = vmul.f32 %v1314, 0.35355338
      %v1370 = vmul.f32 %v1364, 0.35355338
      %v1371 = vadd.f32 %v1369, %v915
      %v1372 = vadd.f32 %v1370, %v919
      %v1373 = vsel %vm812, %v1371, -inf
      %1374 = vmax.xlane.f32.xlu0 %v1373
      %v1375 = vpop.xlane.xlu0 %1374
      %v1376 = vsel %vm812, %v1372, -inf
      %1377 = vmax.xlane.f32.xlu0 %v1376
      %v1378 = vpop.xlane.xlu0 %1377
      %v1379 = vsub.f32 %v1371, %v1375
      %v1380 = vsub.f32 %v1372, %v1378
      %v1381 = vmul.f32 %v1379, 1.442695
      %v1382 = vpow.pop %v1381
      %v1383 = vmul.f32 %v1380, 1.442695
      %v1384 = vpow.pop %v1383
      %v1385 = vsel %vm812, %v1382, 0.0
      %1386 = vadd.xlane.f32.xlu0 %v1385
      %v1387 = vpop.xlane.xlu0 %1386
      %v1388 = vsel %vm812, %v1384, 0.0
      %1389 = vadd.xlane.f32.xlu0 %v1388
      %v1390 = vpop.xlane.xlu0 %1389
      %v1391 = vrcp.pop %v1387
      %v1392 = vrcp.pop %v1390
      %v1393 = vmul.f32 %v1382, %v1391
      %v1394 = vmul.f32 %v1384, %v1392
      %v1395 = vpack.c.bf16 %v1393, %v1393
      %v1396 = vpack.c.bf16 %v1394, %v1394
      %1397 = vrot.lane.b32.xlu0 %v807, 48
      %v1398 = vpop.permute.xlu0 %1397
      %v1400 = vsel %vm812, %v1395, 0
      %v1403 = vsel %vm953, %v1398, 0
      %1405 = vmatprep.subr.bf16.mxu0 0
      %1406 = vmatpush1.bf16.msra.mxu0 %v1403
      %1407 = vmatprep.subr.bf16.mxu0 0
      %1408 = vmatpush1.bf16.msra.mxu0 0
      %1409 = vmatprep.subr.bf16.mxu0 0
      %1410 = vmatpush1.bf16.msra.mxu0 0
      %1411 = vmatprep.subr.bf16.mxu0 0
      %1412 = vmatpush1.bf16.msra.mxu0 0
      %1413 = vmatprep.subr.bf16.mxu0 0
      %1414 = vmatpush1.bf16.msra.mxu0 0
      %1415 = vmatprep.subr.bf16.mxu0 0
      %1416 = vmatpush1.bf16.msra.mxu0 0
      %1417 = vmatprep.subr.bf16.mxu0 0
      %1418 = vmatpush1.bf16.msra.mxu0 0
      %1419 = vmatprep.subr.bf16.mxu0 0
      %1420 = vmatpush1.bf16.msra.mxu0 0
      %1421 = vmatprep.subr.bf16.mxu0 0
      %1422 = vmatpush1.bf16.msra.mxu0 0
      %1423 = vmatprep.subr.bf16.mxu0 0
      %1424 = vmatpush1.bf16.msra.mxu0 0
      %1425 = vmatprep.subr.bf16.mxu0 0
      %1426 = vmatpush1.bf16.msra.mxu0 0
      %1427 = vmatprep.subr.bf16.mxu0 0
      %1428 = vmatpush1.bf16.msra.mxu0 0
      %1429 = vmatprep.subr.bf16.mxu0 0
      %1430 = vmatpush1.bf16.msra.mxu0 0
      %1431 = vmatprep.subr.bf16.mxu0 0
      %1432 = vmatpush1.bf16.msra.mxu0 0
      %1433 = vmatprep.subr.bf16.mxu0 0
      %1434 = vmatpush1.bf16.msra.mxu0 0
      %1435 = vmatprep.subr.bf16.mxu0 0
      %1436 = vmatpush1.bf16.msra.mxu0 0
      %1437 = vmatprep.mubr.bf16.mxu0 0
      %1438 = vmatmul.mubr.bf16.gmra.mrb[0].mxu0 %v1400
      %v1439 = vpop.f32.mrb[0].mxu0
      %v1440 = vadd.f32 0.0, %v1439
      %v1441 = vpop.f32.mrb[0].mxu0
      %v1442 = vpop.f32.mrb[0].mxu0
      %v1443 = vpop.f32.mrb[0].mxu0
      %1444 = vdwg.mxu0
      %1445 = vrot.lane.b32.xlu0 %v808, 48
      %v1446 = vpop.permute.xlu0 %1445
      %v1448 = vsel %vm812, %v1396, 0
      %v1451 = vsel %vm953, %v1446, 0
      %1453 = vmatprep.subr.bf16.mxu0 0
      %1454 = vmatpush1.bf16.msra.mxu0 %v1451
      %1455 = vmatprep.subr.bf16.mxu0 0
      %1456 = vmatpush1.bf16.msra.mxu0 0
      %1457 = vmatprep.subr.bf16.mxu0 0
      %1458 = vmatpush1.bf16.msra.mxu0 0
      %1459 = vmatprep.subr.bf16.mxu0 0
      %1460 = vmatpush1.bf16.msra.mxu0 0
      %1461 = vmatprep.subr.bf16.mxu0 0
      %1462 = vmatpush1.bf16.msra.mxu0 0
      %1463 = vmatprep.subr.bf16.mxu0 0
      %1464 = vmatpush1.bf16.msra.mxu0 0
      %1465 = vmatprep.subr.bf16.mxu0 0
      %1466 = vmatpush1.bf16.msra.mxu0 0
      %1467 = vmatprep.subr.bf16.mxu0 0
      %1468 = vmatpush1.bf16.msra.mxu0 0
      %1469 = vmatprep.subr.bf16.mxu0 0
      %1470 = vmatpush1.bf16.msra.mxu0 0
      %1471 = vmatprep.subr.bf16.mxu0 0
      %1472 = vmatpush1.bf16.msra.mxu0 0
      %1473 = vmatprep.subr.bf16.mxu0 0
      %1474 = vmatpush1.bf16.msra.mxu0 0
      %1475 = vmatprep.subr.bf16.mxu0 0
      %1476 = vmatpush1.bf16.msra.mxu0 0
      %1477 = vmatprep.subr.bf16.mxu0 0
      %1478 = vmatpush1.bf16.msra.mxu0 0
      %1479 = vmatprep.subr.bf16.mxu0 0
      %1480 = vmatpush1.bf16.msra.mxu0 0
      %1481 = vmatprep.subr.bf16.mxu0 0
      %1482 = vmatpush1.bf16.msra.mxu0 0
      %1483 = vmatprep.subr.bf16.mxu0 0
      %1484 = vmatpush1.bf16.msra.mxu0 0
      %1485 = vmatprep.mubr.bf16.mxu0 0
      %1486 = vmatmul.mubr.bf16.gmra.mrb[0].mxu0 %v1448
      %v1487 = vpop.f32.mrb[0].mxu0
      %v1488 = vadd.f32 0.0, %v1487
      %v1489 = vpop.f32.mrb[0].mxu0
      %v1490 = vpop.f32.mrb[0].mxu0
      %v1491 = vpop.f32.mrb[0].mxu0
      %1492 = vdwg.mxu0
      %1493 = vrot.lane.b32.xlu0 %v807, 104
      %v1494 = vpop.permute.xlu0 %1493
      %1495 = vrot.lane.b32.xlu0 %v807, 72
      %v1496 = vpop.permute.xlu0 %1495
      %v1498 = vsel %vm812, %v1494, 0
      %v1501 = vsel %vm812, %v1496, 0
      %1503 = vmatprep.subr.bf16.mxu0 0
      %1504 = vmatpush1.bf16.xpose.msra.mxu0 %v1501
      %1505 = vmatprep.subr.bf16.mxu0 0
      %1506 = vmatpush1.bf16.xpose.msra.mxu0 0
      %1507 = vmatprep.subr.bf16.mxu0 0
      %1508 = vmatpush1.bf16.xpose.msra.mxu0 0
      %1509 = vmatprep.subr.bf16.mxu0 0
      %1510 = vmatpush1.bf16.xpose.msra.mxu0 0
      %1511 = vmatprep.subr.bf16.mxu0 0
      %1512 = vmatpush1.bf16.xpose.msra.mxu0 0
      %1513 = vmatprep.subr.bf16.mxu0 0
      %1514 = vmatpush1.bf16.xpose.msra.mxu0 0
      %1515 = vmatprep.subr.bf16.mxu0 0
      %1516 = vmatpush1.bf16.xpose.msra.mxu0 0
      %1517 = vmatprep.subr.bf16.mxu0 0
      %1518 = vmatpush1.bf16.xpose.msra.mxu0 0
      %1519 = vmatprep.subr.bf16.mxu0 0
      %1520 = vmatpush1.bf16.xpose.msra.mxu0 0
      %1521 = vmatprep.subr.bf16.mxu0 0
      %1522 = vmatpush1.bf16.xpose.msra.mxu0 0
      %1523 = vmatprep.subr.bf16.mxu0 0
      %1524 = vmatpush1.bf16.xpose.msra.mxu0 0
      %1525 = vmatprep.subr.bf16.mxu0 0
      %1526 = vmatpush1.bf16.xpose.msra.mxu0 0
      %1527 = vmatprep.subr.bf16.mxu0 0
      %1528 = vmatpush1.bf16.xpose.msra.mxu0 0
      %1529 = vmatprep.subr.bf16.mxu0 0
      %1530 = vmatpush1.bf16.xpose.msra.mxu0 0
      %1531 = vmatprep.subr.bf16.mxu0 0
      %1532 = vmatpush1.bf16.xpose.msra.mxu0 0
      %1533 = vmatprep.subr.bf16.mxu0 0
      %1534 = vmatpush1.bf16.xpose.msra.mxu0 0
      %1535 = vmatprep.mubr.bf16.mxu0 0
      %1536 = vmatmul.mubr.bf16.gmra.mrb[0].mxu0 %v1498
      %v1537 = vpop.f32.mrb[0].mxu0
      %v1538 = vadd.f32 0.0, %v1537
      %v1539 = vpop.f32.mrb[0].mxu0
      %v1540 = vpop.f32.mrb[0].mxu0
      %v1541 = vpop.f32.mrb[0].mxu0
      %1542 = vdwg.mxu0
      %1543 = vrot.lane.b32.xlu0 %v808, 104
      %v1544 = vpop.permute.xlu0 %1543
      %1545 = vrot.lane.b32.xlu0 %v808, 72
      %v1546 = vpop.permute.xlu0 %1545
      %v1548 = vsel %vm812, %v1544, 0
      %v1551 = vsel %vm812, %v1546, 0
      %1553 = vmatprep.subr.bf16.mxu0 0
      %1554 = vmatpush1.bf16.xpose.msra.mxu0 %v1551
      %1555 = vmatprep.subr.bf16.mxu0 0
      %1556 = vmatpush1.bf16.xpose.msra.mxu0 0
      %1557 = vmatprep.subr.bf16.mxu0 0
      %1558 = vmatpush1.bf16.xpose.msra.mxu0 0
      %1559 = vmatprep.subr.bf16.mxu0 0
      %1560 = vmatpush1.bf16.xpose.msra.mxu0 0
      %1561 = vmatprep.subr.bf16.mxu0 0
      %1562 = vmatpush1.bf16.xpose.msra.mxu0 0
      %1563 = vmatprep.subr.bf16.mxu0 0
      %1564 = vmatpush1.bf16.xpose.msra.mxu0 0
      %1565 = vmatprep.subr.bf16.mxu0 0
      %1566 = vmatpush1.bf16.xpose.msra.mxu0 0
      %1567 = vmatprep.subr.bf16.mxu0 0
      %1568 = vmatpush1.bf16.xpose.msra.mxu0 0
      %1569 = vmatprep.subr.bf16.mxu0 0
      %1570 = vmatpush1.bf16.xpose.msra.mxu0 0
      %1571 = vmatprep.subr.bf16.mxu0 0
      %1572 = vmatpush1.bf16.xpose.msra.mxu0 0
      %1573 = vmatprep.subr.bf16.mxu0 0
      %1574 = vmatpush1.bf16.xpose.msra.mxu0 0
      %1575 = vmatprep.subr.bf16.mxu0 0
      %1576 = vmatpush1.bf16.xpose.msra.mxu0 0
      %1577 = vmatprep.subr.bf16.mxu0 0
      %1578 = vmatpush1.bf16.xpose.msra.mxu0 0
      %1579 = vmatprep.subr.bf16.mxu0 0
      %1580 = vmatpush1.bf16.xpose.msra.mxu0 0
      %1581 = vmatprep.subr.bf16.mxu0 0
      %1582 = vmatpush1.bf16.xpose.msra.mxu0 0
      %1583 = vmatprep.subr.bf16.mxu0 0
      %1584 = vmatpush1.bf16.xpose.msra.mxu0 0
      %1585 = vmatprep.mubr.bf16.mxu0 0
      %1586 = vmatmul.mubr.bf16.gmra.mrb[0].mxu0 %v1548
      %v1587 = vpop.f32.mrb[0].mxu0
      %v1588 = vadd.f32 0.0, %v1587
      %v1589 = vpop.f32.mrb[0].mxu0
      %v1590 = vpop.f32.mrb[0].mxu0
      %v1591 = vpop.f32.mrb[0].mxu0
      %1592 = vdwg.mxu0
      %v1593 = vmul.f32 %v1538, 0.35355338
      %v1594 = vmul.f32 %v1588, 0.35355338
      %v1595 = vadd.f32 %v1593, %v915
      %v1596 = vadd.f32 %v1594, %v919
      %v1597 = vsel %vm812, %v1595, -inf
      %1598 = vmax.xlane.f32.xlu0 %v1597
      %v1599 = vpop.xlane.xlu0 %1598
      %v1600 = vsel %vm812, %v1596, -inf
      %1601 = vmax.xlane.f32.xlu0 %v1600
      %v1602 = vpop.xlane.xlu0 %1601
      %v1603 = vsub.f32 %v1595, %v1599
      %v1604 = vsub.f32 %v1596, %v1602
      %v1605 = vmul.f32 %v1603, 1.442695
      %v1606 = vpow.pop %v1605
      %v1607 = vmul.f32 %v1604, 1.442695
      %v1608 = vpow.pop %v1607
      %v1609 = vsel %vm812, %v1606, 0.0
      %1610 = vadd.xlane.f32.xlu0 %v1609
      %v1611 = vpop.xlane.xlu0 %1610
      %v1612 = vsel %vm812, %v1608, 0.0
      %1613 = vadd.xlane.f32.xlu0 %v1612
      %v1614 = vpop.xlane.xlu0 %1613
      %v1615 = vrcp.pop %v1611
      %v1616 = vrcp.pop %v1614
      %v1617 = vmul.f32 %v1606, %v1615
      %v1618 = vmul.f32 %v1608, %v1616
      %v1619 = vpack.c.bf16 %v1617, %v1617
      %v1620 = vpack.c.bf16 %v1618, %v1618
      %1621 = vrot.lane.b32.xlu0 %v807, 40
      %v1622 = vpop.permute.xlu0 %1621
      %v1624 = vsel %vm812, %v1619, 0
      %v1627 = vsel %vm953, %v1622, 0
      %1629 = vmatprep.subr.bf16.mxu0 0
      %1630 = vmatpush1.bf16.msra.mxu0 %v1627
      %1631 = vmatprep.subr.bf16.mxu0 0
      %1632 = vmatpush1.bf16.msra.mxu0 0
      %1633 = vmatprep.subr.bf16.mxu0 0
      %1634 = vmatpush1.bf16.msra.mxu0 0
      %1635 = vmatprep.subr.bf16.mxu0 0
      %1636 = vmatpush1.bf16.msra.mxu0 0
      %1637 = vmatprep.subr.bf16.mxu0 0
      %1638 = vmatpush1.bf16.msra.mxu0 0
      %1639 = vmatprep.subr.bf16.mxu0 0
      %1640 = vmatpush1.bf16.msra.mxu0 0
      %1641 = vmatprep.subr.bf16.mxu0 0
      %1642 = vmatpush1.bf16.msra.mxu0 0
      %1643 = vmatprep.subr.bf16.mxu0 0
      %1644 = vmatpush1.bf16.msra.mxu0 0
      %1645 = vmatprep.subr.bf16.mxu0 0
      %1646 = vmatpush1.bf16.msra.mxu0 0
      %1647 = vmatprep.subr.bf16.mxu0 0
      %1648 = vmatpush1.bf16.msra.mxu0 0
      %1649 = vmatprep.subr.bf16.mxu0 0
      %1650 = vmatpush1.bf16.msra.mxu0 0
      %1651 = vmatprep.subr.bf16.mxu0 0
      %1652 = vmatpush1.bf16.msra.mxu0 0
      %1653 = vmatprep.subr.bf16.mxu0 0
      %1654 = vmatpush1.bf16.msra.mxu0 0
      %1655 = vmatprep.subr.bf16.mxu0 0
      %1656 = vmatpush1.bf16.msra.mxu0 0
      %1657 = vmatprep.subr.bf16.mxu0 0
      %1658 = vmatpush1.bf16.msra.mxu0 0
      %1659 = vmatprep.subr.bf16.mxu0 0
      %1660 = vmatpush1.bf16.msra.mxu0 0
      %1661 = vmatprep.mubr.bf16.mxu0 0
      %1662 = vmatmul.mubr.bf16.gmra.mrb[0].mxu0 %v1624
      %v1663 = vpop.f32.mrb[0].mxu0
      %v1664 = vadd.f32 0.0, %v1663
      %v1665 = vpop.f32.mrb[0].mxu0
      %v1666 = vpop.f32.mrb[0].mxu0
      %v1667 = vpop.f32.mrb[0].mxu0
      %1668 = vdwg.mxu0
      %1669 = vrot.lane.b32.xlu0 %v808, 40
      %v1670 = vpop.permute.xlu0 %1669
      %v1672 = vsel %vm812, %v1620, 0
      %v1675 = vsel %vm953, %v1670, 0
      %1677 = vmatprep.subr.bf16.mxu0 0
      %1678 = vmatpush1.bf16.msra.mxu0 %v1675
      %1679 = vmatprep.subr.bf16.mxu0 0
      %1680 = vmatpush1.bf16.msra.mxu0 0
      %1681 = vmatprep.subr.bf16.mxu0 0
      %1682 = vmatpush1.bf16.msra.mxu0 0
      %1683 = vmatprep.subr.bf16.mxu0 0
      %1684 = vmatpush1.bf16.msra.mxu0 0
      %1685 = vmatprep.subr.bf16.mxu0 0
      %1686 = vmatpush1.bf16.msra.mxu0 0
      %1687 = vmatprep.subr.bf16.mxu0 0
      %1688 = vmatpush1.bf16.msra.mxu0 0
      %1689 = vmatprep.subr.bf16.mxu0 0
      %1690 = vmatpush1.bf16.msra.mxu0 0
      %1691 = vmatprep.subr.bf16.mxu0 0
      %1692 = vmatpush1.bf16.msra.mxu0 0
      %1693 = vmatprep.subr.bf16.mxu0 0
      %1694 = vmatpush1.bf16.msra.mxu0 0
      %1695 = vmatprep.subr.bf16.mxu0 0
      %1696 = vmatpush1.bf16.msra.mxu0 0
      %1697 = vmatprep.subr.bf16.mxu0 0
      %1698 = vmatpush1.bf16.msra.mxu0 0
      %1699 = vmatprep.subr.bf16.mxu0 0
      %1700 = vmatpush1.bf16.msra.mxu0 0
      %1701 = vmatprep.subr.bf16.mxu0 0
      %1702 = vmatpush1.bf16.msra.mxu0 0
      %1703 = vmatprep.subr.bf16.mxu0 0
      %1704 = vmatpush1.bf16.msra.mxu0 0
      %1705 = vmatprep.subr.bf16.mxu0 0
      %1706 = vmatpush1.bf16.msra.mxu0 0
      %1707 = vmatprep.subr.bf16.mxu0 0
      %1708 = vmatpush1.bf16.msra.mxu0 0
      %1709 = vmatprep.mubr.bf16.mxu0 0
      %1710 = vmatmul.mubr.bf16.gmra.mrb[0].mxu0 %v1672
      %v1711 = vpop.f32.mrb[0].mxu0
      %v1712 = vadd.f32 0.0, %v1711
      %v1713 = vpop.f32.mrb[0].mxu0
      %v1714 = vpop.f32.mrb[0].mxu0
      %v1715 = vpop.f32.mrb[0].mxu0
      %1716 = vdwg.mxu0
      %1719 = vrot.lane.b32.xlu0 %v1216, 8
      %v1720 = vpop.permute.xlu0 %1719
      %1721 = vrot.lane.b32.xlu0 %v1264, 8
      %v1722 = vpop.permute.xlu0 %1721
      %1727 = vrot.lane.b32.xlu0 %v1440, 16
      %v1728 = vpop.permute.xlu0 %1727
      %1729 = vrot.lane.b32.xlu0 %v1488, 16
      %v1730 = vpop.permute.xlu0 %1729
      %1735 = vrot.lane.b32.xlu0 %v1664, 24
      %v1736 = vpop.permute.xlu0 %1735
      %1737 = vrot.lane.b32.xlu0 %v1712, 24
      %v1738 = vpop.permute.xlu0 %1737
      %v1741 = vsel %vm812, %v992, %v1720
      %v1742 = vsel %vm812, %v1040, %v1722
      %vm1743 = vcmask 130048
      %v1744 = vsel %vm1743, %v1741, %v1728
      %v1745 = vsel %vm1743, %v1742, %v1730
      %vm1746 = vcmask 195584
      %v1747 = vsel %vm1746, %v1744, %v1736
      %v1748 = vsel %vm1746, %v1745, %v1738
      %v1749 = vpack.c.bf16 %v1748, %v1747
      %v1750 = vld [vmem:[%s647] sm:$0xf]
      %v1751 = vld [vmem:[%s647 + $0x4] sm:$0xf]
      %v1752 = vld [vmem:[%s647 + $0x8] sm:$0xf]
      %v1753 = vld [vmem:[%s647 + $0xc] sm:$0xf]
      %v1754 = vld [vmem:[%s650] sm:$0x1]
      %v1756 = vlaneseq
      %v1757 = vshrl.u32 %v1756, 7
      %v1758 = vsub.s32 0, %v1757
      %v1759 = vrot.slane %v1754, %v1758
      %v1765 = vunpack.c.l.b16 %v1750
      %v1766 = vunpack.c.l.b16 %v1751
      %v1767 = vunpack.c.l.b16 %v1752
      %v1768 = vunpack.c.l.b16 %v1753
      %v1769 = vpack.c.b16 %v1766, %v1765
      %v1770 = vpack.c.b16 %v1768, %v1767
      %v1774 = vsel %vm760, %v1749, 0
      %1776 = vmatprep.subr.bf16.mxu0 0
      %1777 = vmatpush1.bf16.msra.mxu0 %v1769
      %1778 = vmatprep.subr.bf16.mxu0 0
      %1779 = vmatpush1.bf16.msra.mxu0 %v1770
      %1780 = vmatprep.subr.bf16.mxu0 0
      %1781 = vmatpush1.bf16.msra.mxu0 0
      %1782 = vmatprep.subr.bf16.mxu0 0
      %1783 = vmatpush1.bf16.msra.mxu0 0
      %1784 = vmatprep.subr.bf16.mxu0 0
      %1785 = vmatpush1.bf16.msra.mxu0 0
      %1786 = vmatprep.subr.bf16.mxu0 0
      %1787 = vmatpush1.bf16.msra.mxu0 0
      %1788 = vmatprep.subr.bf16.mxu0 0
      %1789 = vmatpush1.bf16.msra.mxu0 0
      %1790 = vmatprep.subr.bf16.mxu0 0
      %1791 = vmatpush1.bf16.msra.mxu0 0
      %1792 = vmatprep.subr.bf16.mxu0 0
      %1793 = vmatpush1.bf16.msra.mxu0 0
      %1794 = vmatprep.subr.bf16.mxu0 0
      %1795 = vmatpush1.bf16.msra.mxu0 0
      %1796 = vmatprep.subr.bf16.mxu0 0
      %1797 = vmatpush1.bf16.msra.mxu0 0
      %1798 = vmatprep.subr.bf16.mxu0 0
      %1799 = vmatpush1.bf16.msra.mxu0 0
      %1800 = vmatprep.subr.bf16.mxu0 0
      %1801 = vmatpush1.bf16.msra.mxu0 0
      %1802 = vmatprep.subr.bf16.mxu0 0
      %1803 = vmatpush1.bf16.msra.mxu0 0
      %1804 = vmatprep.subr.bf16.mxu0 0
      %1805 = vmatpush1.bf16.msra.mxu0 0
      %1806 = vmatprep.subr.bf16.mxu0 0
      %1807 = vmatpush1.bf16.msra.mxu0 0
      %1808 = vmatprep.mubr.bf16.mxu0 0
      %1809 = vmatmul.mubr.bf16.gmra.mrb[0].mxu0 %v1774
      %v1810 = vpop.f32.mrb[0].mxu0
      %v1811 = vadd.f32 %v1759, %v1810
      %v1812 = vpop.f32.mrb[0].mxu0
      %v1813 = vpop.f32.mrb[0].mxu0
      %v1814 = vadd.f32 %v1759, %v1813
      %v1815 = vpop.f32.mrb[0].mxu0
      %1816 = vdwg.mxu0
      %v1817 = vadd.f32 %v1811, %v734
      %v1818 = vadd.f32 %v1814, %v735
      %v1819 = vld [vmem:[%s653] sm:$0x1]
      %v1820 = vld [vmem:[%s656] sm:$0x1]
      %v1821 = vsel %vm760, %v1817, 0.0
      %1822 = vadd.xlane.f32.xlu0 %v1821
      %v1823 = vpop.xlane.xlu0 %1822
      %v1824 = vsel %vm760, %v1818, 0.0
      %1825 = vadd.xlane.f32.xlu0 %v1824
      %v1826 = vpop.xlane.xlu0 %1825
      %v1827 = vrcp.pop 32.0
      %v1828 = vmul.f32 %v1823, %v1827
      %v1829 = vmul.f32 %v1826, %v1827
      %v1830 = vsub.f32 %v1817, %v1828
      %v1831 = vsub.f32 %v1818, %v1829
      %v1832 = vmul.f32 %v1830, %v1830
      %v1833 = vmul.f32 %v1831, %v1831
      %v1834 = vsel %vm760, %v1832, 0.0
      %1835 = vadd.xlane.f32.xlu0 %v1834
      %v1836 = vpop.xlane.xlu0 %1835
      %v1837 = vsel %vm760, %v1833, 0.0
      %1838 = vadd.xlane.f32.xlu0 %v1837
      %v1839 = vpop.xlane.xlu0 %1838
      %v1840 = vmul.f32 %v1836, %v1827
      %v1841 = vmul.f32 %v1839, %v1827
      %v1842 = vadd.f32 %v1840, 1e-12
      %v1843 = vadd.f32 %v1841, 1e-12
      %v1844 = vrsqrt.pop %v1842
      %v1845 = vrsqrt.pop %v1843
      %v1846 = vmul.f32 %v1830, %v1844
      %v1847 = vmul.f32 %v1831, %v1845
      %v1849 = vlaneseq
      %v1850 = vshrl.u32 %v1849, 7
      %v1851 = vsub.s32 0, %v1850
      %v1852 = vrot.slane %v1819, %v1851
      %v1854 = vmul.f32 %v1846, %v1852
      %v1855 = vmul.f32 %v1847, %v1852
      %v1857 = vlaneseq
      %v1858 = vshrl.u32 %v1857, 7
      %v1859 = vsub.s32 0, %v1858
      %v1860 = vrot.slane %v1820, %v1859
      %v1862 = vadd.f32 %v1854, %v1860
      %v1863 = vadd.f32 %v1855, %v1860
      %v1864 = vpack.c.bf16 %v1863, %v1862
      %v1865 = vld [vmem:[%s661] sm:$0xf]
      %v1866 = vld [vmem:[%s661 + $0x4] sm:$0xf]
      %v1867 = vld [vmem:[%s661 + $0x8] sm:$0xf]
      %v1868 = vld [vmem:[%s661 + $0xc] sm:$0xf]
      %v1869 = vld [vmem:[%s664] sm:$0x1]
      %v1871 = vlaneseq
      %v1872 = vshrl.u32 %v1871, 7
      %v1873 = vsub.s32 0, %v1872
      %v1874 = vrot.slane %v1869, %v1873
      %v1880 = vunpack.c.l.b16 %v1865
      %v1881 = vunpack.c.l.b16 %v1866
      %v1882 = vunpack.c.l.b16 %v1867
      %v1883 = vunpack.c.l.b16 %v1868
      %v1884 = vpack.c.b16 %v1881, %v1880
      %v1885 = vpack.c.b16 %v1883, %v1882
      %v1889 = vsel %vm760, %v1864, 0
      %1891 = vmatprep.subr.bf16.mxu0 0
      %1892 = vmatpush1.bf16.msra.mxu0 %v1884
      %1893 = vmatprep.subr.bf16.mxu0 0
      %1894 = vmatpush1.bf16.msra.mxu0 %v1885
      %1895 = vmatprep.subr.bf16.mxu0 0
      %1896 = vmatpush1.bf16.msra.mxu0 0
      %1897 = vmatprep.subr.bf16.mxu0 0
      %1898 = vmatpush1.bf16.msra.mxu0 0
      %1899 = vmatprep.subr.bf16.mxu0 0
      %1900 = vmatpush1.bf16.msra.mxu0 0
      %1901 = vmatprep.subr.bf16.mxu0 0
      %1902 = vmatpush1.bf16.msra.mxu0 0
      %1903 = vmatprep.subr.bf16.mxu0 0
      %1904 = vmatpush1.bf16.msra.mxu0 0
      %1905 = vmatprep.subr.bf16.mxu0 0
      %1906 = vmatpush1.bf16.msra.mxu0 0
      %1907 = vmatprep.subr.bf16.mxu0 0
      %1908 = vmatpush1.bf16.msra.mxu0 0
      %1909 = vmatprep.subr.bf16.mxu0 0
      %1910 = vmatpush1.bf16.msra.mxu0 0
      %1911 = vmatprep.subr.bf16.mxu0 0
      %1912 = vmatpush1.bf16.msra.mxu0 0
      %1913 = vmatprep.subr.bf16.mxu0 0
      %1914 = vmatpush1.bf16.msra.mxu0 0
      %1915 = vmatprep.subr.bf16.mxu0 0
      %1916 = vmatpush1.bf16.msra.mxu0 0
      %1917 = vmatprep.subr.bf16.mxu0 0
      %1918 = vmatpush1.bf16.msra.mxu0 0
      %1919 = vmatprep.subr.bf16.mxu0 0
      %1920 = vmatpush1.bf16.msra.mxu0 0
      %1921 = vmatprep.subr.bf16.mxu0 0
      %1922 = vmatpush1.bf16.msra.mxu0 0
      %1923 = vmatprep.mubr.bf16.mxu0 0
      %1924 = vmatmul.mubr.bf16.gmra.mrb[0].mxu0 %v1889
      %v1925 = vpop.f32.mrb[0].mxu0
      %v1926 = vadd.f32 %v1874, %v1925
      %v1927 = vpop.f32.mrb[0].mxu0
      %v1928 = vpop.f32.mrb[0].mxu0
      %v1929 = vadd.f32 %v1874, %v1928
      %v1930 = vpop.f32.mrb[0].mxu0
      %1931 = vdwg.mxu0
      %v1932 = vmul.f32 %v1926, 0.5
      %v1933 = vmul.f32 %v1929, 0.5
      %v1934 = vmul.f32 %v1926, 0.044715
      %v1935 = vmul.f32 %v1929, 0.044715
      %v1936 = vmul.f32 %v1934, %v1926
      %v1937 = vmul.f32 %v1935, %v1929
      %v1938 = vmul.f32 %v1936, %v1926
      %v1939 = vmul.f32 %v1937, %v1929
      %v1940 = vadd.f32 %v1926, %v1938
      %v1941 = vadd.f32 %v1929, %v1939
      %v1942 = vmul.f32 %v1940, 0.7978846
      %v1943 = vmul.f32 %v1941, 0.7978846
      %v1944 = vtanh.pop %v1942
      %v1945 = vtanh.pop %v1943
      %v1946 = vadd.f32 %v1944, 1.0
      %v1947 = vadd.f32 %v1945, 1.0
      %v1948 = vmul.f32 %v1932, %v1946
      %v1949 = vmul.f32 %v1933, %v1947
      %v1950 = vpack.c.bf16 %v1949, %v1948
      %v1951 = vld [vmem:[%s669] sm:$0xf]
      %v1952 = vld [vmem:[%s669 + $0x4] sm:$0xf]
      %v1953 = vld [vmem:[%s669 + $0x8] sm:$0xf]
      %v1954 = vld [vmem:[%s669 + $0xc] sm:$0xf]
      %v1955 = vld [vmem:[%s669 + $0x10] sm:$0xf]
      %v1956 = vld [vmem:[%s669 + $0x14] sm:$0xf]
      %v1957 = vld [vmem:[%s669 + $0x18] sm:$0xf]
      %v1958 = vld [vmem:[%s669 + $0x1c] sm:$0xf]
      %v1959 = vld [vmem:[%s672] sm:$0x1]
      %v1961 = vlaneseq
      %v1962 = vshrl.u32 %v1961, 7
      %v1963 = vsub.s32 0, %v1962
      %v1964 = vrot.slane %v1959, %v1963
      %v1974 = vunpack.c.l.b16 %v1951
      %v1975 = vunpack.c.l.b16 %v1952
      %v1976 = vunpack.c.l.b16 %v1953
      %v1977 = vunpack.c.l.b16 %v1954
      %v1978 = vunpack.c.l.b16 %v1955
      %v1979 = vunpack.c.l.b16 %v1956
      %v1980 = vunpack.c.l.b16 %v1957
      %v1981 = vunpack.c.l.b16 %v1958
      %v1982 = vpack.c.b16 %v1975, %v1974
      %v1983 = vpack.c.b16 %v1977, %v1976
      %v1984 = vpack.c.b16 %v1979, %v1978
      %v1985 = vpack.c.b16 %v1981, %v1980
      %vm1990 = vcmask 523264
      %v1992 = vsel %vm1990, %v1950, 0
      %1994 = vmatprep.subr.bf16.mxu0 0
      %1995 = vmatpush1.bf16.msra.mxu0 %v1982
      %1996 = vmatprep.subr.bf16.mxu0 0
      %1997 = vmatpush1.bf16.msra.mxu0 %v1983
      %1998 = vmatprep.subr.bf16.mxu0 0
      %1999 = vmatpush1.bf16.msra.mxu0 %v1984
      %2000 = vmatprep.subr.bf16.mxu0 0
      %2001 = vmatpush1.bf16.msra.mxu0 %v1985
      %2002 = vmatprep.subr.bf16.mxu0 0
      %2003 = vmatpush1.bf16.msra.mxu0 0
      %2004 = vmatprep.subr.bf16.mxu0 0
      %2005 = vmatpush1.bf16.msra.mxu0 0
      %2006 = vmatprep.subr.bf16.mxu0 0
      %2007 = vmatpush1.bf16.msra.mxu0 0
      %2008 = vmatprep.subr.bf16.mxu0 0
      %2009 = vmatpush1.bf16.msra.mxu0 0
      %2010 = vmatprep.subr.bf16.mxu0 0
      %2011 = vmatpush1.bf16.msra.mxu0 0
      %2012 = vmatprep.subr.bf16.mxu0 0
      %2013 = vmatpush1.bf16.msra.mxu0 0
      %2014 = vmatprep.subr.bf16.mxu0 0
      %2015 = vmatpush1.bf16.msra.mxu0 0
      %2016 = vmatprep.subr.bf16.mxu0 0
      %2017 = vmatpush1.bf16.msra.mxu0 0
      %2018 = vmatprep.subr.bf16.mxu0 0
      %2019 = vmatpush1.bf16.msra.mxu0 0
      %2020 = vmatprep.subr.bf16.mxu0 0
      %2021 = vmatpush1.bf16.msra.mxu0 0
      %2022 = vmatprep.subr.bf16.mxu0 0
      %2023 = vmatpush1.bf16.msra.mxu0 0
      %2024 = vmatprep.subr.bf16.mxu0 0
      %2025 = vmatpush1.bf16.msra.mxu0 0
      %2026 = vmatprep.mubr.bf16.mxu0 0
      %2027 = vmatmul.mubr.bf16.gmra.mrb[0].mxu0 %v1992
      %v2028 = vpop.f32.mrb[0].mxu0
      %v2029 = vadd.f32 %v1964, %v2028
      %v2030 = vpop.f32.mrb[0].mxu0
      %v2031 = vpop.f32.mrb[0].mxu0
      %v2032 = vadd.f32 %v1964, %v2031
      %v2033 = vpop.f32.mrb[0].mxu0
      %2034 = vdwg.mxu0
      %v2035 = vadd.f32 %v2029, %v1862
      %v2036 = vadd.f32 %v2032, %v1863
      %v2037 = vld [vmem:[%s675] sm:$0x1]
      %v2038 = vld [vmem:[%s678] sm:$0x1]
      %v2039 = vsel %vm760, %v2035, 0.0
      %2040 = vadd.xlane.f32.xlu0 %v2039
      %v2041 = vpop.xlane.xlu0 %2040
      %v2042 = vsel %vm760, %v2036, 0.0
      %2043 = vadd.xlane.f32.xlu0 %v2042
      %v2044 = vpop.xlane.xlu0 %2043
      %v2045 = vmul.f32 %v2041, %v1827
      %v2046 = vmul.f32 %v2044, %v1827
      %v2047 = vsub.f32 %v2035, %v2045
      %v2048 = vsub.f32 %v2036, %v2046
      %v2049 = vmul.f32 %v2047, %v2047
      %v2050 = vmul.f32 %v2048, %v2048
      %v2051 = vsel %vm760, %v2049, 0.0
      %2052 = vadd.xlane.f32.xlu0 %v2051
      %v2053 = vpop.xlane.xlu0 %2052
      %v2054 = vsel %vm760, %v2050, 0.0
      %2055 = vadd.xlane.f32.xlu0 %v2054
      %v2056 = vpop.xlane.xlu0 %2055
      %v2057 = vmul.f32 %v2053, %v1827
      %v2058 = vmul.f32 %v2056, %v1827
      %v2059 = vadd.f32 %v2057, 1e-12
      %v2060 = vadd.f32 %v2058, 1e-12
      %v2061 = vrsqrt.pop %v2059
      %v2062 = vrsqrt.pop %v2060
      %v2063 = vmul.f32 %v2047, %v2061
      %v2064 = vmul.f32 %v2048, %v2062
      %v2066 = vlaneseq
      %v2067 = vshrl.u32 %v2066, 7
      %v2068 = vsub.s32 0, %v2067
      %v2069 = vrot.slane %v2037, %v2068
      %v2071 = vmul.f32 %v2063, %v2069
      %v2072 = vmul.f32 %v2064, %v2069
      %v2074 = vlaneseq
      %v2075 = vshrl.u32 %v2074, 7
      %v2076 = vsub.s32 0, %v2075
      %v2077 = vrot.slane %v2038, %v2076
      %v2079 = vadd.f32 %v2071, %v2077
      %v2080 = vadd.f32 %v2072, %v2077
      %2081 = vst.msk [vmem:[#allocation2] sm:$0xff] %vm760, %v2079
      %2082 = vst.msk [vmem:[#allocation2 + $0x8] sm:$0xff] %vm760, %v2080
      %p2083 = scmp.eq.s32.totalorder %s27, 1
      // Predicated region
      $region89: #{model_forward.2} parent=83 // pred_check
        %p2084 = pneg %p2083
      $region90: #{model_forward.2} parent=83 // pred_check_branch
        %2086 = sbr.rel (%p2084) target = $region92
      $region91: #{model_forward.2} parent=83 // pred_region
        %2087 = vst.msk [vmem:[%s16] sm:$0xff] %vm760, %v2079
        %2088 = vst.msk [vmem:[%s16 + $0x8] sm:$0xff] %vm760, %v2080
      $region92: #{model_forward.2} parent=83 // pred_fallthru
        _
      // Predicated region
      $region93: #{model_forward.2} parent=83 // pred_check
        %p2089 = pneg %p436
      $region94: #{model_forward.2} parent=83 // pred_check_branch
        %2091 = sbr.rel (%p2089) target = $region96
      $region95: #{model_forward.2} parent=83 // pred_region
        _
      $region96: #{model_forward.2} parent=83 // pred_fallthru
        _
      // Predicated region
      $region97: #{model_forward.2} parent=83 // pred_check
        %p2092 = pneg %p436
      $region98: #{model_forward.2} parent=83 // pred_check_branch
        %2094 = sbr.rel (%p2092) target = $region100
      $region99: #{model_forward.2} parent=83 // pred_region
        _
      $region100: #{model_forward.2} parent=83 // pred_fallthru
        _
    $region84: #{model_forward.2} parent=5 // pred_fallthru
      _
    %p2095 = scmp.le.s32.totalorder 2, %s22
    // Predicated region
    $region101: #{model_forward.2} parent=5 // pred_check
      %p2096 = pneg %p2095
    $region102: #{model_forward.2} parent=5 // pred_check_branch
      %2098 = sbr.rel (%p2096) target = $region104
    $region103: #{model_forward.2} parent=5 // pred_region
      %s2099 = ssub.s32 %s22, 2
    $region104: #{model_forward.2} parent=5 // pred_fallthru
      _
  $region6: #{model_forward.2} parent=0 // loop_footer
    %s26 = sadd.s32 1, %s22
  $region7: #{model_forward.2} parent=0 // loop_footer_branch
    %21 = sbr.rel target = $region3
  $region8: #{model_forward.2} parent=0 // loop_exit
    _

</llo_original>
